<compile_context>
chip_gen: v7x
topology: tpu7x:2x2x1
jax: 0.10.0
libtpu: 0.0.40
codegen_flags: <defaults>
</compile_context>

<pallas_src>
import functools

import jax
import jax.numpy as jnp
from jax.experimental import pallas as pl
from jax.experimental.pallas import tpu as pltpu


# ----------------------------------------------------------------------------
# helpers
# ----------------------------------------------------------------------------

def _dot_t(x, w):
    """x:(M,K) contracted with w:(N,K) on last axes -> (M,N) == x @ w.T.

    dot_general feeds the MXU the transposed operand directly (no XLU
    transpose); default precision (no multi-pass f32 decomposition)."""
    return jax.lax.dot_general(
        x, w, (((1,), (1,)), ((), ())), preferred_element_type=jnp.float32)


def _layernorm(x, g, b, eps):
    mu = jnp.mean(x, axis=-1, keepdims=True)
    var = jnp.mean((x - mu) ** 2, axis=-1, keepdims=True)
    return (x - mu) * jax.lax.rsqrt(var + eps) * g + b


# ----------------------------------------------------------------------------
# Fused kernel: whole forward, single invocation (no grid)
# ----------------------------------------------------------------------------

def _fused_encoder_kernel(
    src_ref, cond_ref, lin_w_ref, q_w_ref, k_w_ref, v_w_ref, out_w_ref,
    ff1_w_ref, ff2_w_ref, vec_ref, ff1b_ref,
    out_ref, x_buf, o_buf,
    *, num_layers, nhead, batch, seq, cond_len, tp, eps):
    D = src_ref.shape[-1]
    Dh = D // nhead
    T = seq + cond_len            # real (unpadded) sequence length per batch
    scp = tp - seq                # cond rows per batch (incl. padding rows)
    scale = Dh ** -0.5
    NVEC = 10                     # packed D-length vectors per layer

    # working slab: per batch element b, rows [b*tp, b*tp+seq) = output,
    # rows [b*tp+seq, b*tp+T) = cond, rows [b*tp+T, (b+1)*tp) = padding.
    x_buf[...] = src_ref[...].astype(jnp.float32)
    o_buf[...] = jnp.zeros_like(o_buf)           # padding rows stay 0 forever
    cond = cond_ref[...].astype(jnp.float32)     # (batch*scp, Cd)

    for li in range(num_layers):                 # unrolled at trace time
        r = li * NVEC
        lin_b = vec_ref[r + 0:r + 1, :]
        q_b   = vec_ref[r + 1:r + 2, :]
        k_b   = vec_ref[r + 2:r + 3, :]
        v_b   = vec_ref[r + 3:r + 4, :]
        out_b = vec_ref[r + 4:r + 5, :]
        ln1_g = vec_ref[r + 5:r + 6, :]
        ln1_b = vec_ref[r + 6:r + 7, :]
        ff2_b = vec_ref[r + 7:r + 8, :]
        ln2_g = vec_ref[r + 8:r + 9, :]
        ln2_b = vec_ref[r + 9:r + 10, :]
        ff1_b = ff1b_ref[li:li + 1, :]

        # cond linear for ALL batch elements in one matmul: (B*scp, Cd) @ W.T
        cond_tmp = _dot_t(cond, lin_w_ref[li]) + lin_b
        for b in range(batch):
            # aligned full-8-row store (output-first concat order)
            x_buf[b * tp + seq:(b + 1) * tp, :] = cond_tmp[b * scp:(b + 1) * scp, :]

        x = x_buf[...]                           # (B*tp, D)

        # ---- Q/K/V for the whole slab (batch folded into the row dim) ----
        q = (_dot_t(x, q_w_ref[li]) + q_b) * scale
        k = _dot_t(x, k_w_ref[li]) + k_b
        v = _dot_t(x, v_w_ref[li]) + v_b

        # ---- per (batch, head) attention on tiny (T,T) blocks ----
        for b in range(batch):
            r0 = b * tp
            qb = q[r0:r0 + T, :]
            kb = k[r0:r0 + T, :]
            vb = v[r0:r0 + T, :]
            o_heads = []
            for h in range(nhead):               # nhead=4, unrolled
                hs = slice(h * Dh, (h + 1) * Dh)
                s = _dot_t(qb[:, hs], kb[:, hs])            # (T, T)
                s = s - jnp.max(s, axis=-1, keepdims=True)
                e = jnp.exp(s)
                prob = e / jnp.sum(e, axis=-1, keepdims=True)   # exact softmax
                o_heads.append(jnp.dot(prob, vb[:, hs],
                                       preferred_element_type=jnp.float32))
            # assemble all heads -> aligned (T, D) store; out-proj fused below
            o_buf[r0:r0 + T, :] = jnp.concatenate(o_heads, axis=-1)

        # single fused output projection for all batches & heads
        attn = _dot_t(o_buf[...], out_w_ref[li]) + out_b        # (B*tp, D)
        x = _layernorm(x + attn, ln1_g, ln1_b, eps)             # norm1(x+attn)

        # ---- feed-forward (ReLU), whole slab at once ----
        ff = jnp.maximum(_dot_t(x, ff1_w_ref[li]) + ff1_b, 0.0)  # (B*tp, F)
        ff = _dot_t(ff, ff2_w_ref[li]) + ff2_b                   # (B*tp, D)
        x = _layernorm(x + ff, ln2_g, ln2_b, eps)                # norm2(x+ff)

        if li + 1 < num_layers:
            x_buf[...] = x
        else:
            for b in range(batch):
                out_ref[b * seq:(b + 1) * seq, :] = (
                    x[b * tp:b * tp + seq, :].astype(out_ref.dtype))


# ----------------------------------------------------------------------------
# Wrapper: one pallas_call for the whole forward
# ----------------------------------------------------------------------------

def custom_transformer_encoder_v2(src, cond, params, nhead, eps=1e-5):
    """src: (S, B, D), cond: (Sc, B, Cd) -> (S, B, D)."""
    S, B, D = src.shape
    Sc, _, Cd = cond.shape
    L = len(params["layers"])
    T = S + Sc
    Tp = ((T + 7) // 8) * 8          # per-batch slab rows, sublane aligned
    Scp = Tp - S                     # cond rows per batch incl. padding
    N = B * Tp

    # Batch-major, per-batch padded slabs (built once in XLA outside the kernel).
    src_b = jnp.transpose(src, (1, 0, 2))                              # (B,S,D)
    src_pad = jnp.zeros((B, Tp, D), src.dtype).at[:, :S, :].set(src_b)
    src_pad = src_pad.reshape(N, D)
    cond_b = jnp.transpose(cond, (1, 0, 2))                            # (B,Sc,Cd)
    cond_pad = jnp.zeros((B, Scp, Cd), cond.dtype).at[:, :Sc, :].set(cond_b)
    cond_pad = cond_pad.reshape(B * Scp, Cd)

    # Stack per-layer matrices with a leading layer dim (fewer operands).
    stack = lambda name: jnp.stack([p[name] for p in params["layers"]])
    lin_w, in_w, out_w = stack("lin_w"), stack("in_w"), stack("out_w")
    ff1_w, ff2_w = stack("ff1_w"), stack("ff2_w")
    # Pre-split in_proj weight into q/k/v (no 96-lane slicing in-kernel).
    q_w, k_w, v_w = in_w[:, :D, :], in_w[:, D:2 * D, :], in_w[:, 2 * D:, :]

    # Pack all D-length 1-D params into one (L*10, D) array (row-indexed).
    vec_rows = []
    for p in params["layers"]:
        ib = p["in_b"]
        vec_rows += [p["lin_b"], ib[:D], ib[D:2 * D], ib[2 * D:], p["out_b"],
                     p["ln1_g"], p["ln1_b"], p["ff2_b"], p["ln2_g"], p["ln2_b"]]
    vec32 = jnp.stack(vec_rows)                                        # (L*10, D)
    ff1b = stack("ff1_b")                                              # (L, F)

    kernel = functools.partial(
        _fused_encoder_kernel, num_layers=L, nhead=nhead,
        batch=B, seq=S, cond_len=Sc, tp=Tp, eps=eps)

    out = pl.pallas_call(
        kernel,
        out_shape=jax.ShapeDtypeStruct((B * S, D), src.dtype),
        scratch_shapes=[pltpu.VMEM((N, D), jnp.float32),   # x slab
                        pltpu.VMEM((N, D), jnp.float32)],  # attention output slab
    )(src_pad, cond_pad, lin_w, q_w, k_w, v_w, out_w, ff1_w, ff2_w, vec32, ff1b)

    return jnp.transpose(out.reshape(B, S, D), (1, 0, 2))              # (S,B,D)


# ----------------------------------------------------------------------------
# Pure-JAX reference (mirrors PyTorch nn.TransformerEncoderLayer, eval mode)
# ----------------------------------------------------------------------------

def reference_forward(src, cond, params, nhead):
    def ln(x, g, b, eps=1e-5):
        mu = x.mean(-1, keepdims=True)
        var = ((x - mu) ** 2).mean(-1, keepdims=True)
        return (x - mu) / jnp.sqrt(var + eps) * g + b

    S, B, D = src.shape
    H, Dh = nhead, D // nhead
    output = src
    for p in params["layers"]:
        cond_tmp = cond @ p["lin_w"].T + p["lin_b"]
        x = jnp.concatenate([cond_tmp, output], axis=0)        # (T, B, D)
        T = x.shape[0]
        qkv = x @ p["in_w"].T + p["in_b"]
        q, k, v = jnp.split(qkv, 3, axis=-1)
        heads = lambda t: t.reshape(T, B, H, Dh).transpose(1, 2, 0, 3)
        s = jnp.einsum("bhqd,bhkd->bhqk", heads(q), heads(k)) / (Dh ** 0.5)
        a = jax.nn.softmax(s, axis=-1)
        o = jnp.einsum("bhqk,bhkd->bhqd", a, heads(v))
        o = o.transpose(2, 0, 1, 3).reshape(T, B, D)
        attn = o @ p["out_w"].T + p["out_b"]
        x = ln(x + attn, p["ln1_g"], p["ln1_b"])
        ff = jax.nn.relu(x @ p["ff1_w"].T + p["ff1_b"])
        ff = ff @ p["ff2_w"].T + p["ff2_b"]
        x = ln(x + ff, p["ln2_g"], p["ln2_b"])
        output = x[cond.shape[0]:]
    return output


# ----------------------------------------------------------------------------
# Deterministic parameter construction
# ----------------------------------------------------------------------------

def init_params(key, num_layers, d_model, nhead, dim_ff, cond_dim):
    layers = []
    for _ in range(num_layers):
        keys = jax.random.split(key, 8)
        key = keys[0]
        s = 0.05
        layers.append(dict(
            lin_w=jax.random.normal(keys[1], (d_model, cond_dim), jnp.float32) * s,
            lin_b=jnp.zeros((d_model,), jnp.float32),
            in_w=jax.random.normal(keys[2], (3 * d_model, d_model), jnp.float32) * s,
            in_b=jnp.zeros((3 * d_model,), jnp.float32),
            out_w=jax.random.normal(keys[3], (d_model, d_model), jnp.float32) * s,
            out_b=jnp.zeros((d_model,), jnp.float32),
            ln1_g=jnp.ones((d_model,), jnp.float32),
            ln1_b=jnp.zeros((d_model,), jnp.float32),
            ff1_w=jax.random.normal(keys[4], (dim_ff, d_model), jnp.float32) * s,
            ff1_b=jnp.zeros((dim_ff,), jnp.float32),
            ff2_w=jax.random.normal(keys[5], (d_model, dim_ff), jnp.float32) * s,
            ff2_b=jnp.zeros((d_model,), jnp.float32),
            ln2_g=jnp.ones((d_model,), jnp.float32),
            ln2_b=jnp.zeros((d_model,), jnp.float32),
        ))
    return {"layers": layers}


# ----------------------------------------------------------------------------
# main
# ----------------------------------------------------------------------------

if __name__ == "__main__":
    num_layers = 2
    d_model = 32
    nhead = 4
    dim_ff = 64
    cond_dim = 16
    S, Sc, B = 8, 4, 2

    key = jax.random.PRNGKey(0)
    k_src, k_cond, k_par = jax.random.split(key, 3)
    src = jax.random.normal(k_src, (S, B, d_model), jnp.float32)
    cond = jax.random.normal(k_cond, (Sc, B, cond_dim), jnp.float32)
    params = init_params(k_par, num_layers, d_model, nhead, dim_ff, cond_dim)

    fwd = jax.jit(functools.partial(custom_transformer_encoder_v2, nhead=nhead))
    out = jax.block_until_ready(fwd(src, cond, params))
    assert out.shape == (S, B, d_model), out.shape

    ref = jax.block_until_ready(reference_forward(src, cond, params, nhead))
    max_err = float(jnp.max(jnp.abs(out - ref)))
    # kernel & reference both use default MXU matmul precision but different
    # contraction orders -> small bf16-level drift allowed
    assert max_err < 5e-2, f"max abs err vs reference: {max_err}"

    print("KERNEL_OK")
</pallas_src>

<mosaic_0001>
module attributes {stable_mosaic.version = 11 : i64} {
  func.func @_fused_encoder_kernel(%arg0: memref<32x32xf32, #tpu.memory_space<vmem>>, %arg1: memref<16x16xf32, #tpu.memory_space<vmem>>, %arg2: memref<2x32x16xf32, #tpu.memory_space<vmem>>, %arg3: memref<2x32x32xf32, #tpu.memory_space<vmem>>, %arg4: memref<2x32x32xf32, #tpu.memory_space<vmem>>, %arg5: memref<2x32x32xf32, #tpu.memory_space<vmem>>, %arg6: memref<2x32x32xf32, #tpu.memory_space<vmem>>, %arg7: memref<2x64x32xf32, #tpu.memory_space<vmem>>, %arg8: memref<2x32x64xf32, #tpu.memory_space<vmem>>, %arg9: memref<20x32xf32, #tpu.memory_space<vmem>>, %arg10: memref<2x64xf32, #tpu.memory_space<vmem>>, %arg11: memref<16x32xf32, #tpu.memory_space<vmem>>, %arg12: memref<32x32xf32, #tpu.memory_space<vmem>>, %arg13: memref<32x32xf32, #tpu.memory_space<vmem>>) attributes {dimension_semantics = [], scalar_prefetch = 0 : i64, scratch_operands = 2 : i64, tpu.core_type = #tpu.core_type<tc>} {
    %c0 = arith.constant 0 : index
    %c0_0 = arith.constant 0 : index
    %0 = vector.load %arg0[%c0, %c0_0] : memref<32x32xf32, #tpu.memory_space<vmem>>, vector<32x32xf32>
    %c0_1 = arith.constant 0 : index
    %c0_2 = arith.constant 0 : index
    %1 = vector.load %arg12[%c0_1, %c0_2] : memref<32x32xf32, #tpu.memory_space<vmem>>, vector<32x32xf32>
    tpu.vector_store %arg12[%c0_1, %c0_2], %0 {strides = array<i32>} : memref<32x32xf32, #tpu.memory_space<vmem>>, vector<32x32xf32>,
    %cst = arith.constant 0.000000e+00 : f32
    %2 = vector.broadcast %cst : f32 to vector<32x32xf32>
    %c0_3 = arith.constant 0 : index
    %c0_4 = arith.constant 0 : index
    %3 = vector.load %arg13[%c0_3, %c0_4] : memref<32x32xf32, #tpu.memory_space<vmem>>, vector<32x32xf32>
    tpu.vector_store %arg13[%c0_3, %c0_4], %2 {strides = array<i32>} : memref<32x32xf32, #tpu.memory_space<vmem>>, vector<32x32xf32>,
    %c0_5 = arith.constant 0 : index
    %c0_6 = arith.constant 0 : index
    %4 = vector.load %arg1[%c0_5, %c0_6] : memref<16x16xf32, #tpu.memory_space<vmem>>, vector<16x16xf32>
    %c0_7 = arith.constant 0 : index
    %c0_8 = arith.constant 0 : index
    %5 = vector.load %arg9[%c0_7, %c0_8] : memref<20x32xf32, #tpu.memory_space<vmem>>, vector<1x32xf32>
    %c1 = arith.constant 1 : index
    %c0_9 = arith.constant 0 : index
    %6 = vector.load %arg9[%c1, %c0_9] : memref<20x32xf32, #tpu.memory_space<vmem>>, vector<1x32xf32>
    %c2 = arith.constant 2 : index
    %c0_10 = arith.constant 0 : index
    %7 = vector.load %arg9[%c2, %c0_10] : memref<20x32xf32, #tpu.memory_space<vmem>>, vector<1x32xf32>
    %c3 = arith.constant 3 : index
    %c0_11 = arith.constant 0 : index
    %8 = vector.load %arg9[%c3, %c0_11] : memref<20x32xf32, #tpu.memory_space<vmem>>, vector<1x32xf32>
    %c4 = arith.constant 4 : index
    %c0_12 = arith.constant 0 : index
    %9 = vector.load %arg9[%c4, %c0_12] : memref<20x32xf32, #tpu.memory_space<vmem>>, vector<1x32xf32>
    %c5 = arith.constant 5 : index
    %c0_13 = arith.constant 0 : index
    %10 = vector.load %arg9[%c5, %c0_13] : memref<20x32xf32, #tpu.memory_space<vmem>>, vector<1x32xf32>
    %c6 = arith.constant 6 : index
    %c0_14 = arith.constant 0 : index
    %11 = vector.load %arg9[%c6, %c0_14] : memref<20x32xf32, #tpu.memory_space<vmem>>, vector<1x32xf32>
    %c7 = arith.constant 7 : index
    %c0_15 = arith.constant 0 : index
    %12 = vector.load %arg9[%c7, %c0_15] : memref<20x32xf32, #tpu.memory_space<vmem>>, vector<1x32xf32>
    %c8 = arith.constant 8 : index
    %c0_16 = arith.constant 0 : index
    %13 = vector.load %arg9[%c8, %c0_16] : memref<20x32xf32, #tpu.memory_space<vmem>>, vector<1x32xf32>
    %c9 = arith.constant 9 : index
    %c0_17 = arith.constant 0 : index
    %14 = vector.load %arg9[%c9, %c0_17] : memref<20x32xf32, #tpu.memory_space<vmem>>, vector<1x32xf32>
    %c0_18 = arith.constant 0 : index
    %c0_19 = arith.constant 0 : index
    %15 = vector.load %arg10[%c0_18, %c0_19] : memref<2x64xf32, #tpu.memory_space<vmem>>, vector<1x64xf32>
    %c0_20 = arith.constant 0 : index
    %c0_21 = arith.constant 0 : index
    %c0_22 = arith.constant 0 : index
    %16 = vector.load %arg2[%c0_20, %c0_21, %c0_22] : memref<2x32x16xf32, #tpu.memory_space<vmem>>, vector<1x32x16xf32>
    %17 = vector.shape_cast %16 : vector<1x32x16xf32> to vector<32x16xf32>
    %cst_23 = arith.constant dense<0.000000e+00> : vector<16x32xf32>
    %18 = tpu.matmul %4, %17, %cst_23 {dimension_numbers = #tpu.dot_dimension_numbers<[1], [1], [0], [0], [0, 0, 1, 0], [], []>} : vector<16x16xf32>, vector<32x16xf32>, vector<16x32xf32> -> vector<16x32xf32>
    %19 = vector.broadcast %5 : vector<1x32xf32> to vector<16x32xf32>
    %20 = arith.addf %18, %19 : vector<16x32xf32>
    %21 = vector.extract_strided_slice %20 {offsets = [0, 0], sizes = [8, 32], strides = [1, 1]} : vector<16x32xf32> to vector<8x32xf32>
    %c8_24 = arith.constant 8 : index
    %c0_25 = arith.constant 0 : index
    %22 = vector.load %arg12[%c8_24, %c0_25] : memref<32x32xf32, #tpu.memory_space<vmem>>, vector<8x32xf32>
    tpu.vector_store %arg12[%c8_24, %c0_25], %21 {strides = array<i32>} : memref<32x32xf32, #tpu.memory_space<vmem>>, vector<8x32xf32>,
    %23 = vector.extract_strided_slice %20 {offsets = [8, 0], sizes = [8, 32], strides = [1, 1]} : vector<16x32xf32> to vector<8x32xf32>
    %c24 = arith.constant 24 : index
    %c0_26 = arith.constant 0 : index
    %24 = vector.load %arg12[%c24, %c0_26] : memref<32x32xf32, #tpu.memory_space<vmem>>, vector<8x32xf32>
    tpu.vector_store %arg12[%c24, %c0_26], %23 {strides = array<i32>} : memref<32x32xf32, #tpu.memory_space<vmem>>, vector<8x32xf32>,
    %c0_27 = arith.constant 0 : index
    %c0_28 = arith.constant 0 : index
    %25 = vector.load %arg12[%c0_27, %c0_28] : memref<32x32xf32, #tpu.memory_space<vmem>>, vector<32x32xf32>
    %c0_29 = arith.constant 0 : index
    %c0_30 = arith.constant 0 : index
    %c0_31 = arith.constant 0 : index
    %26 = vector.load %arg3[%c0_29, %c0_30, %c0_31] : memref<2x32x32xf32, #tpu.memory_space<vmem>>, vector<1x32x32xf32>
    %27 = vector.shape_cast %26 : vector<1x32x32xf32> to vector<32x32xf32>
    %cst_32 = arith.constant dense<0.000000e+00> : vector<32x32xf32>
    %28 = tpu.matmul %25, %27, %cst_32 {dimension_numbers = #tpu.dot_dimension_numbers<[1], [1], [0], [0], [0, 0, 1, 0], [], []>} : vector<32x32xf32>, vector<32x32xf32>, vector<32x32xf32> -> vector<32x32xf32>
    %29 = vector.broadcast %6 : vector<1x32xf32> to vector<32x32xf32>
    %30 = arith.addf %28, %29 : vector<32x32xf32>
    %cst_33 = arith.constant 0.353553385 : f32
    %31 = vector.broadcast %cst_33 : f32 to vector<32x32xf32>
    %32 = arith.mulf %30, %31 : vector<32x32xf32>
    %c0_34 = arith.constant 0 : index
    %c0_35 = arith.constant 0 : index
    %c0_36 = arith.constant 0 : index
    %33 = vector.load %arg4[%c0_34, %c0_35, %c0_36] : memref<2x32x32xf32, #tpu.memory_space<vmem>>, vector<1x32x32xf32>
    %34 = vector.shape_cast %33 : vector<1x32x32xf32> to vector<32x32xf32>
    %cst_37 = arith.constant dense<0.000000e+00> : vector<32x32xf32>
    %35 = tpu.matmul %25, %34, %cst_37 {dimension_numbers = #tpu.dot_dimension_numbers<[1], [1], [0], [0], [0, 0, 1, 0], [], []>} : vector<32x32xf32>, vector<32x32xf32>, vector<32x32xf32> -> vector<32x32xf32>
    %36 = vector.broadcast %7 : vector<1x32xf32> to vector<32x32xf32>
    %37 = arith.addf %35, %36 : vector<32x32xf32>
    %c0_38 = arith.constant 0 : index
    %c0_39 = arith.constant 0 : index
    %c0_40 = arith.constant 0 : index
    %38 = vector.load %arg5[%c0_38, %c0_39, %c0_40] : memref<2x32x32xf32, #tpu.memory_space<vmem>>, vector<1x32x32xf32>
    %39 = vector.shape_cast %38 : vector<1x32x32xf32> to vector<32x32xf32>
    %cst_41 = arith.constant dense<0.000000e+00> : vector<32x32xf32>
    %40 = tpu.matmul %25, %39, %cst_41 {dimension_numbers = #tpu.dot_dimension_numbers<[1], [1], [0], [0], [0, 0, 1, 0], [], []>} : vector<32x32xf32>, vector<32x32xf32>, vector<32x32xf32> -> vector<32x32xf32>
    %41 = vector.broadcast %8 : vector<1x32xf32> to vector<32x32xf32>
    %42 = arith.addf %40, %41 : vector<32x32xf32>
    %43 = vector.extract_strided_slice %32 {offsets = [0, 0], sizes = [12, 32], strides = [1, 1]} : vector<32x32xf32> to vector<12x32xf32>
    %44 = vector.extract_strided_slice %37 {offsets = [0, 0], sizes = [12, 32], strides = [1, 1]} : vector<32x32xf32> to vector<12x32xf32>
    %45 = vector.extract_strided_slice %42 {offsets = [0, 0], sizes = [12, 32], strides = [1, 1]} : vector<32x32xf32> to vector<12x32xf32>
    %46 = vector.extract_strided_slice %43 {offsets = [0, 0], sizes = [12, 8], strides = [1, 1]} : vector<12x32xf32> to vector<12x8xf32>
    %47 = vector.extract_strided_slice %44 {offsets = [0, 0], sizes = [12, 8], strides = [1, 1]} : vector<12x32xf32> to vector<12x8xf32>
    %cst_42 = arith.constant dense<0.000000e+00> : vector<12x12xf32>
    %48 = tpu.matmul %46, %47, %cst_42 {dimension_numbers = #tpu.dot_dimension_numbers<[1], [1], [0], [0], [0, 0, 1, 0], [], []>} : vector<12x8xf32>, vector<12x8xf32>, vector<12x12xf32> -> vector<12x12xf32>
    %cst_43 = arith.constant dense<0xFF800000> : vector<12xf32>
    %49 = vector.multi_reduction <maximumf>, %48, %cst_43 [1] : vector<12x12xf32> to vector<12xf32>
    %50 = vector.shape_cast %49 : vector<12xf32> to vector<12x1xf32>
    %51 = vector.broadcast %50 : vector<12x1xf32> to vector<12x12xf32>
    %52 = arith.subf %48, %51 : vector<12x12xf32>
    %53 = math.exp %52 : vector<12x12xf32>
    %cst_44 = arith.constant dense<0.000000e+00> : vector<12xf32>
    %54 = vector.multi_reduction <add>, %53, %cst_44 [1] : vector<12x12xf32> to vector<12xf32>
    %55 = vector.shape_cast %54 : vector<12xf32> to vector<12x1xf32>
    %56 = vector.broadcast %55 : vector<12x1xf32> to vector<12x12xf32>
    %57 = arith.divf %53, %56 : vector<12x12xf32>
    %58 = vector.extract_strided_slice %45 {offsets = [0, 0], sizes = [12, 8], strides = [1, 1]} : vector<12x32xf32> to vector<12x8xf32>
    %cst_45 = arith.constant dense<0.000000e+00> : vector<12x8xf32>
    %59 = tpu.matmul %57, %58, %cst_45 {dimension_numbers = #tpu.dot_dimension_numbers<[1], [0], [0], [1], [0, 0, 1, 1], [], []>} : vector<12x12xf32>, vector<12x8xf32>, vector<12x8xf32> -> vector<12x8xf32>
    %60 = vector.extract_strided_slice %43 {offsets = [0, 8], sizes = [12, 8], strides = [1, 1]} : vector<12x32xf32> to vector<12x8xf32>
    %61 = vector.extract_strided_slice %44 {offsets = [0, 8], sizes = [12, 8], strides = [1, 1]} : vector<12x32xf32> to vector<12x8xf32>
    %cst_46 = arith.constant dense<0.000000e+00> : vector<12x12xf32>
    %62 = tpu.matmul %60, %61, %cst_46 {dimension_numbers = #tpu.dot_dimension_numbers<[1], [1], [0], [0], [0, 0, 1, 0], [], []>} : vector<12x8xf32>, vector<12x8xf32>, vector<12x12xf32> -> vector<12x12xf32>
    %cst_47 = arith.constant dense<0xFF800000> : vector<12xf32>
    %63 = vector.multi_reduction <maximumf>, %62, %cst_47 [1] : vector<12x12xf32> to vector<12xf32>
    %64 = vector.shape_cast %63 : vector<12xf32> to vector<12x1xf32>
    %65 = vector.broadcast %64 : vector<12x1xf32> to vector<12x12xf32>
    %66 = arith.subf %62, %65 : vector<12x12xf32>
    %67 = math.exp %66 : vector<12x12xf32>
    %cst_48 = arith.constant dense<0.000000e+00> : vector<12xf32>
    %68 = vector.multi_reduction <add>, %67, %cst_48 [1] : vector<12x12xf32> to vector<12xf32>
    %69 = vector.shape_cast %68 : vector<12xf32> to vector<12x1xf32>
    %70 = vector.broadcast %69 : vector<12x1xf32> to vector<12x12xf32>
    %71 = arith.divf %67, %70 : vector<12x12xf32>
    %72 = vector.extract_strided_slice %45 {offsets = [0, 8], sizes = [12, 8], strides = [1, 1]} : vector<12x32xf32> to vector<12x8xf32>
    %cst_49 = arith.constant dense<0.000000e+00> : vector<12x8xf32>
    %73 = tpu.matmul %71, %72, %cst_49 {dimension_numbers = #tpu.dot_dimension_numbers<[1], [0], [0], [1], [0, 0, 1, 1], [], []>} : vector<12x12xf32>, vector<12x8xf32>, vector<12x8xf32> -> vector<12x8xf32>
    %74 = vector.extract_strided_slice %43 {offsets = [0, 16], sizes = [12, 8], strides = [1, 1]} : vector<12x32xf32> to vector<12x8xf32>
    %75 = vector.extract_strided_slice %44 {offsets = [0, 16], sizes = [12, 8], strides = [1, 1]} : vector<12x32xf32> to vector<12x8xf32>
    %cst_50 = arith.constant dense<0.000000e+00> : vector<12x12xf32>
    %76 = tpu.matmul %74, %75, %cst_50 {dimension_numbers = #tpu.dot_dimension_numbers<[1], [1], [0], [0], [0, 0, 1, 0], [], []>} : vector<12x8xf32>, vector<12x8xf32>, vector<12x12xf32> -> vector<12x12xf32>
    %cst_51 = arith.constant dense<0xFF800000> : vector<12xf32>
    %77 = vector.multi_reduction <maximumf>, %76, %cst_51 [1] : vector<12x12xf32> to vector<12xf32>
    %78 = vector.shape_cast %77 : vector<12xf32> to vector<12x1xf32>
    %79 = vector.broadcast %78 : vector<12x1xf32> to vector<12x12xf32>
    %80 = arith.subf %76, %79 : vector<12x12xf32>
    %81 = math.exp %80 : vector<12x12xf32>
    %cst_52 = arith.constant dense<0.000000e+00> : vector<12xf32>
    %82 = vector.multi_reduction <add>, %81, %cst_52 [1] : vector<12x12xf32> to vector<12xf32>
    %83 = vector.shape_cast %82 : vector<12xf32> to vector<12x1xf32>
    %84 = vector.broadcast %83 : vector<12x1xf32> to vector<12x12xf32>
    %85 = arith.divf %81, %84 : vector<12x12xf32>
    %86 = vector.extract_strided_slice %45 {offsets = [0, 16], sizes = [12, 8], strides = [1, 1]} : vector<12x32xf32> to vector<12x8xf32>
    %cst_53 = arith.constant dense<0.000000e+00> : vector<12x8xf32>
    %87 = tpu.matmul %85, %86, %cst_53 {dimension_numbers = #tpu.dot_dimension_numbers<[1], [0], [0], [1], [0, 0, 1, 1], [], []>} : vector<12x12xf32>, vector<12x8xf32>, vector<12x8xf32> -> vector<12x8xf32>
    %88 = vector.extract_strided_slice %43 {offsets = [0, 24], sizes = [12, 8], strides = [1, 1]} : vector<12x32xf32> to vector<12x8xf32>
    %89 = vector.extract_strided_slice %44 {offsets = [0, 24], sizes = [12, 8], strides = [1, 1]} : vector<12x32xf32> to vector<12x8xf32>
    %cst_54 = arith.constant dense<0.000000e+00> : vector<12x12xf32>
    %90 = tpu.matmul %88, %89, %cst_54 {dimension_numbers = #tpu.dot_dimension_numbers<[1], [1], [0], [0], [0, 0, 1, 0], [], []>} : vector<12x8xf32>, vector<12x8xf32>, vector<12x12xf32> -> vector<12x12xf32>
    %cst_55 = arith.constant dense<0xFF800000> : vector<12xf32>
    %91 = vector.multi_reduction <maximumf>, %90, %cst_55 [1] : vector<12x12xf32> to vector<12xf32>
    %92 = vector.shape_cast %91 : vector<12xf32> to vector<12x1xf32>
    %93 = vector.broadcast %92 : vector<12x1xf32> to vector<12x12xf32>
    %94 = arith.subf %90, %93 : vector<12x12xf32>
    %95 = math.exp %94 : vector<12x12xf32>
    %cst_56 = arith.constant dense<0.000000e+00> : vector<12xf32>
    %96 = vector.multi_reduction <add>, %95, %cst_56 [1] : vector<12x12xf32> to vector<12xf32>
    %97 = vector.shape_cast %96 : vector<12xf32> to vector<12x1xf32>
    %98 = vector.broadcast %97 : vector<12x1xf32> to vector<12x12xf32>
    %99 = arith.divf %95, %98 : vector<12x12xf32>
    %100 = vector.extract_strided_slice %45 {offsets = [0, 24], sizes = [12, 8], strides = [1, 1]} : vector<12x32xf32> to vector<12x8xf32>
    %cst_57 = arith.constant dense<0.000000e+00> : vector<12x8xf32>
    %101 = tpu.matmul %99, %100, %cst_57 {dimension_numbers = #tpu.dot_dimension_numbers<[1], [0], [0], [1], [0, 0, 1, 1], [], []>} : vector<12x12xf32>, vector<12x8xf32>, vector<12x8xf32> -> vector<12x8xf32>
    %102 = tpu.concatenate %59, %73, %87, %101 in 1 : vector<12x8xf32>, vector<12x8xf32>, vector<12x8xf32>, vector<12x8xf32> -> vector<12x32xf32>
    %c0_58 = arith.constant 0 : index
    %c0_59 = arith.constant 0 : index
    %103 = vector.load %arg13[%c0_58, %c0_59] : memref<32x32xf32, #tpu.memory_space<vmem>>, vector<12x32xf32>
    tpu.vector_store %arg13[%c0_58, %c0_59], %102 {strides = array<i32>} : memref<32x32xf32, #tpu.memory_space<vmem>>, vector<12x32xf32>,
    %104 = vector.extract_strided_slice %32 {offsets = [16, 0], sizes = [12, 32], strides = [1, 1]} : vector<32x32xf32> to vector<12x32xf32>
    %105 = vector.extract_strided_slice %37 {offsets = [16, 0], sizes = [12, 32], strides = [1, 1]} : vector<32x32xf32> to vector<12x32xf32>
    %106 = vector.extract_strided_slice %42 {offsets = [16, 0], sizes = [12, 32], strides = [1, 1]} : vector<32x32xf32> to vector<12x32xf32>
    %107 = vector.extract_strided_slice %104 {offsets = [0, 0], sizes = [12, 8], strides = [1, 1]} : vector<12x32xf32> to vector<12x8xf32>
    %108 = vector.extract_strided_slice %105 {offsets = [0, 0], sizes = [12, 8], strides = [1, 1]} : vector<12x32xf32> to vector<12x8xf32>
    %cst_60 = arith.constant dense<0.000000e+00> : vector<12x12xf32>
    %109 = tpu.matmul %107, %108, %cst_60 {dimension_numbers = #tpu.dot_dimension_numbers<[1], [1], [0], [0], [0, 0, 1, 0], [], []>} : vector<12x8xf32>, vector<12x8xf32>, vector<12x12xf32> -> vector<12x12xf32>
    %cst_61 = arith.constant dense<0xFF800000> : vector<12xf32>
    %110 = vector.multi_reduction <maximumf>, %109, %cst_61 [1] : vector<12x12xf32> to vector<12xf32>
    %111 = vector.shape_cast %110 : vector<12xf32> to vector<12x1xf32>
    %112 = vector.broadcast %111 : vector<12x1xf32> to vector<12x12xf32>
    %113 = arith.subf %109, %112 : vector<12x12xf32>
    %114 = math.exp %113 : vector<12x12xf32>
    %cst_62 = arith.constant dense<0.000000e+00> : vector<12xf32>
    %115 = vector.multi_reduction <add>, %114, %cst_62 [1] : vector<12x12xf32> to vector<12xf32>
    %116 = vector.shape_cast %115 : vector<12xf32> to vector<12x1xf32>
    %117 = vector.broadcast %116 : vector<12x1xf32> to vector<12x12xf32>
    %118 = arith.divf %114, %117 : vector<12x12xf32>
    %119 = vector.extract_strided_slice %106 {offsets = [0, 0], sizes = [12, 8], strides = [1, 1]} : vector<12x32xf32> to vector<12x8xf32>
    %cst_63 = arith.constant dense<0.000000e+00> : vector<12x8xf32>
    %120 = tpu.matmul %118, %119, %cst_63 {dimension_numbers = #tpu.dot_dimension_numbers<[1], [0], [0], [1], [0, 0, 1, 1], [], []>} : vector<12x12xf32>, vector<12x8xf32>, vector<12x8xf32> -> vector<12x8xf32>
    %121 = vector.extract_strided_slice %104 {offsets = [0, 8], sizes = [12, 8], strides = [1, 1]} : vector<12x32xf32> to vector<12x8xf32>
    %122 = vector.extract_strided_slice %105 {offsets = [0, 8], sizes = [12, 8], strides = [1, 1]} : vector<12x32xf32> to vector<12x8xf32>
    %cst_64 = arith.constant dense<0.000000e+00> : vector<12x12xf32>
    %123 = tpu.matmul %121, %122, %cst_64 {dimension_numbers = #tpu.dot_dimension_numbers<[1], [1], [0], [0], [0, 0, 1, 0], [], []>} : vector<12x8xf32>, vector<12x8xf32>, vector<12x12xf32> -> vector<12x12xf32>
    %cst_65 = arith.constant dense<0xFF800000> : vector<12xf32>
    %124 = vector.multi_reduction <maximumf>, %123, %cst_65 [1] : vector<12x12xf32> to vector<12xf32>
    %125 = vector.shape_cast %124 : vector<12xf32> to vector<12x1xf32>
    %126 = vector.broadcast %125 : vector<12x1xf32> to vector<12x12xf32>
    %127 = arith.subf %123, %126 : vector<12x12xf32>
    %128 = math.exp %127 : vector<12x12xf32>
    %cst_66 = arith.constant dense<0.000000e+00> : vector<12xf32>
    %129 = vector.multi_reduction <add>, %128, %cst_66 [1] : vector<12x12xf32> to vector<12xf32>
    %130 = vector.shape_cast %129 : vector<12xf32> to vector<12x1xf32>
    %131 = vector.broadcast %130 : vector<12x1xf32> to vector<12x12xf32>
    %132 = arith.divf %128, %131 : vector<12x12xf32>
    %133 = vector.extract_strided_slice %106 {offsets = [0, 8], sizes = [12, 8], strides = [1, 1]} : vector<12x32xf32> to vector<12x8xf32>
    %cst_67 = arith.constant dense<0.000000e+00> : vector<12x8xf32>
    %134 = tpu.matmul %132, %133, %cst_67 {dimension_numbers = #tpu.dot_dimension_numbers<[1], [0], [0], [1], [0, 0, 1, 1], [], []>} : vector<12x12xf32>, vector<12x8xf32>, vector<12x8xf32> -> vector<12x8xf32>
    %135 = vector.extract_strided_slice %104 {offsets = [0, 16], sizes = [12, 8], strides = [1, 1]} : vector<12x32xf32> to vector<12x8xf32>
    %136 = vector.extract_strided_slice %105 {offsets = [0, 16], sizes = [12, 8], strides = [1, 1]} : vector<12x32xf32> to vector<12x8xf32>
    %cst_68 = arith.constant dense<0.000000e+00> : vector<12x12xf32>
    %137 = tpu.matmul %135, %136, %cst_68 {dimension_numbers = #tpu.dot_dimension_numbers<[1], [1], [0], [0], [0, 0, 1, 0], [], []>} : vector<12x8xf32>, vector<12x8xf32>, vector<12x12xf32> -> vector<12x12xf32>
    %cst_69 = arith.constant dense<0xFF800000> : vector<12xf32>
    %138 = vector.multi_reduction <maximumf>, %137, %cst_69 [1] : vector<12x12xf32> to vector<12xf32>
    %139 = vector.shape_cast %138 : vector<12xf32> to vector<12x1xf32>
    %140 = vector.broadcast %139 : vector<12x1xf32> to vector<12x12xf32>
    %141 = arith.subf %137, %140 : vector<12x12xf32>
    %142 = math.exp %141 : vector<12x12xf32>
    %cst_70 = arith.constant dense<0.000000e+00> : vector<12xf32>
    %143 = vector.multi_reduction <add>, %142, %cst_70 [1] : vector<12x12xf32> to vector<12xf32>
    %144 = vector.shape_cast %143 : vector<12xf32> to vector<12x1xf32>
    %145 = vector.broadcast %144 : vector<12x1xf32> to vector<12x12xf32>
    %146 = arith.divf %142, %145 : vector<12x12xf32>
    %147 = vector.extract_strided_slice %106 {offsets = [0, 16], sizes = [12, 8], strides = [1, 1]} : vector<12x32xf32> to vector<12x8xf32>
    %cst_71 = arith.constant dense<0.000000e+00> : vector<12x8xf32>
    %148 = tpu.matmul %146, %147, %cst_71 {dimension_numbers = #tpu.dot_dimension_numbers<[1], [0], [0], [1], [0, 0, 1, 1], [], []>} : vector<12x12xf32>, vector<12x8xf32>, vector<12x8xf32> -> vector<12x8xf32>
    %149 = vector.extract_strided_slice %104 {offsets = [0, 24], sizes = [12, 8], strides = [1, 1]} : vector<12x32xf32> to vector<12x8xf32>
    %150 = vector.extract_strided_slice %105 {offsets = [0, 24], sizes = [12, 8], strides = [1, 1]} : vector<12x32xf32> to vector<12x8xf32>
    %cst_72 = arith.constant dense<0.000000e+00> : vector<12x12xf32>
    %151 = tpu.matmul %149, %150, %cst_72 {dimension_numbers = #tpu.dot_dimension_numbers<[1], [1], [0], [0], [0, 0, 1, 0], [], []>} : vector<12x8xf32>, vector<12x8xf32>, vector<12x12xf32> -> vector<12x12xf32>
    %cst_73 = arith.constant dense<0xFF800000> : vector<12xf32>
    %152 = vector.multi_reduction <maximumf>, %151, %cst_73 [1] : vector<12x12xf32> to vector<12xf32>
    %153 = vector.shape_cast %152 : vector<12xf32> to vector<12x1xf32>
    %154 = vector.broadcast %153 : vector<12x1xf32> to vector<12x12xf32>
    %155 = arith.subf %151, %154 : vector<12x12xf32>
    %156 = math.exp %155 : vector<12x12xf32>
    %cst_74 = arith.constant dense<0.000000e+00> : vector<12xf32>
    %157 = vector.multi_reduction <add>, %156, %cst_74 [1] : vector<12x12xf32> to vector<12xf32>
    %158 = vector.shape_cast %157 : vector<12xf32> to vector<12x1xf32>
    %159 = vector.broadcast %158 : vector<12x1xf32> to vector<12x12xf32>
    %160 = arith.divf %156, %159 : vector<12x12xf32>
    %161 = vector.extract_strided_slice %106 {offsets = [0, 24], sizes = [12, 8], strides = [1, 1]} : vector<12x32xf32> to vector<12x8xf32>
    %cst_75 = arith.constant dense<0.000000e+00> : vector<12x8xf32>
    %162 = tpu.matmul %160, %161, %cst_75 {dimension_numbers = #tpu.dot_dimension_numbers<[1], [0], [0], [1], [0, 0, 1, 1], [], []>} : vector<12x12xf32>, vector<12x8xf32>, vector<12x8xf32> -> vector<12x8xf32>
    %163 = tpu.concatenate %120, %134, %148, %162 in 1 : vector<12x8xf32>, vector<12x8xf32>, vector<12x8xf32>, vector<12x8xf32> -> vector<12x32xf32>
    %c16 = arith.constant 16 : index
    %c0_76 = arith.constant 0 : index
    %164 = vector.load %arg13[%c16, %c0_76] : memref<32x32xf32, #tpu.memory_space<vmem>>, vector<12x32xf32>
    tpu.vector_store %arg13[%c16, %c0_76], %163 {strides = array<i32>} : memref<32x32xf32, #tpu.memory_space<vmem>>, vector<12x32xf32>,
    %c0_77 = arith.constant 0 : index
    %c0_78 = arith.constant 0 : index
    %165 = vector.load %arg13[%c0_77, %c0_78] : memref<32x32xf32, #tpu.memory_space<vmem>>, vector<32x32xf32>
    %c0_79 = arith.constant 0 : index
    %c0_80 = arith.constant 0 : index
    %c0_81 = arith.constant 0 : index
    %166 = vector.load %arg6[%c0_79, %c0_80, %c0_81] : memref<2x32x32xf32, #tpu.memory_space<vmem>>, vector<1x32x32xf32>
    %167 = vector.shape_cast %166 : vector<1x32x32xf32> to vector<32x32xf32>
    %cst_82 = arith.constant dense<0.000000e+00> : vector<32x32xf32>
    %168 = tpu.matmul %165, %167, %cst_82 {dimension_numbers = #tpu.dot_dimension_numbers<[1], [1], [0], [0], [0, 0, 1, 0], [], []>} : vector<32x32xf32>, vector<32x32xf32>, vector<32x32xf32> -> vector<32x32xf32>
    %169 = vector.broadcast %9 : vector<1x32xf32> to vector<32x32xf32>
    %170 = arith.addf %168, %169 : vector<32x32xf32>
    %171 = arith.addf %25, %170 : vector<32x32xf32>
    %cst_83 = arith.constant dense<0.000000e+00> : vector<32xf32>
    %172 = vector.multi_reduction <add>, %171, %cst_83 [1] : vector<32x32xf32> to vector<32xf32>
    %173 = vector.shape_cast %172 : vector<32xf32> to vector<32x1xf32>
    %cst_84 = arith.constant 3.200000e+01 : f32
    %174 = vector.broadcast %cst_84 : f32 to vector<32x1xf32>
    %175 = arith.divf %173, %174 : vector<32x1xf32>
    %176 = vector.broadcast %175 : vector<32x1xf32> to vector<32x32xf32>
    %177 = arith.subf %171, %176 : vector<32x32xf32>
    %178 = arith.mulf %177, %177 : vector<32x32xf32>
    %cst_85 = arith.constant dense<0.000000e+00> : vector<32xf32>
    %179 = vector.multi_reduction <add>, %178, %cst_85 [1] : vector<32x32xf32> to vector<32xf32>
    %180 = vector.shape_cast %179 : vector<32xf32> to vector<32x1xf32>
    %cst_86 = arith.constant 3.200000e+01 : f32
    %181 = vector.broadcast %cst_86 : f32 to vector<32x1xf32>
    %182 = arith.divf %180, %181 : vector<32x1xf32>
    %183 = vector.broadcast %175 : vector<32x1xf32> to vector<32x32xf32>
    %184 = arith.subf %171, %183 : vector<32x32xf32>
    %cst_87 = arith.constant 9.99999974E-6 : f32
    %185 = vector.broadcast %cst_87 : f32 to vector<32x1xf32>
    %186 = arith.addf %182, %185 : vector<32x1xf32>
    %187 = math.rsqrt %186 : vector<32x1xf32>
    %188 = vector.broadcast %187 : vector<32x1xf32> to vector<32x32xf32>
    %189 = arith.mulf %184, %188 : vector<32x32xf32>
    %190 = vector.broadcast %10 : vector<1x32xf32> to vector<32x32xf32>
    %191 = arith.mulf %189, %190 : vector<32x32xf32>
    %192 = vector.broadcast %11 : vector<1x32xf32> to vector<32x32xf32>
    %193 = arith.addf %191, %192 : vector<32x32xf32>
    %c0_88 = arith.constant 0 : index
    %c0_89 = arith.constant 0 : index
    %c0_90 = arith.constant 0 : index
    %194 = vector.load %arg7[%c0_88, %c0_89, %c0_90] : memref<2x64x32xf32, #tpu.memory_space<vmem>>, vector<1x64x32xf32>
    %195 = vector.shape_cast %194 : vector<1x64x32xf32> to vector<64x32xf32>
    %cst_91 = arith.constant dense<0.000000e+00> : vector<32x64xf32>
    %196 = tpu.matmul %193, %195, %cst_91 {dimension_numbers = #tpu.dot_dimension_numbers<[1], [1], [0], [0], [0, 0, 1, 0], [], []>} : vector<32x32xf32>, vector<64x32xf32>, vector<32x64xf32> -> vector<32x64xf32>
    %197 = vector.broadcast %15 : vector<1x64xf32> to vector<32x64xf32>
    %198 = arith.addf %196, %197 : vector<32x64xf32>
    %cst_92 = arith.constant 0.000000e+00 : f32
    %199 = vector.broadcast %cst_92 : f32 to vector<32x64xf32>
    %200 = arith.maximumf %198, %199 : vector<32x64xf32>
    %c0_93 = arith.constant 0 : index
    %c0_94 = arith.constant 0 : index
    %c0_95 = arith.constant 0 : index
    %201 = vector.load %arg8[%c0_93, %c0_94, %c0_95] : memref<2x32x64xf32, #tpu.memory_space<vmem>>, vector<1x32x64xf32>
    %202 = vector.shape_cast %201 : vector<1x32x64xf32> to vector<32x64xf32>
    %cst_96 = arith.constant dense<0.000000e+00> : vector<32x32xf32>
    %203 = tpu.matmul %200, %202, %cst_96 {dimension_numbers = #tpu.dot_dimension_numbers<[1], [1], [0], [0], [0, 0, 1, 0], [], []>} : vector<32x64xf32>, vector<32x64xf32>, vector<32x32xf32> -> vector<32x32xf32>
    %204 = vector.broadcast %12 : vector<1x32xf32> to vector<32x32xf32>
    %205 = arith.addf %203, %204 : vector<32x32xf32>
    %206 = arith.addf %193, %205 : vector<32x32xf32>
    %cst_97 = arith.constant dense<0.000000e+00> : vector<32xf32>
    %207 = vector.multi_reduction <add>, %206, %cst_97 [1] : vector<32x32xf32> to vector<32xf32>
    %208 = vector.shape_cast %207 : vector<32xf32> to vector<32x1xf32>
    %cst_98 = arith.constant 3.200000e+01 : f32
    %209 = vector.broadcast %cst_98 : f32 to vector<32x1xf32>
    %210 = arith.divf %208, %209 : vector<32x1xf32>
    %211 = vector.broadcast %210 : vector<32x1xf32> to vector<32x32xf32>
    %212 = arith.subf %206, %211 : vector<32x32xf32>
    %213 = arith.mulf %212, %212 : vector<32x32xf32>
    %cst_99 = arith.constant dense<0.000000e+00> : vector<32xf32>
    %214 = vector.multi_reduction <add>, %213, %cst_99 [1] : vector<32x32xf32> to vector<32xf32>
    %215 = vector.shape_cast %214 : vector<32xf32> to vector<32x1xf32>
    %cst_100 = arith.constant 3.200000e+01 : f32
    %216 = vector.broadcast %cst_100 : f32 to vector<32x1xf32>
    %217 = arith.divf %215, %216 : vector<32x1xf32>
    %218 = vector.broadcast %210 : vector<32x1xf32> to vector<32x32xf32>
    %219 = arith.subf %206, %218 : vector<32x32xf32>
    %cst_101 = arith.constant 9.99999974E-6 : f32
    %220 = vector.broadcast %cst_101 : f32 to vector<32x1xf32>
    %221 = arith.addf %217, %220 : vector<32x1xf32>
    %222 = math.rsqrt %221 : vector<32x1xf32>
    %223 = vector.broadcast %222 : vector<32x1xf32> to vector<32x32xf32>
    %224 = arith.mulf %219, %223 : vector<32x32xf32>
    %225 = vector.broadcast %13 : vector<1x32xf32> to vector<32x32xf32>
    %226 = arith.mulf %224, %225 : vector<32x32xf32>
    %227 = vector.broadcast %14 : vector<1x32xf32> to vector<32x32xf32>
    %228 = arith.addf %226, %227 : vector<32x32xf32>
    %c0_102 = arith.constant 0 : index
    %c0_103 = arith.constant 0 : index
    %229 = vector.load %arg12[%c0_102, %c0_103] : memref<32x32xf32, #tpu.memory_space<vmem>>, vector<32x32xf32>
    tpu.vector_store %arg12[%c0_102, %c0_103], %228 {strides = array<i32>} : memref<32x32xf32, #tpu.memory_space<vmem>>, vector<32x32xf32>,
    %c10 = arith.constant 10 : index
    %c0_104 = arith.constant 0 : index
    %230 = vector.load %arg9[%c10, %c0_104] : memref<20x32xf32, #tpu.memory_space<vmem>>, vector<1x32xf32>
    %c11 = arith.constant 11 : index
    %c0_105 = arith.constant 0 : index
    %231 = vector.load %arg9[%c11, %c0_105] : memref<20x32xf32, #tpu.memory_space<vmem>>, vector<1x32xf32>
    %c12 = arith.constant 12 : index
    %c0_106 = arith.constant 0 : index
    %232 = vector.load %arg9[%c12, %c0_106] : memref<20x32xf32, #tpu.memory_space<vmem>>, vector<1x32xf32>
    %c13 = arith.constant 13 : index
    %c0_107 = arith.constant 0 : index
    %233 = vector.load %arg9[%c13, %c0_107] : memref<20x32xf32, #tpu.memory_space<vmem>>, vector<1x32xf32>
    %c14 = arith.constant 14 : index
    %c0_108 = arith.constant 0 : index
    %234 = vector.load %arg9[%c14, %c0_108] : memref<20x32xf32, #tpu.memory_space<vmem>>, vector<1x32xf32>
    %c15 = arith.constant 15 : index
    %c0_109 = arith.constant 0 : index
    %235 = vector.load %arg9[%c15, %c0_109] : memref<20x32xf32, #tpu.memory_space<vmem>>, vector<1x32xf32>
    %c16_110 = arith.constant 16 : index
    %c0_111 = arith.constant 0 : index
    %236 = vector.load %arg9[%c16_110, %c0_111] : memref<20x32xf32, #tpu.memory_space<vmem>>, vector<1x32xf32>
    %c17 = arith.constant 17 : index
    %c0_112 = arith.constant 0 : index
    %237 = vector.load %arg9[%c17, %c0_112] : memref<20x32xf32, #tpu.memory_space<vmem>>, vector<1x32xf32>
    %c18 = arith.constant 18 : index
    %c0_113 = arith.constant 0 : index
    %238 = vector.load %arg9[%c18, %c0_113] : memref<20x32xf32, #tpu.memory_space<vmem>>, vector<1x32xf32>
    %c19 = arith.constant 19 : index
    %c0_114 = arith.constant 0 : index
    %239 = vector.load %arg9[%c19, %c0_114] : memref<20x32xf32, #tpu.memory_space<vmem>>, vector<1x32xf32>
    %c1_115 = arith.constant 1 : index
    %c0_116 = arith.constant 0 : index
    %240 = vector.load %arg10[%c1_115, %c0_116] : memref<2x64xf32, #tpu.memory_space<vmem>>, vector<1x64xf32>
    %c1_117 = arith.constant 1 : index
    %c0_118 = arith.constant 0 : index
    %c0_119 = arith.constant 0 : index
    %241 = vector.load %arg2[%c1_117, %c0_118, %c0_119] : memref<2x32x16xf32, #tpu.memory_space<vmem>>, vector<1x32x16xf32>
    %242 = vector.shape_cast %241 : vector<1x32x16xf32> to vector<32x16xf32>
    %cst_120 = arith.constant dense<0.000000e+00> : vector<16x32xf32>
    %243 = tpu.matmul %4, %242, %cst_120 {dimension_numbers = #tpu.dot_dimension_numbers<[1], [1], [0], [0], [0, 0, 1, 0], [], []>} : vector<16x16xf32>, vector<32x16xf32>, vector<16x32xf32> -> vector<16x32xf32>
    %244 = vector.broadcast %230 : vector<1x32xf32> to vector<16x32xf32>
    %245 = arith.addf %243, %244 : vector<16x32xf32>
    %246 = vector.extract_strided_slice %245 {offsets = [0, 0], sizes = [8, 32], strides = [1, 1]} : vector<16x32xf32> to vector<8x32xf32>
    %c8_121 = arith.constant 8 : index
    %c0_122 = arith.constant 0 : index
    %247 = vector.load %arg12[%c8_121, %c0_122] : memref<32x32xf32, #tpu.memory_space<vmem>>, vector<8x32xf32>
    tpu.vector_store %arg12[%c8_121, %c0_122], %246 {strides = array<i32>} : memref<32x32xf32, #tpu.memory_space<vmem>>, vector<8x32xf32>,
    %248 = vector.extract_strided_slice %245 {offsets = [8, 0], sizes = [8, 32], strides = [1, 1]} : vector<16x32xf32> to vector<8x32xf32>
    %c24_123 = arith.constant 24 : index
    %c0_124 = arith.constant 0 : index
    %249 = vector.load %arg12[%c24_123, %c0_124] : memref<32x32xf32, #tpu.memory_space<vmem>>, vector<8x32xf32>
    tpu.vector_store %arg12[%c24_123, %c0_124], %248 {strides = array<i32>} : memref<32x32xf32, #tpu.memory_space<vmem>>, vector<8x32xf32>,
    %c0_125 = arith.constant 0 : index
    %c0_126 = arith.constant 0 : index
    %250 = vector.load %arg12[%c0_125, %c0_126] : memref<32x32xf32, #tpu.memory_space<vmem>>, vector<32x32xf32>
    %c1_127 = arith.constant 1 : index
    %c0_128 = arith.constant 0 : index
    %c0_129 = arith.constant 0 : index
    %251 = vector.load %arg3[%c1_127, %c0_128, %c0_129] : memref<2x32x32xf32, #tpu.memory_space<vmem>>, vector<1x32x32xf32>
    %252 = vector.shape_cast %251 : vector<1x32x32xf32> to vector<32x32xf32>
    %cst_130 = arith.constant dense<0.000000e+00> : vector<32x32xf32>
    %253 = tpu.matmul %250, %252, %cst_130 {dimension_numbers = #tpu.dot_dimension_numbers<[1], [1], [0], [0], [0, 0, 1, 0], [], []>} : vector<32x32xf32>, vector<32x32xf32>, vector<32x32xf32> -> vector<32x32xf32>
    %254 = vector.broadcast %231 : vector<1x32xf32> to vector<32x32xf32>
    %255 = arith.addf %253, %254 : vector<32x32xf32>
    %cst_131 = arith.constant 0.353553385 : f32
    %256 = vector.broadcast %cst_131 : f32 to vector<32x32xf32>
    %257 = arith.mulf %255, %256 : vector<32x32xf32>
    %c1_132 = arith.constant 1 : index
    %c0_133 = arith.constant 0 : index
    %c0_134 = arith.constant 0 : index
    %258 = vector.load %arg4[%c1_132, %c0_133, %c0_134] : memref<2x32x32xf32, #tpu.memory_space<vmem>>, vector<1x32x32xf32>
    %259 = vector.shape_cast %258 : vector<1x32x32xf32> to vector<32x32xf32>
    %cst_135 = arith.constant dense<0.000000e+00> : vector<32x32xf32>
    %260 = tpu.matmul %250, %259, %cst_135 {dimension_numbers = #tpu.dot_dimension_numbers<[1], [1], [0], [0], [0, 0, 1, 0], [], []>} : vector<32x32xf32>, vector<32x32xf32>, vector<32x32xf32> -> vector<32x32xf32>
    %261 = vector.broadcast %232 : vector<1x32xf32> to vector<32x32xf32>
    %262 = arith.addf %260, %261 : vector<32x32xf32>
    %c1_136 = arith.constant 1 : index
    %c0_137 = arith.constant 0 : index
    %c0_138 = arith.constant 0 : index
    %263 = vector.load %arg5[%c1_136, %c0_137, %c0_138] : memref<2x32x32xf32, #tpu.memory_space<vmem>>, vector<1x32x32xf32>
    %264 = vector.shape_cast %263 : vector<1x32x32xf32> to vector<32x32xf32>
    %cst_139 = arith.constant dense<0.000000e+00> : vector<32x32xf32>
    %265 = tpu.matmul %250, %264, %cst_139 {dimension_numbers = #tpu.dot_dimension_numbers<[1], [1], [0], [0], [0, 0, 1, 0], [], []>} : vector<32x32xf32>, vector<32x32xf32>, vector<32x32xf32> -> vector<32x32xf32>
    %266 = vector.broadcast %233 : vector<1x32xf32> to vector<32x32xf32>
    %267 = arith.addf %265, %266 : vector<32x32xf32>
    %268 = vector.extract_strided_slice %257 {offsets = [0, 0], sizes = [12, 32], strides = [1, 1]} : vector<32x32xf32> to vector<12x32xf32>
    %269 = vector.extract_strided_slice %262 {offsets = [0, 0], sizes = [12, 32], strides = [1, 1]} : vector<32x32xf32> to vector<12x32xf32>
    %270 = vector.extract_strided_slice %267 {offsets = [0, 0], sizes = [12, 32], strides = [1, 1]} : vector<32x32xf32> to vector<12x32xf32>
    %271 = vector.extract_strided_slice %268 {offsets = [0, 0], sizes = [12, 8], strides = [1, 1]} : vector<12x32xf32> to vector<12x8xf32>
    %272 = vector.extract_strided_slice %269 {offsets = [0, 0], sizes = [12, 8], strides = [1, 1]} : vector<12x32xf32> to vector<12x8xf32>
    %cst_140 = arith.constant dense<0.000000e+00> : vector<12x12xf32>
    %273 = tpu.matmul %271, %272, %cst_140 {dimension_numbers = #tpu.dot_dimension_numbers<[1], [1], [0], [0], [0, 0, 1, 0], [], []>} : vector<12x8xf32>, vector<12x8xf32>, vector<12x12xf32> -> vector<12x12xf32>
    %cst_141 = arith.constant dense<0xFF800000> : vector<12xf32>
    %274 = vector.multi_reduction <maximumf>, %273, %cst_141 [1] : vector<12x12xf32> to vector<12xf32>
    %275 = vector.shape_cast %274 : vector<12xf32> to vector<12x1xf32>
    %276 = vector.broadcast %275 : vector<12x1xf32> to vector<12x12xf32>
    %277 = arith.subf %273, %276 : vector<12x12xf32>
    %278 = math.exp %277 : vector<12x12xf32>
    %cst_142 = arith.constant dense<0.000000e+00> : vector<12xf32>
    %279 = vector.multi_reduction <add>, %278, %cst_142 [1] : vector<12x12xf32> to vector<12xf32>
    %280 = vector.shape_cast %279 : vector<12xf32> to vector<12x1xf32>
    %281 = vector.broadcast %280 : vector<12x1xf32> to vector<12x12xf32>
    %282 = arith.divf %278, %281 : vector<12x12xf32>
    %283 = vector.extract_strided_slice %270 {offsets = [0, 0], sizes = [12, 8], strides = [1, 1]} : vector<12x32xf32> to vector<12x8xf32>
    %cst_143 = arith.constant dense<0.000000e+00> : vector<12x8xf32>
    %284 = tpu.matmul %282, %283, %cst_143 {dimension_numbers = #tpu.dot_dimension_numbers<[1], [0], [0], [1], [0, 0, 1, 1], [], []>} : vector<12x12xf32>, vector<12x8xf32>, vector<12x8xf32> -> vector<12x8xf32>
    %285 = vector.extract_strided_slice %268 {offsets = [0, 8], sizes = [12, 8], strides = [1, 1]} : vector<12x32xf32> to vector<12x8xf32>
    %286 = vector.extract_strided_slice %269 {offsets = [0, 8], sizes = [12, 8], strides = [1, 1]} : vector<12x32xf32> to vector<12x8xf32>
    %cst_144 = arith.constant dense<0.000000e+00> : vector<12x12xf32>
    %287 = tpu.matmul %285, %286, %cst_144 {dimension_numbers = #tpu.dot_dimension_numbers<[1], [1], [0], [0], [0, 0, 1, 0], [], []>} : vector<12x8xf32>, vector<12x8xf32>, vector<12x12xf32> -> vector<12x12xf32>
    %cst_145 = arith.constant dense<0xFF800000> : vector<12xf32>
    %288 = vector.multi_reduction <maximumf>, %287, %cst_145 [1] : vector<12x12xf32> to vector<12xf32>
    %289 = vector.shape_cast %288 : vector<12xf32> to vector<12x1xf32>
    %290 = vector.broadcast %289 : vector<12x1xf32> to vector<12x12xf32>
    %291 = arith.subf %287, %290 : vector<12x12xf32>
    %292 = math.exp %291 : vector<12x12xf32>
    %cst_146 = arith.constant dense<0.000000e+00> : vector<12xf32>
    %293 = vector.multi_reduction <add>, %292, %cst_146 [1] : vector<12x12xf32> to vector<12xf32>
    %294 = vector.shape_cast %293 : vector<12xf32> to vector<12x1xf32>
    %295 = vector.broadcast %294 : vector<12x1xf32> to vector<12x12xf32>
    %296 = arith.divf %292, %295 : vector<12x12xf32>
    %297 = vector.extract_strided_slice %270 {offsets = [0, 8], sizes = [12, 8], strides = [1, 1]} : vector<12x32xf32> to vector<12x8xf32>
    %cst_147 = arith.constant dense<0.000000e+00> : vector<12x8xf32>
    %298 = tpu.matmul %296, %297, %cst_147 {dimension_numbers = #tpu.dot_dimension_numbers<[1], [0], [0], [1], [0, 0, 1, 1], [], []>} : vector<12x12xf32>, vector<12x8xf32>, vector<12x8xf32> -> vector<12x8xf32>
    %299 = vector.extract_strided_slice %268 {offsets = [0, 16], sizes = [12, 8], strides = [1, 1]} : vector<12x32xf32> to vector<12x8xf32>
    %300 = vector.extract_strided_slice %269 {offsets = [0, 16], sizes = [12, 8], strides = [1, 1]} : vector<12x32xf32> to vector<12x8xf32>
    %cst_148 = arith.constant dense<0.000000e+00> : vector<12x12xf32>
    %301 = tpu.matmul %299, %300, %cst_148 {dimension_numbers = #tpu.dot_dimension_numbers<[1], [1], [0], [0], [0, 0, 1, 0], [], []>} : vector<12x8xf32>, vector<12x8xf32>, vector<12x12xf32> -> vector<12x12xf32>
    %cst_149 = arith.constant dense<0xFF800000> : vector<12xf32>
    %302 = vector.multi_reduction <maximumf>, %301, %cst_149 [1] : vector<12x12xf32> to vector<12xf32>
    %303 = vector.shape_cast %302 : vector<12xf32> to vector<12x1xf32>
    %304 = vector.broadcast %303 : vector<12x1xf32> to vector<12x12xf32>
    %305 = arith.subf %301, %304 : vector<12x12xf32>
    %306 = math.exp %305 : vector<12x12xf32>
    %cst_150 = arith.constant dense<0.000000e+00> : vector<12xf32>
    %307 = vector.multi_reduction <add>, %306, %cst_150 [1] : vector<12x12xf32> to vector<12xf32>
    %308 = vector.shape_cast %307 : vector<12xf32> to vector<12x1xf32>
    %309 = vector.broadcast %308 : vector<12x1xf32> to vector<12x12xf32>
    %310 = arith.divf %306, %309 : vector<12x12xf32>
    %311 = vector.extract_strided_slice %270 {offsets = [0, 16], sizes = [12, 8], strides = [1, 1]} : vector<12x32xf32> to vector<12x8xf32>
    %cst_151 = arith.constant dense<0.000000e+00> : vector<12x8xf32>
    %312 = tpu.matmul %310, %311, %cst_151 {dimension_numbers = #tpu.dot_dimension_numbers<[1], [0], [0], [1], [0, 0, 1, 1], [], []>} : vector<12x12xf32>, vector<12x8xf32>, vector<12x8xf32> -> vector<12x8xf32>
    %313 = vector.extract_strided_slice %268 {offsets = [0, 24], sizes = [12, 8], strides = [1, 1]} : vector<12x32xf32> to vector<12x8xf32>
    %314 = vector.extract_strided_slice %269 {offsets = [0, 24], sizes = [12, 8], strides = [1, 1]} : vector<12x32xf32> to vector<12x8xf32>
    %cst_152 = arith.constant dense<0.000000e+00> : vector<12x12xf32>
    %315 = tpu.matmul %313, %314, %cst_152 {dimension_numbers = #tpu.dot_dimension_numbers<[1], [1], [0], [0], [0, 0, 1, 0], [], []>} : vector<12x8xf32>, vector<12x8xf32>, vector<12x12xf32> -> vector<12x12xf32>
    %cst_153 = arith.constant dense<0xFF800000> : vector<12xf32>
    %316 = vector.multi_reduction <maximumf>, %315, %cst_153 [1] : vector<12x12xf32> to vector<12xf32>
    %317 = vector.shape_cast %316 : vector<12xf32> to vector<12x1xf32>
    %318 = vector.broadcast %317 : vector<12x1xf32> to vector<12x12xf32>
    %319 = arith.subf %315, %318 : vector<12x12xf32>
    %320 = math.exp %319 : vector<12x12xf32>
    %cst_154 = arith.constant dense<0.000000e+00> : vector<12xf32>
    %321 = vector.multi_reduction <add>, %320, %cst_154 [1] : vector<12x12xf32> to vector<12xf32>
    %322 = vector.shape_cast %321 : vector<12xf32> to vector<12x1xf32>
    %323 = vector.broadcast %322 : vector<12x1xf32> to vector<12x12xf32>
    %324 = arith.divf %320, %323 : vector<12x12xf32>
    %325 = vector.extract_strided_slice %270 {offsets = [0, 24], sizes = [12, 8], strides = [1, 1]} : vector<12x32xf32> to vector<12x8xf32>
    %cst_155 = arith.constant dense<0.000000e+00> : vector<12x8xf32>
    %326 = tpu.matmul %324, %325, %cst_155 {dimension_numbers = #tpu.dot_dimension_numbers<[1], [0], [0], [1], [0, 0, 1, 1], [], []>} : vector<12x12xf32>, vector<12x8xf32>, vector<12x8xf32> -> vector<12x8xf32>
    %327 = tpu.concatenate %284, %298, %312, %326 in 1 : vector<12x8xf32>, vector<12x8xf32>, vector<12x8xf32>, vector<12x8xf32> -> vector<12x32xf32>
    %c0_156 = arith.constant 0 : index
    %c0_157 = arith.constant 0 : index
    %328 = vector.load %arg13[%c0_156, %c0_157] : memref<32x32xf32, #tpu.memory_space<vmem>>, vector<12x32xf32>
    tpu.vector_store %arg13[%c0_156, %c0_157], %327 {strides = array<i32>} : memref<32x32xf32, #tpu.memory_space<vmem>>, vector<12x32xf32>,
    %329 = vector.extract_strided_slice %257 {offsets = [16, 0], sizes = [12, 32], strides = [1, 1]} : vector<32x32xf32> to vector<12x32xf32>
    %330 = vector.extract_strided_slice %262 {offsets = [16, 0], sizes = [12, 32], strides = [1, 1]} : vector<32x32xf32> to vector<12x32xf32>
    %331 = vector.extract_strided_slice %267 {offsets = [16, 0], sizes = [12, 32], strides = [1, 1]} : vector<32x32xf32> to vector<12x32xf32>
    %332 = vector.extract_strided_slice %329 {offsets = [0, 0], sizes = [12, 8], strides = [1, 1]} : vector<12x32xf32> to vector<12x8xf32>
    %333 = vector.extract_strided_slice %330 {offsets = [0, 0], sizes = [12, 8], strides = [1, 1]} : vector<12x32xf32> to vector<12x8xf32>
    %cst_158 = arith.constant dense<0.000000e+00> : vector<12x12xf32>
    %334 = tpu.matmul %332, %333, %cst_158 {dimension_numbers = #tpu.dot_dimension_numbers<[1], [1], [0], [0], [0, 0, 1, 0], [], []>} : vector<12x8xf32>, vector<12x8xf32>, vector<12x12xf32> -> vector<12x12xf32>
    %cst_159 = arith.constant dense<0xFF800000> : vector<12xf32>
    %335 = vector.multi_reduction <maximumf>, %334, %cst_159 [1] : vector<12x12xf32> to vector<12xf32>
    %336 = vector.shape_cast %335 : vector<12xf32> to vector<12x1xf32>
    %337 = vector.broadcast %336 : vector<12x1xf32> to vector<12x12xf32>
    %338 = arith.subf %334, %337 : vector<12x12xf32>
    %339 = math.exp %338 : vector<12x12xf32>
    %cst_160 = arith.constant dense<0.000000e+00> : vector<12xf32>
    %340 = vector.multi_reduction <add>, %339, %cst_160 [1] : vector<12x12xf32> to vector<12xf32>
    %341 = vector.shape_cast %340 : vector<12xf32> to vector<12x1xf32>
    %342 = vector.broadcast %341 : vector<12x1xf32> to vector<12x12xf32>
    %343 = arith.divf %339, %342 : vector<12x12xf32>
    %344 = vector.extract_strided_slice %331 {offsets = [0, 0], sizes = [12, 8], strides = [1, 1]} : vector<12x32xf32> to vector<12x8xf32>
    %cst_161 = arith.constant dense<0.000000e+00> : vector<12x8xf32>
    %345 = tpu.matmul %343, %344, %cst_161 {dimension_numbers = #tpu.dot_dimension_numbers<[1], [0], [0], [1], [0, 0, 1, 1], [], []>} : vector<12x12xf32>, vector<12x8xf32>, vector<12x8xf32> -> vector<12x8xf32>
    %346 = vector.extract_strided_slice %329 {offsets = [0, 8], sizes = [12, 8], strides = [1, 1]} : vector<12x32xf32> to vector<12x8xf32>
    %347 = vector.extract_strided_slice %330 {offsets = [0, 8], sizes = [12, 8], strides = [1, 1]} : vector<12x32xf32> to vector<12x8xf32>
    %cst_162 = arith.constant dense<0.000000e+00> : vector<12x12xf32>
    %348 = tpu.matmul %346, %347, %cst_162 {dimension_numbers = #tpu.dot_dimension_numbers<[1], [1], [0], [0], [0, 0, 1, 0], [], []>} : vector<12x8xf32>, vector<12x8xf32>, vector<12x12xf32> -> vector<12x12xf32>
    %cst_163 = arith.constant dense<0xFF800000> : vector<12xf32>
    %349 = vector.multi_reduction <maximumf>, %348, %cst_163 [1] : vector<12x12xf32> to vector<12xf32>
    %350 = vector.shape_cast %349 : vector<12xf32> to vector<12x1xf32>
    %351 = vector.broadcast %350 : vector<12x1xf32> to vector<12x12xf32>
    %352 = arith.subf %348, %351 : vector<12x12xf32>
    %353 = math.exp %352 : vector<12x12xf32>
    %cst_164 = arith.constant dense<0.000000e+00> : vector<12xf32>
    %354 = vector.multi_reduction <add>, %353, %cst_164 [1] : vector<12x12xf32> to vector<12xf32>
    %355 = vector.shape_cast %354 : vector<12xf32> to vector<12x1xf32>
    %356 = vector.broadcast %355 : vector<12x1xf32> to vector<12x12xf32>
    %357 = arith.divf %353, %356 : vector<12x12xf32>
    %358 = vector.extract_strided_slice %331 {offsets = [0, 8], sizes = [12, 8], strides = [1, 1]} : vector<12x32xf32> to vector<12x8xf32>
    %cst_165 = arith.constant dense<0.000000e+00> : vector<12x8xf32>
    %359 = tpu.matmul %357, %358, %cst_165 {dimension_numbers = #tpu.dot_dimension_numbers<[1], [0], [0], [1], [0, 0, 1, 1], [], []>} : vector<12x12xf32>, vector<12x8xf32>, vector<12x8xf32> -> vector<12x8xf32>
    %360 = vector.extract_strided_slice %329 {offsets = [0, 16], sizes = [12, 8], strides = [1, 1]} : vector<12x32xf32> to vector<12x8xf32>
    %361 = vector.extract_strided_slice %330 {offsets = [0, 16], sizes = [12, 8], strides = [1, 1]} : vector<12x32xf32> to vector<12x8xf32>
    %cst_166 = arith.constant dense<0.000000e+00> : vector<12x12xf32>
    %362 = tpu.matmul %360, %361, %cst_166 {dimension_numbers = #tpu.dot_dimension_numbers<[1], [1], [0], [0], [0, 0, 1, 0], [], []>} : vector<12x8xf32>, vector<12x8xf32>, vector<12x12xf32> -> vector<12x12xf32>
    %cst_167 = arith.constant dense<0xFF800000> : vector<12xf32>
    %363 = vector.multi_reduction <maximumf>, %362, %cst_167 [1] : vector<12x12xf32> to vector<12xf32>
    %364 = vector.shape_cast %363 : vector<12xf32> to vector<12x1xf32>
    %365 = vector.broadcast %364 : vector<12x1xf32> to vector<12x12xf32>
    %366 = arith.subf %362, %365 : vector<12x12xf32>
    %367 = math.exp %366 : vector<12x12xf32>
    %cst_168 = arith.constant dense<0.000000e+00> : vector<12xf32>
    %368 = vector.multi_reduction <add>, %367, %cst_168 [1] : vector<12x12xf32> to vector<12xf32>
    %369 = vector.shape_cast %368 : vector<12xf32> to vector<12x1xf32>
    %370 = vector.broadcast %369 : vector<12x1xf32> to vector<12x12xf32>
    %371 = arith.divf %367, %370 : vector<12x12xf32>
    %372 = vector.extract_strided_slice %331 {offsets = [0, 16], sizes = [12, 8], strides = [1, 1]} : vector<12x32xf32> to vector<12x8xf32>
    %cst_169 = arith.constant dense<0.000000e+00> : vector<12x8xf32>
    %373 = tpu.matmul %371, %372, %cst_169 {dimension_numbers = #tpu.dot_dimension_numbers<[1], [0], [0], [1], [0, 0, 1, 1], [], []>} : vector<12x12xf32>, vector<12x8xf32>, vector<12x8xf32> -> vector<12x8xf32>
    %374 = vector.extract_strided_slice %329 {offsets = [0, 24], sizes = [12, 8], strides = [1, 1]} : vector<12x32xf32> to vector<12x8xf32>
    %375 = vector.extract_strided_slice %330 {offsets = [0, 24], sizes = [12, 8], strides = [1, 1]} : vector<12x32xf32> to vector<12x8xf32>
    %cst_170 = arith.constant dense<0.000000e+00> : vector<12x12xf32>
    %376 = tpu.matmul %374, %375, %cst_170 {dimension_numbers = #tpu.dot_dimension_numbers<[1], [1], [0], [0], [0, 0, 1, 0], [], []>} : vector<12x8xf32>, vector<12x8xf32>, vector<12x12xf32> -> vector<12x12xf32>
    %cst_171 = arith.constant dense<0xFF800000> : vector<12xf32>
    %377 = vector.multi_reduction <maximumf>, %376, %cst_171 [1] : vector<12x12xf32> to vector<12xf32>
    %378 = vector.shape_cast %377 : vector<12xf32> to vector<12x1xf32>
    %379 = vector.broadcast %378 : vector<12x1xf32> to vector<12x12xf32>
    %380 = arith.subf %376, %379 : vector<12x12xf32>
    %381 = math.exp %380 : vector<12x12xf32>
    %cst_172 = arith.constant dense<0.000000e+00> : vector<12xf32>
    %382 = vector.multi_reduction <add>, %381, %cst_172 [1] : vector<12x12xf32> to vector<12xf32>
    %383 = vector.shape_cast %382 : vector<12xf32> to vector<12x1xf32>
    %384 = vector.broadcast %383 : vector<12x1xf32> to vector<12x12xf32>
    %385 = arith.divf %381, %384 : vector<12x12xf32>
    %386 = vector.extract_strided_slice %331 {offsets = [0, 24], sizes = [12, 8], strides = [1, 1]} : vector<12x32xf32> to vector<12x8xf32>
    %cst_173 = arith.constant dense<0.000000e+00> : vector<12x8xf32>
    %387 = tpu.matmul %385, %386, %cst_173 {dimension_numbers = #tpu.dot_dimension_numbers<[1], [0], [0], [1], [0, 0, 1, 1], [], []>} : vector<12x12xf32>, vector<12x8xf32>, vector<12x8xf32> -> vector<12x8xf32>
    %388 = tpu.concatenate %345, %359, %373, %387 in 1 : vector<12x8xf32>, vector<12x8xf32>, vector<12x8xf32>, vector<12x8xf32> -> vector<12x32xf32>
    %c16_174 = arith.constant 16 : index
    %c0_175 = arith.constant 0 : index
    %389 = vector.load %arg13[%c16_174, %c0_175] : memref<32x32xf32, #tpu.memory_space<vmem>>, vector<12x32xf32>
    tpu.vector_store %arg13[%c16_174, %c0_175], %388 {strides = array<i32>} : memref<32x32xf32, #tpu.memory_space<vmem>>, vector<12x32xf32>,
    %c0_176 = arith.constant 0 : index
    %c0_177 = arith.constant 0 : index
    %390 = vector.load %arg13[%c0_176, %c0_177] : memref<32x32xf32, #tpu.memory_space<vmem>>, vector<32x32xf32>
    %c1_178 = arith.constant 1 : index
    %c0_179 = arith.constant 0 : index
    %c0_180 = arith.constant 0 : index
    %391 = vector.load %arg6[%c1_178, %c0_179, %c0_180] : memref<2x32x32xf32, #tpu.memory_space<vmem>>, vector<1x32x32xf32>
    %392 = vector.shape_cast %391 : vector<1x32x32xf32> to vector<32x32xf32>
    %cst_181 = arith.constant dense<0.000000e+00> : vector<32x32xf32>
    %393 = tpu.matmul %390, %392, %cst_181 {dimension_numbers = #tpu.dot_dimension_numbers<[1], [1], [0], [0], [0, 0, 1, 0], [], []>} : vector<32x32xf32>, vector<32x32xf32>, vector<32x32xf32> -> vector<32x32xf32>
    %394 = vector.broadcast %234 : vector<1x32xf32> to vector<32x32xf32>
    %395 = arith.addf %393, %394 : vector<32x32xf32>
    %396 = arith.addf %250, %395 : vector<32x32xf32>
    %cst_182 = arith.constant dense<0.000000e+00> : vector<32xf32>
    %397 = vector.multi_reduction <add>, %396, %cst_182 [1] : vector<32x32xf32> to vector<32xf32>
    %398 = vector.shape_cast %397 : vector<32xf32> to vector<32x1xf32>
    %cst_183 = arith.constant 3.200000e+01 : f32
    %399 = vector.broadcast %cst_183 : f32 to vector<32x1xf32>
    %400 = arith.divf %398, %399 : vector<32x1xf32>
    %401 = vector.broadcast %400 : vector<32x1xf32> to vector<32x32xf32>
    %402 = arith.subf %396, %401 : vector<32x32xf32>
    %403 = arith.mulf %402, %402 : vector<32x32xf32>
    %cst_184 = arith.constant dense<0.000000e+00> : vector<32xf32>
    %404 = vector.multi_reduction <add>, %403, %cst_184 [1] : vector<32x32xf32> to vector<32xf32>
    %405 = vector.shape_cast %404 : vector<32xf32> to vector<32x1xf32>
    %cst_185 = arith.constant 3.200000e+01 : f32
    %406 = vector.broadcast %cst_185 : f32 to vector<32x1xf32>
    %407 = arith.divf %405, %406 : vector<32x1xf32>
    %408 = vector.broadcast %400 : vector<32x1xf32> to vector<32x32xf32>
    %409 = arith.subf %396, %408 : vector<32x32xf32>
    %cst_186 = arith.constant 9.99999974E-6 : f32
    %410 = vector.broadcast %cst_186 : f32 to vector<32x1xf32>
    %411 = arith.addf %407, %410 : vector<32x1xf32>
    %412 = math.rsqrt %411 : vector<32x1xf32>
    %413 = vector.broadcast %412 : vector<32x1xf32> to vector<32x32xf32>
    %414 = arith.mulf %409, %413 : vector<32x32xf32>
    %415 = vector.broadcast %235 : vector<1x32xf32> to vector<32x32xf32>
    %416 = arith.mulf %414, %415 : vector<32x32xf32>
    %417 = vector.broadcast %236 : vector<1x32xf32> to vector<32x32xf32>
    %418 = arith.addf %416, %417 : vector<32x32xf32>
    %c1_187 = arith.constant 1 : index
    %c0_188 = arith.constant 0 : index
    %c0_189 = arith.constant 0 : index
    %419 = vector.load %arg7[%c1_187, %c0_188, %c0_189] : memref<2x64x32xf32, #tpu.memory_space<vmem>>, vector<1x64x32xf32>
    %420 = vector.shape_cast %419 : vector<1x64x32xf32> to vector<64x32xf32>
    %cst_190 = arith.constant dense<0.000000e+00> : vector<32x64xf32>
    %421 = tpu.matmul %418, %420, %cst_190 {dimension_numbers = #tpu.dot_dimension_numbers<[1], [1], [0], [0], [0, 0, 1, 0], [], []>} : vector<32x32xf32>, vector<64x32xf32>, vector<32x64xf32> -> vector<32x64xf32>
    %422 = vector.broadcast %240 : vector<1x64xf32> to vector<32x64xf32>
    %423 = arith.addf %421, %422 : vector<32x64xf32>
    %cst_191 = arith.constant 0.000000e+00 : f32
    %424 = vector.broadcast %cst_191 : f32 to vector<32x64xf32>
    %425 = arith.maximumf %423, %424 : vector<32x64xf32>
    %c1_192 = arith.constant 1 : index
    %c0_193 = arith.constant 0 : index
    %c0_194 = arith.constant 0 : index
    %426 = vector.load %arg8[%c1_192, %c0_193, %c0_194] : memref<2x32x64xf32, #tpu.memory_space<vmem>>, vector<1x32x64xf32>
    %427 = vector.shape_cast %426 : vector<1x32x64xf32> to vector<32x64xf32>
    %cst_195 = arith.constant dense<0.000000e+00> : vector<32x32xf32>
    %428 = tpu.matmul %425, %427, %cst_195 {dimension_numbers = #tpu.dot_dimension_numbers<[1], [1], [0], [0], [0, 0, 1, 0], [], []>} : vector<32x64xf32>, vector<32x64xf32>, vector<32x32xf32> -> vector<32x32xf32>
    %429 = vector.broadcast %237 : vector<1x32xf32> to vector<32x32xf32>
    %430 = arith.addf %428, %429 : vector<32x32xf32>
    %431 = arith.addf %418, %430 : vector<32x32xf32>
    %cst_196 = arith.constant dense<0.000000e+00> : vector<32xf32>
    %432 = vector.multi_reduction <add>, %431, %cst_196 [1] : vector<32x32xf32> to vector<32xf32>
    %433 = vector.shape_cast %432 : vector<32xf32> to vector<32x1xf32>
    %cst_197 = arith.constant 3.200000e+01 : f32
    %434 = vector.broadcast %cst_197 : f32 to vector<32x1xf32>
    %435 = arith.divf %433, %434 : vector<32x1xf32>
    %436 = vector.broadcast %435 : vector<32x1xf32> to vector<32x32xf32>
    %437 = arith.subf %431, %436 : vector<32x32xf32>
    %438 = arith.mulf %437, %437 : vector<32x32xf32>
    %cst_198 = arith.constant dense<0.000000e+00> : vector<32xf32>
    %439 = vector.multi_reduction <add>, %438, %cst_198 [1] : vector<32x32xf32> to vector<32xf32>
    %440 = vector.shape_cast %439 : vector<32xf32> to vector<32x1xf32>
    %cst_199 = arith.constant 3.200000e+01 : f32
    %441 = vector.broadcast %cst_199 : f32 to vector<32x1xf32>
    %442 = arith.divf %440, %441 : vector<32x1xf32>
    %443 = vector.broadcast %435 : vector<32x1xf32> to vector<32x32xf32>
    %444 = arith.subf %431, %443 : vector<32x32xf32>
    %cst_200 = arith.constant 9.99999974E-6 : f32
    %445 = vector.broadcast %cst_200 : f32 to vector<32x1xf32>
    %446 = arith.addf %442, %445 : vector<32x1xf32>
    %447 = math.rsqrt %446 : vector<32x1xf32>
    %448 = vector.broadcast %447 : vector<32x1xf32> to vector<32x32xf32>
    %449 = arith.mulf %444, %448 : vector<32x32xf32>
    %450 = vector.broadcast %238 : vector<1x32xf32> to vector<32x32xf32>
    %451 = arith.mulf %449, %450 : vector<32x32xf32>
    %452 = vector.broadcast %239 : vector<1x32xf32> to vector<32x32xf32>
    %453 = arith.addf %451, %452 : vector<32x32xf32>
    %454 = vector.extract_strided_slice %453 {offsets = [0, 0], sizes = [8, 32], strides = [1, 1]} : vector<32x32xf32> to vector<8x32xf32>
    %c0_201 = arith.constant 0 : index
    %c0_202 = arith.constant 0 : index
    %455 = vector.load %arg11[%c0_201, %c0_202] : memref<16x32xf32, #tpu.memory_space<vmem>>, vector<8x32xf32>
    tpu.vector_store %arg11[%c0_201, %c0_202], %454 {strides = array<i32>} : memref<16x32xf32, #tpu.memory_space<vmem>>, vector<8x32xf32>,
    %456 = vector.extract_strided_slice %453 {offsets = [16, 0], sizes = [8, 32], strides = [1, 1]} : vector<32x32xf32> to vector<8x32xf32>
    %c8_203 = arith.constant 8 : index
    %c0_204 = arith.constant 0 : index
    %457 = vector.load %arg11[%c8_203, %c0_204] : memref<16x32xf32, #tpu.memory_space<vmem>>, vector<8x32xf32>
    tpu.vector_store %arg11[%c8_203, %c0_204], %456 {strides = array<i32>} : memref<16x32xf32, #tpu.memory_space<vmem>>, vector<8x32xf32>,
    return
  }
}

</mosaic_0001>

<llo_original>
// kernel: custom_transformer_encoder_v2.1
$region0: #{custom_transformer_encoder_v2.1}
  #allocation0 [shape = 'u32[]', space=smem, size = 0x4, offset = 0x4, fixed_abs, tag = 'smem constant byte address 0x4 - core index']
  #allocation1 [shape = 'u32[144,128]{1,0:T(1,128)}', space=vmem, size = 0x12000, scoped, tag = 'internal scratch']
  #allocation2 [shape = 'f32[32,32]{1,0:T(8,128)}', space=vmem, size = 0x4000, scoped, tag = 'scratch operand']
  #allocation3 [shape = 'f32[32,32]{1,0:T(8,128)}', space=vmem, size = 0x4000, scoped, tag = 'scratch operand']
  %s0 = inlined_call_operand.vmem [shape: f32[32,32], index: 0, kind: input, shape index: {}]
  %s1 = inlined_call_operand.vmem [shape: f32[16,16], index: 1, kind: input, shape index: {}]
  %s2 = inlined_call_operand.vmem [shape: f32[2,32,16], index: 2, kind: input, shape index: {}]
  %s3 = inlined_call_operand.vmem [shape: f32[2,32,32], index: 3, kind: input, shape index: {}]
  %s4 = inlined_call_operand.vmem [shape: f32[2,32,32], index: 4, kind: input, shape index: {}]
  %s5 = inlined_call_operand.vmem [shape: f32[2,32,32], index: 5, kind: input, shape index: {}]
  %s6 = inlined_call_operand.vmem [shape: f32[2,32,32], index: 6, kind: input, shape index: {}]
  %s7 = inlined_call_operand.vmem [shape: f32[2,64,32], index: 7, kind: input, shape index: {}]
  %s8 = inlined_call_operand.vmem [shape: f32[2,32,64], index: 8, kind: input, shape index: {}]
  %s9 = inlined_call_operand.vmem [shape: f32[20,32], index: 9, kind: input, shape index: {}]
  %s10 = inlined_call_operand.vmem [shape: f32[2,64], index: 10, kind: input, shape index: {}]
  %s11 = inlined_call_operand.vmem [shape: f32[16,32], index: 11, kind: output, shape index: {}]
  %s12 = sld [smem:[#allocation0]]
  $region54: #{custom_transformer_encoder_v2.1} parent=0
    _
  %s14 = ssub.s32 1, %s12
  %s15 = scalar_select 0, %s14, %s12
  // Predicated region
  $region2: #{custom_transformer_encoder_v2.1} parent=0 // pred_check
    _
  $region3: #{custom_transformer_encoder_v2.1} parent=0 // pred_check_branch
    %17 = sbr.rel (0) target = $region5
  $region4: #{custom_transformer_encoder_v2.1} parent=0 // pred_region
    _
  $region5: #{custom_transformer_encoder_v2.1} parent=0 // pred_fallthru
    _
  // Predicated region
  $region6: #{custom_transformer_encoder_v2.1} parent=0 // pred_check
    _
  $region7: #{custom_transformer_encoder_v2.1} parent=0 // pred_check_branch
    %19 = sbr.rel (0) target = $region9
  $region8: #{custom_transformer_encoder_v2.1} parent=0 // pred_region
    _
  $region9: #{custom_transformer_encoder_v2.1} parent=0 // pred_fallthru
    _
  // Predicated region
  $region10: #{custom_transformer_encoder_v2.1} parent=0 // pred_check
    _
  $region11: #{custom_transformer_encoder_v2.1} parent=0 // pred_check_branch
    %21 = sbr.rel (0) target = $region13
  $region12: #{custom_transformer_encoder_v2.1} parent=0 // pred_region
    _
  $region13: #{custom_transformer_encoder_v2.1} parent=0 // pred_fallthru
    _
  // Predicated region
  $region14: #{custom_transformer_encoder_v2.1} parent=0 // pred_check
    _
  $region15: #{custom_transformer_encoder_v2.1} parent=0 // pred_check_branch
    %23 = sbr.rel (0) target = $region17
  $region16: #{custom_transformer_encoder_v2.1} parent=0 // pred_region
    _
  $region17: #{custom_transformer_encoder_v2.1} parent=0 // pred_fallthru
    _
  // Predicated region
  $region18: #{custom_transformer_encoder_v2.1} parent=0 // pred_check
    _
  $region19: #{custom_transformer_encoder_v2.1} parent=0 // pred_check_branch
    %25 = sbr.rel (0) target = $region21
  $region20: #{custom_transformer_encoder_v2.1} parent=0 // pred_region
    _
  $region21: #{custom_transformer_encoder_v2.1} parent=0 // pred_fallthru
    _
  // Predicated region
  $region22: #{custom_transformer_encoder_v2.1} parent=0 // pred_check
    _
  $region23: #{custom_transformer_encoder_v2.1} parent=0 // pred_check_branch
    %27 = sbr.rel (0) target = $region25
  $region24: #{custom_transformer_encoder_v2.1} parent=0 // pred_region
    _
  $region25: #{custom_transformer_encoder_v2.1} parent=0 // pred_fallthru
    _
  // Predicated region
  $region26: #{custom_transformer_encoder_v2.1} parent=0 // pred_check
    _
  $region27: #{custom_transformer_encoder_v2.1} parent=0 // pred_check_branch
    %29 = sbr.rel (0) target = $region29
  $region28: #{custom_transformer_encoder_v2.1} parent=0 // pred_region
    _
  $region29: #{custom_transformer_encoder_v2.1} parent=0 // pred_fallthru
    _
  // Predicated region
  $region30: #{custom_transformer_encoder_v2.1} parent=0 // pred_check
    _
  $region31: #{custom_transformer_encoder_v2.1} parent=0 // pred_check_branch
    %31 = sbr.rel (0) target = $region33
  $region32: #{custom_transformer_encoder_v2.1} parent=0 // pred_region
    _
  $region33: #{custom_transformer_encoder_v2.1} parent=0 // pred_fallthru
    _
  // Predicated region
  $region34: #{custom_transformer_encoder_v2.1} parent=0 // pred_check
    _
  $region35: #{custom_transformer_encoder_v2.1} parent=0 // pred_check_branch
    %33 = sbr.rel (0) target = $region37
  $region36: #{custom_transformer_encoder_v2.1} parent=0 // pred_region
    _
  $region37: #{custom_transformer_encoder_v2.1} parent=0 // pred_fallthru
    _
  // Predicated region
  $region38: #{custom_transformer_encoder_v2.1} parent=0 // pred_check
    _
  $region39: #{custom_transformer_encoder_v2.1} parent=0 // pred_check_branch
    %35 = sbr.rel (0) target = $region41
  $region40: #{custom_transformer_encoder_v2.1} parent=0 // pred_region
    _
  $region41: #{custom_transformer_encoder_v2.1} parent=0 // pred_fallthru
    _
  // Predicated region
  $region42: #{custom_transformer_encoder_v2.1} parent=0 // pred_check
    _
  $region43: #{custom_transformer_encoder_v2.1} parent=0 // pred_check_branch
    %37 = sbr.rel (0) target = $region45
  $region44: #{custom_transformer_encoder_v2.1} parent=0 // pred_region
    _
  $region45: #{custom_transformer_encoder_v2.1} parent=0 // pred_fallthru
    _
  %v38 = vld [vmem:[%s0] sm:$0xff]
  %v39 = vld [vmem:[%s0 + $0x8] sm:$0xff]
  %v40 = vld [vmem:[%s0 + $0x10] sm:$0xff]
  %v41 = vld [vmem:[%s0 + $0x18] sm:$0xff]
  %vm42 = vcmask 261120
  %43 = vst.msk [vmem:[#allocation2] sm:$0xff] %vm42, %v38
  %44 = vst.msk [vmem:[#allocation2 + $0x8] sm:$0xff] %vm42, %v39
  %45 = vst.msk [vmem:[#allocation2 + $0x10] sm:$0xff] %vm42, %v40
  %46 = vst.msk [vmem:[#allocation2 + $0x18] sm:$0xff] %vm42, %v41
  %47 = vst.msk [vmem:[#allocation3] sm:$0xff] %vm42, 0.0
  %48 = vst.msk [vmem:[#allocation3 + $0x8] sm:$0xff] %vm42, 0.0
  %49 = vst.msk [vmem:[#allocation3 + $0x10] sm:$0xff] %vm42, 0.0
  %50 = vst.msk [vmem:[#allocation3 + $0x18] sm:$0xff] %vm42, 0.0
  %v51 = vld [vmem:[%s1] sm:$0xff]
  %v52 = vld [vmem:[%s1 + $0x8] sm:$0xff]
  %v53 = vld [vmem:[%s9] sm:$0x1]
  %v54 = vld [vmem:[%s9 + $0x1] sm:$0x1]
  %v55 = vld [vmem:[%s9 + $0x2] sm:$0x1]
  %v56 = vld [vmem:[%s9 + $0x3] sm:$0x1]
  %v57 = vld [vmem:[%s9 + $0x4] sm:$0x1]
  %v58 = vld [vmem:[%s9 + $0x5] sm:$0x1]
  %v59 = vld [vmem:[%s9 + $0x6] sm:$0x1]
  %v60 = vld [vmem:[%s9 + $0x7] sm:$0x1]
  %v61 = vld [vmem:[%s9 + $0x8] sm:$0x1]
  %v62 = vld [vmem:[%s9 + $0x9] sm:$0x1]
  %v63 = vld [vmem:[%s10] sm:$0x1]
  %v64 = vld [vmem:[%s2] sm:$0xff]
  %v65 = vld [vmem:[%s2 + $0x8] sm:$0xff]
  %v66 = vld [vmem:[%s2 + $0x10] sm:$0xff]
  %v67 = vld [vmem:[%s2 + $0x18] sm:$0xff]
  %v68 = vlaneseq
  %v69 = vshrl.u32 %v68, 7
  %v70 = vsub.s32 0, %v69
  %v71 = vrot.slane %v53, %v70
  %vm72 = vcmask 130048
  %v74 = vsel %vm72, %v51, 0
  %v77 = vsel %vm72, %v52, 0
  %v80 = vsel %vm72, %v64, 0
  %v83 = vsel %vm72, %v65, 0
  %v86 = vsel %vm72, %v66, 0
  %v89 = vsel %vm72, %v67, 0
  %91 = vmatprep.subr.mxu0 0.0
  %92 = vmatpush1.xpose.msra.mxu0 %v80
  %93 = vmatprep.subr.mxu0 0.0
  %94 = vmatpush1.xpose.msra.mxu0 %v83
  %95 = vmatprep.subr.mxu0 0.0
  %96 = vmatpush1.xpose.msra.mxu0 %v86
  %97 = vmatprep.subr.mxu0 0.0
  %98 = vmatpush1.xpose.msra.mxu0 %v89
  %99 = vmatprep.subr.mxu0 0.0
  %100 = vmatpush1.xpose.msra.mxu0 0.0
  %101 = vmatprep.subr.mxu0 0.0
  %102 = vmatpush1.xpose.msra.mxu0 0.0
  %103 = vmatprep.subr.mxu0 0.0
  %104 = vmatpush1.xpose.msra.mxu0 0.0
  %105 = vmatprep.subr.mxu0 0.0
  %106 = vmatpush1.xpose.msra.mxu0 0.0
  %107 = vmatprep.subr.mxu0 0.0
  %108 = vmatpush1.xpose.msra.mxu0 0.0
  %109 = vmatprep.subr.mxu0 0.0
  %110 = vmatpush1.xpose.msra.mxu0 0.0
  %111 = vmatprep.subr.mxu0 0.0
  %112 = vmatpush1.xpose.msra.mxu0 0.0
  %113 = vmatprep.subr.mxu0 0.0
  %114 = vmatpush1.xpose.msra.mxu0 0.0
  %115 = vmatprep.subr.mxu0 0.0
  %116 = vmatpush1.xpose.msra.mxu0 0.0
  %117 = vmatprep.subr.mxu0 0.0
  %118 = vmatpush1.xpose.msra.mxu0 0.0
  %119 = vmatprep.subr.mxu0 0.0
  %120 = vmatpush1.xpose.msra.mxu0 0.0
  %121 = vmatprep.subr.mxu0 0.0
  %122 = vmatpush1.xpose.msra.mxu0 0.0
  %123 = vmatprep.subr.mxu0 0.0
  %124 = vmatpush1.xpose.msra.mxu0 0.0
  %125 = vmatprep.subr.mxu0 0.0
  %126 = vmatpush1.xpose.msra.mxu0 0.0
  %127 = vmatprep.subr.mxu0 0.0
  %128 = vmatpush1.xpose.msra.mxu0 0.0
  %129 = vmatprep.subr.mxu0 0.0
  %130 = vmatpush1.xpose.msra.mxu0 0.0
  %131 = vmatprep.subr.mxu0 0.0
  %132 = vmatpush1.xpose.msra.mxu0 0.0
  %133 = vmatprep.subr.mxu0 0.0
  %134 = vmatpush1.xpose.msra.mxu0 0.0
  %135 = vmatprep.subr.mxu0 0.0
  %136 = vmatpush1.xpose.msra.mxu0 0.0
  %137 = vmatprep.subr.mxu0 0.0
  %138 = vmatpush1.xpose.msra.mxu0 0.0
  %139 = vmatprep.subr.mxu0 0.0
  %140 = vmatpush1.xpose.msra.mxu0 0.0
  %141 = vmatprep.subr.mxu0 0.0
  %142 = vmatpush1.xpose.msra.mxu0 0.0
  %143 = vmatprep.subr.mxu0 0.0
  %144 = vmatpush1.xpose.msra.mxu0 0.0
  %145 = vmatprep.subr.mxu0 0.0
  %146 = vmatpush1.xpose.msra.mxu0 0.0
  %147 = vmatprep.subr.mxu0 0.0
  %148 = vmatpush1.xpose.msra.mxu0 0.0
  %149 = vmatprep.subr.mxu0 0.0
  %150 = vmatpush1.xpose.msra.mxu0 0.0
  %151 = vmatprep.subr.mxu0 0.0
  %152 = vmatpush1.xpose.msra.mxu0 0.0
  %153 = vmatprep.subr.mxu0 0.0
  %154 = vmatpush1.xpose.msra.mxu0 0.0
  %155 = vmatprep.mubr.f32.mxu0 0.0
  %156 = vmatmul.mubr.f32.gmra.mrb[0].mxu0 %v74
  %v157 = vpop.f32.mrb[0].mxu0
  %v158 = vadd.f32 %v71, %v157
  %v159 = vpop.f32.mrb[0].mxu0
  %160 = vmatprep.mubr.f32.mxu0 0.0
  %161 = vmatmul.mubr.f32.gmra.mrb[0].mxu0 %v77
  %v162 = vpop.f32.mrb[0].mxu0
  %v163 = vadd.f32 %v71, %v162
  %v164 = vpop.f32.mrb[0].mxu0
  %165 = vdwg.mxu0
  %166 = vst.msk [vmem:[#allocation2 + $0x8] sm:$0xff] %vm42, %v158
  %167 = vst.msk [vmem:[#allocation2 + $0x18] sm:$0xff] %vm42, %v163
  %v168 = vld [vmem:[#allocation2] sm:$0xff]
  %v169 = vld [vmem:[#allocation2 + $0x8] sm:$0xff]
  %v170 = vld [vmem:[#allocation2 + $0x10] sm:$0xff]
  %v171 = vld [vmem:[#allocation2 + $0x18] sm:$0xff]
  %v172 = vld [vmem:[%s3] sm:$0xff]
  %v173 = vld [vmem:[%s3 + $0x8] sm:$0xff]
  %v174 = vld [vmem:[%s3 + $0x10] sm:$0xff]
  %v175 = vld [vmem:[%s3 + $0x18] sm:$0xff]
  %v176 = vlaneseq
  %v177 = vshrl.u32 %v176, 7
  %v178 = vsub.s32 0, %v177
  %v179 = vrot.slane %v54, %v178
  %v181 = vsel %vm42, %v168, 0
  %v184 = vsel %vm42, %v169, 0
  %v187 = vsel %vm42, %v170, 0
  %v190 = vsel %vm42, %v171, 0
  %v193 = vsel %vm42, %v172, 0
  %v196 = vsel %vm42, %v173, 0
  %v199 = vsel %vm42, %v174, 0
  %v202 = vsel %vm42, %v175, 0
  %204 = vmatprep.subr.mxu0 0.0
  %205 = vmatpush1.xpose.msra.mxu0 %v193
  %206 = vmatprep.subr.mxu0 0.0
  %207 = vmatpush1.xpose.msra.mxu0 %v196
  %208 = vmatprep.subr.mxu0 0.0
  %209 = vmatpush1.xpose.msra.mxu0 %v199
  %210 = vmatprep.subr.mxu0 0.0
  %211 = vmatpush1.xpose.msra.mxu0 %v202
  %212 = vmatprep.subr.mxu0 0.0
  %213 = vmatpush1.xpose.msra.mxu0 0.0
  %214 = vmatprep.subr.mxu0 0.0
  %215 = vmatpush1.xpose.msra.mxu0 0.0
  %216 = vmatprep.subr.mxu0 0.0
  %217 = vmatpush1.xpose.msra.mxu0 0.0
  %218 = vmatprep.subr.mxu0 0.0
  %219 = vmatpush1.xpose.msra.mxu0 0.0
  %220 = vmatprep.subr.mxu0 0.0
  %221 = vmatpush1.xpose.msra.mxu0 0.0
  %222 = vmatprep.subr.mxu0 0.0
  %223 = vmatpush1.xpose.msra.mxu0 0.0
  %224 = vmatprep.subr.mxu0 0.0
  %225 = vmatpush1.xpose.msra.mxu0 0.0
  %226 = vmatprep.subr.mxu0 0.0
  %227 = vmatpush1.xpose.msra.mxu0 0.0
  %228 = vmatprep.subr.mxu0 0.0
  %229 = vmatpush1.xpose.msra.mxu0 0.0
  %230 = vmatprep.subr.mxu0 0.0
  %231 = vmatpush1.xpose.msra.mxu0 0.0
  %232 = vmatprep.subr.mxu0 0.0
  %233 = vmatpush1.xpose.msra.mxu0 0.0
  %234 = vmatprep.subr.mxu0 0.0
  %235 = vmatpush1.xpose.msra.mxu0 0.0
  %236 = vmatprep.subr.mxu0 0.0
  %237 = vmatpush1.xpose.msra.mxu0 0.0
  %238 = vmatprep.subr.mxu0 0.0
  %239 = vmatpush1.xpose.msra.mxu0 0.0
  %240 = vmatprep.subr.mxu0 0.0
  %241 = vmatpush1.xpose.msra.mxu0 0.0
  %242 = vmatprep.subr.mxu0 0.0
  %243 = vmatpush1.xpose.msra.mxu0 0.0
  %244 = vmatprep.subr.mxu0 0.0
  %245 = vmatpush1.xpose.msra.mxu0 0.0
  %246 = vmatprep.subr.mxu0 0.0
  %247 = vmatpush1.xpose.msra.mxu0 0.0
  %248 = vmatprep.subr.mxu0 0.0
  %249 = vmatpush1.xpose.msra.mxu0 0.0
  %250 = vmatprep.subr.mxu0 0.0
  %251 = vmatpush1.xpose.msra.mxu0 0.0
  %252 = vmatprep.subr.mxu0 0.0
  %253 = vmatpush1.xpose.msra.mxu0 0.0
  %254 = vmatprep.subr.mxu0 0.0
  %255 = vmatpush1.xpose.msra.mxu0 0.0
  %256 = vmatprep.subr.mxu0 0.0
  %257 = vmatpush1.xpose.msra.mxu0 0.0
  %258 = vmatprep.subr.mxu0 0.0
  %259 = vmatpush1.xpose.msra.mxu0 0.0
  %260 = vmatprep.subr.mxu0 0.0
  %261 = vmatpush1.xpose.msra.mxu0 0.0
  %262 = vmatprep.subr.mxu0 0.0
  %263 = vmatpush1.xpose.msra.mxu0 0.0
  %264 = vmatprep.subr.mxu0 0.0
  %265 = vmatpush1.xpose.msra.mxu0 0.0
  %266 = vmatprep.subr.mxu0 0.0
  %267 = vmatpush1.xpose.msra.mxu0 0.0
  %268 = vmatprep.mubr.f32.mxu0 0.0
  %269 = vmatmul.mubr.f32.gmra.mrb[0].mxu0 %v181
  %v270 = vpop.f32.mrb[0].mxu0
  %v271 = vadd.f32 %v179, %v270
  %v272 = vpop.f32.mrb[0].mxu0
  %273 = vmatprep.mubr.f32.mxu0 0.0
  %274 = vmatmul.mubr.f32.gmra.mrb[0].mxu0 %v184
  %v275 = vpop.f32.mrb[0].mxu0
  %v276 = vadd.f32 %v179, %v275
  %v277 = vpop.f32.mrb[0].mxu0
  %278 = vmatprep.mubr.f32.mxu0 0.0
  %279 = vmatmul.mubr.f32.gmra.mrb[0].mxu0 %v187
  %v280 = vpop.f32.mrb[0].mxu0
  %v281 = vadd.f32 %v179, %v280
  %v282 = vpop.f32.mrb[0].mxu0
  %283 = vmatprep.mubr.f32.mxu0 0.0
  %284 = vmatmul.mubr.f32.gmra.mrb[0].mxu0 %v190
  %v285 = vpop.f32.mrb[0].mxu0
  %v286 = vadd.f32 %v179, %v285
  %v287 = vpop.f32.mrb[0].mxu0
  %288 = vdwg.mxu0
  %v289 = vmul.f32 %v271, 0.35355338
  %v290 = vmul.f32 %v276, 0.35355338
  %v291 = vmul.f32 %v281, 0.35355338
  %v292 = vmul.f32 %v286, 0.35355338
  %v293 = vld [vmem:[%s4] sm:$0xff]
  %v294 = vld [vmem:[%s4 + $0x8] sm:$0xff]
  %v295 = vld [vmem:[%s4 + $0x10] sm:$0xff]
  %v296 = vld [vmem:[%s4 + $0x18] sm:$0xff]
  %v297 = vlaneseq
  %v298 = vshrl.u32 %v297, 7
  %v299 = vsub.s32 0, %v298
  %v300 = vrot.slane %v55, %v299
  %v302 = vsel %vm42, %v293, 0
  %v305 = vsel %vm42, %v294, 0
  %v308 = vsel %vm42, %v295, 0
  %v311 = vsel %vm42, %v296, 0
  %313 = vmatprep.subr.mxu0 0.0
  %314 = vmatpush1.xpose.msra.mxu0 %v302
  %315 = vmatprep.subr.mxu0 0.0
  %316 = vmatpush1.xpose.msra.mxu0 %v305
  %317 = vmatprep.subr.mxu0 0.0
  %318 = vmatpush1.xpose.msra.mxu0 %v308
  %319 = vmatprep.subr.mxu0 0.0
  %320 = vmatpush1.xpose.msra.mxu0 %v311
  %321 = vmatprep.subr.mxu0 0.0
  %322 = vmatpush1.xpose.msra.mxu0 0.0
  %323 = vmatprep.subr.mxu0 0.0
  %324 = vmatpush1.xpose.msra.mxu0 0.0
  %325 = vmatprep.subr.mxu0 0.0
  %326 = vmatpush1.xpose.msra.mxu0 0.0
  %327 = vmatprep.subr.mxu0 0.0
  %328 = vmatpush1.xpose.msra.mxu0 0.0
  %329 = vmatprep.subr.mxu0 0.0
  %330 = vmatpush1.xpose.msra.mxu0 0.0
  %331 = vmatprep.subr.mxu0 0.0
  %332 = vmatpush1.xpose.msra.mxu0 0.0
  %333 = vmatprep.subr.mxu0 0.0
  %334 = vmatpush1.xpose.msra.mxu0 0.0
  %335 = vmatprep.subr.mxu0 0.0
  %336 = vmatpush1.xpose.msra.mxu0 0.0
  %337 = vmatprep.subr.mxu0 0.0
  %338 = vmatpush1.xpose.msra.mxu0 0.0
  %339 = vmatprep.subr.mxu0 0.0
  %340 = vmatpush1.xpose.msra.mxu0 0.0
  %341 = vmatprep.subr.mxu0 0.0
  %342 = vmatpush1.xpose.msra.mxu0 0.0
  %343 = vmatprep.subr.mxu0 0.0
  %344 = vmatpush1.xpose.msra.mxu0 0.0
  %345 = vmatprep.subr.mxu0 0.0
  %346 = vmatpush1.xpose.msra.mxu0 0.0
  %347 = vmatprep.subr.mxu0 0.0
  %348 = vmatpush1.xpose.msra.mxu0 0.0
  %349 = vmatprep.subr.mxu0 0.0
  %350 = vmatpush1.xpose.msra.mxu0 0.0
  %351 = vmatprep.subr.mxu0 0.0
  %352 = vmatpush1.xpose.msra.mxu0 0.0
  %353 = vmatprep.subr.mxu0 0.0
  %354 = vmatpush1.xpose.msra.mxu0 0.0
  %355 = vmatprep.subr.mxu0 0.0
  %356 = vmatpush1.xpose.msra.mxu0 0.0
  %357 = vmatprep.subr.mxu0 0.0
  %358 = vmatpush1.xpose.msra.mxu0 0.0
  %359 = vmatprep.subr.mxu0 0.0
  %360 = vmatpush1.xpose.msra.mxu0 0.0
  %361 = vmatprep.subr.mxu0 0.0
  %362 = vmatpush1.xpose.msra.mxu0 0.0
  %363 = vmatprep.subr.mxu0 0.0
  %364 = vmatpush1.xpose.msra.mxu0 0.0
  %365 = vmatprep.subr.mxu0 0.0
  %366 = vmatpush1.xpose.msra.mxu0 0.0
  %367 = vmatprep.subr.mxu0 0.0
  %368 = vmatpush1.xpose.msra.mxu0 0.0
  %369 = vmatprep.subr.mxu0 0.0
  %370 = vmatpush1.xpose.msra.mxu0 0.0
  %371 = vmatprep.subr.mxu0 0.0
  %372 = vmatpush1.xpose.msra.mxu0 0.0
  %373 = vmatprep.subr.mxu0 0.0
  %374 = vmatpush1.xpose.msra.mxu0 0.0
  %375 = vmatprep.subr.mxu0 0.0
  %376 = vmatpush1.xpose.msra.mxu0 0.0
  %377 = vmatprep.mubr.f32.mxu0 0.0
  %378 = vmatmul.mubr.f32.gmra.mrb[0].mxu0 %v181
  %v379 = vpop.f32.mrb[0].mxu0
  %v380 = vadd.f32 %v300, %v379
  %v381 = vpop.f32.mrb[0].mxu0
  %382 = vmatprep.mubr.f32.mxu0 0.0
  %383 = vmatmul.mubr.f32.gmra.mrb[0].mxu0 %v184
  %v384 = vpop.f32.mrb[0].mxu0
  %v385 = vadd.f32 %v300, %v384
  %v386 = vpop.f32.mrb[0].mxu0
  %387 = vmatprep.mubr.f32.mxu0 0.0
  %388 = vmatmul.mubr.f32.gmra.mrb[0].mxu0 %v187
  %v389 = vpop.f32.mrb[0].mxu0
  %v390 = vadd.f32 %v300, %v389
  %v391 = vpop.f32.mrb[0].mxu0
  %392 = vmatprep.mubr.f32.mxu0 0.0
  %393 = vmatmul.mubr.f32.gmra.mrb[0].mxu0 %v190
  %v394 = vpop.f32.mrb[0].mxu0
  %v395 = vadd.f32 %v300, %v394
  %v396 = vpop.f32.mrb[0].mxu0
  %397 = vdwg.mxu0
  %v398 = vld [vmem:[%s5] sm:$0xff]
  %v399 = vld [vmem:[%s5 + $0x8] sm:$0xff]
  %v400 = vld [vmem:[%s5 + $0x10] sm:$0xff]
  %v401 = vld [vmem:[%s5 + $0x18] sm:$0xff]
  %v402 = vlaneseq
  %v403 = vshrl.u32 %v402, 7
  %v404 = vsub.s32 0, %v403
  %v405 = vrot.slane %v56, %v404
  %v407 = vsel %vm42, %v398, 0
  %v410 = vsel %vm42, %v399, 0
  %v413 = vsel %vm42, %v400, 0
  %v416 = vsel %vm42, %v401, 0
  %418 = vmatprep.subr.mxu0 0.0
  %419 = vmatpush1.xpose.msra.mxu0 %v407
  %420 = vmatprep.subr.mxu0 0.0
  %421 = vmatpush1.xpose.msra.mxu0 %v410
  %422 = vmatprep.subr.mxu0 0.0
  %423 = vmatpush1.xpose.msra.mxu0 %v413
  %424 = vmatprep.subr.mxu0 0.0
  %425 = vmatpush1.xpose.msra.mxu0 %v416
  %426 = vmatprep.subr.mxu0 0.0
  %427 = vmatpush1.xpose.msra.mxu0 0.0
  %428 = vmatprep.subr.mxu0 0.0
  %429 = vmatpush1.xpose.msra.mxu0 0.0
  %430 = vmatprep.subr.mxu0 0.0
  %431 = vmatpush1.xpose.msra.mxu0 0.0
  %432 = vmatprep.subr.mxu0 0.0
  %433 = vmatpush1.xpose.msra.mxu0 0.0
  %434 = vmatprep.subr.mxu0 0.0
  %435 = vmatpush1.xpose.msra.mxu0 0.0
  %436 = vmatprep.subr.mxu0 0.0
  %437 = vmatpush1.xpose.msra.mxu0 0.0
  %438 = vmatprep.subr.mxu0 0.0
  %439 = vmatpush1.xpose.msra.mxu0 0.0
  %440 = vmatprep.subr.mxu0 0.0
  %441 = vmatpush1.xpose.msra.mxu0 0.0
  %442 = vmatprep.subr.mxu0 0.0
  %443 = vmatpush1.xpose.msra.mxu0 0.0
  %444 = vmatprep.subr.mxu0 0.0
  %445 = vmatpush1.xpose.msra.mxu0 0.0
  %446 = vmatprep.subr.mxu0 0.0
  %447 = vmatpush1.xpose.msra.mxu0 0.0
  %448 = vmatprep.subr.mxu0 0.0
  %449 = vmatpush1.xpose.msra.mxu0 0.0
  %450 = vmatprep.subr.mxu0 0.0
  %451 = vmatpush1.xpose.msra.mxu0 0.0
  %452 = vmatprep.subr.mxu0 0.0
  %453 = vmatpush1.xpose.msra.mxu0 0.0
  %454 = vmatprep.subr.mxu0 0.0
  %455 = vmatpush1.xpose.msra.mxu0 0.0
  %456 = vmatprep.subr.mxu0 0.0
  %457 = vmatpush1.xpose.msra.mxu0 0.0
  %458 = vmatprep.subr.mxu0 0.0
  %459 = vmatpush1.xpose.msra.mxu0 0.0
  %460 = vmatprep.subr.mxu0 0.0
  %461 = vmatpush1.xpose.msra.mxu0 0.0
  %462 = vmatprep.subr.mxu0 0.0
  %463 = vmatpush1.xpose.msra.mxu0 0.0
  %464 = vmatprep.subr.mxu0 0.0
  %465 = vmatpush1.xpose.msra.mxu0 0.0
  %466 = vmatprep.subr.mxu0 0.0
  %467 = vmatpush1.xpose.msra.mxu0 0.0
  %468 = vmatprep.subr.mxu0 0.0
  %469 = vmatpush1.xpose.msra.mxu0 0.0
  %470 = vmatprep.subr.mxu0 0.0
  %471 = vmatpush1.xpose.msra.mxu0 0.0
  %472 = vmatprep.subr.mxu0 0.0
  %473 = vmatpush1.xpose.msra.mxu0 0.0
  %474 = vmatprep.subr.mxu0 0.0
  %475 = vmatpush1.xpose.msra.mxu0 0.0
  %476 = vmatprep.subr.mxu0 0.0
  %477 = vmatpush1.xpose.msra.mxu0 0.0
  %478 = vmatprep.subr.mxu0 0.0
  %479 = vmatpush1.xpose.msra.mxu0 0.0
  %480 = vmatprep.subr.mxu0 0.0
  %481 = vmatpush1.xpose.msra.mxu0 0.0
  %482 = vmatprep.mubr.f32.mxu0 0.0
  %483 = vmatmul.mubr.f32.gmra.mrb[0].mxu0 %v181
  %v484 = vpop.f32.mrb[0].mxu0
  %v485 = vadd.f32 %v405, %v484
  %v486 = vpop.f32.mrb[0].mxu0
  %487 = vmatprep.mubr.f32.mxu0 0.0
  %488 = vmatmul.mubr.f32.gmra.mrb[0].mxu0 %v184
  %v489 = vpop.f32.mrb[0].mxu0
  %v490 = vadd.f32 %v405, %v489
  %v491 = vpop.f32.mrb[0].mxu0
  %492 = vmatprep.mubr.f32.mxu0 0.0
  %493 = vmatmul.mubr.f32.gmra.mrb[0].mxu0 %v187
  %v494 = vpop.f32.mrb[0].mxu0
  %v495 = vadd.f32 %v405, %v494
  %v496 = vpop.f32.mrb[0].mxu0
  %497 = vmatprep.mubr.f32.mxu0 0.0
  %498 = vmatmul.mubr.f32.gmra.mrb[0].mxu0 %v190
  %v499 = vpop.f32.mrb[0].mxu0
  %v500 = vadd.f32 %v405, %v499
  %v501 = vpop.f32.mrb[0].mxu0
  %502 = vdwg.mxu0
  %vm503 = vcmask 64512
  %v505 = vsel %vm503, %v289, 0
  %v508 = vsel %vm503, %v290, 0
  %v511 = vsel %vm503, %v380, 0
  %v514 = vsel %vm503, %v385, 0
  %516 = vmatprep.subr.mxu0 0.0
  %517 = vmatpush1.xpose.msra.mxu0 %v511
  %518 = vmatprep.subr.mxu0 0.0
  %519 = vmatpush1.xpose.msra.mxu0 %v514
  %520 = vmatprep.subr.mxu0 0.0
  %521 = vmatpush1.xpose.msra.mxu0 0.0
  %522 = vmatprep.subr.mxu0 0.0
  %523 = vmatpush1.xpose.msra.mxu0 0.0
  %524 = vmatprep.subr.mxu0 0.0
  %525 = vmatpush1.xpose.msra.mxu0 0.0
  %526 = vmatprep.subr.mxu0 0.0
  %527 = vmatpush1.xpose.msra.mxu0 0.0
  %528 = vmatprep.subr.mxu0 0.0
  %529 = vmatpush1.xpose.msra.mxu0 0.0
  %530 = vmatprep.subr.mxu0 0.0
  %531 = vmatpush1.xpose.msra.mxu0 0.0
  %532 = vmatprep.subr.mxu0 0.0
  %533 = vmatpush1.xpose.msra.mxu0 0.0
  %534 = vmatprep.subr.mxu0 0.0
  %535 = vmatpush1.xpose.msra.mxu0 0.0
  %536 = vmatprep.subr.mxu0 0.0
  %537 = vmatpush1.xpose.msra.mxu0 0.0
  %538 = vmatprep.subr.mxu0 0.0
  %539 = vmatpush1.xpose.msra.mxu0 0.0
  %540 = vmatprep.subr.mxu0 0.0
  %541 = vmatpush1.xpose.msra.mxu0 0.0
  %542 = vmatprep.subr.mxu0 0.0
  %543 = vmatpush1.xpose.msra.mxu0 0.0
  %544 = vmatprep.subr.mxu0 0.0
  %545 = vmatpush1.xpose.msra.mxu0 0.0
  %546 = vmatprep.subr.mxu0 0.0
  %547 = vmatpush1.xpose.msra.mxu0 0.0
  %548 = vmatprep.subr.mxu0 0.0
  %549 = vmatpush1.xpose.msra.mxu0 0.0
  %550 = vmatprep.subr.mxu0 0.0
  %551 = vmatpush1.xpose.msra.mxu0 0.0
  %552 = vmatprep.subr.mxu0 0.0
  %553 = vmatpush1.xpose.msra.mxu0 0.0
  %554 = vmatprep.subr.mxu0 0.0
  %555 = vmatpush1.xpose.msra.mxu0 0.0
  %556 = vmatprep.subr.mxu0 0.0
  %557 = vmatpush1.xpose.msra.mxu0 0.0
  %558 = vmatprep.subr.mxu0 0.0
  %559 = vmatpush1.xpose.msra.mxu0 0.0
  %560 = vmatprep.subr.mxu0 0.0
  %561 = vmatpush1.xpose.msra.mxu0 0.0
  %562 = vmatprep.subr.mxu0 0.0
  %563 = vmatpush1.xpose.msra.mxu0 0.0
  %564 = vmatprep.subr.mxu0 0.0
  %565 = vmatpush1.xpose.msra.mxu0 0.0
  %566 = vmatprep.subr.mxu0 0.0
  %567 = vmatpush1.xpose.msra.mxu0 0.0
  %568 = vmatprep.subr.mxu0 0.0
  %569 = vmatpush1.xpose.msra.mxu0 0.0
  %570 = vmatprep.subr.mxu0 0.0
  %571 = vmatpush1.xpose.msra.mxu0 0.0
  %572 = vmatprep.subr.mxu0 0.0
  %573 = vmatpush1.xpose.msra.mxu0 0.0
  %574 = vmatprep.subr.mxu0 0.0
  %575 = vmatpush1.xpose.msra.mxu0 0.0
  %576 = vmatprep.subr.mxu0 0.0
  %577 = vmatpush1.xpose.msra.mxu0 0.0
  %578 = vmatprep.subr.mxu0 0.0
  %579 = vmatpush1.xpose.msra.mxu0 0.0
  %580 = vmatprep.mubr.f32.mxu0 0.0
  %581 = vmatmul.mubr.f32.gmra.mrb[0].mxu0 %v505
  %v582 = vpop.f32.mrb[0].mxu0
  %v583 = vadd.f32 0.0, %v582
  %v584 = vpop.f32.mrb[0].mxu0
  %585 = vmatprep.mubr.f32.mxu0 0.0
  %586 = vmatmul.mubr.f32.gmra.mrb[0].mxu0 %v508
  %v587 = vpop.f32.mrb[0].mxu0
  %v588 = vadd.f32 0.0, %v587
  %v589 = vpop.f32.mrb[0].mxu0
  %590 = vdwg.mxu0
  %vm591 = vcmask 97280
  %v592 = vsel %vm591, %v583, -inf
  %593 = vmax.xlane.f32.xlu0 %v592
  %v594 = vpop.xlane.xlu0 %593
  %vm595 = vcmask 93184
  %v596 = vsel %vm595, %v588, -inf
  %597 = vmax.xlane.f32.xlu0 %v596
  %v598 = vpop.xlane.xlu0 %597
  %v599 = vsub.f32 %v583, %v594
  %v600 = vsub.f32 %v588, %v598
  %v601 = vmul.f32 %v599, 1.442695
  %v602 = vpow.pop %v601
  %v603 = vmul.f32 %v600, 1.442695
  %v604 = vpow.pop %v603
  %v605 = vsel %vm591, %v602, 0.0
  %606 = vadd.xlane.f32.xlu0 %v605
  %v607 = vpop.xlane.xlu0 %606
  %v608 = vsel %vm595, %v604, 0.0
  %609 = vadd.xlane.f32.xlu0 %v608
  %v610 = vpop.xlane.xlu0 %609
  %v611 = vrcp.pop %v607
  %v612 = vmul.f32 %v602, %v611
  %v613 = vrcp.pop %v610
  %v614 = vmul.f32 %v604, %v613
  %v616 = vsel %vm591, %v612, 0
  %v619 = vsel %vm591, %v614, 0
  %vm621 = vcmask 1043456
  %v623 = vsel %vm621, %v490, 0
  %625 = vmatprep.subr.mxu0 0.0
  %626 = vmatpush1.msra.mxu0 %v485
  %627 = vmatprep.subr.mxu0 0.0
  %628 = vmatpush1.msra.mxu0 %v623
  %629 = vmatprep.subr.mxu0 0.0
  %630 = vmatpush1.msra.mxu0 0.0
  %631 = vmatprep.subr.mxu0 0.0
  %632 = vmatpush1.msra.mxu0 0.0
  %633 = vmatprep.subr.mxu0 0.0
  %634 = vmatpush1.msra.mxu0 0.0
  %635 = vmatprep.subr.mxu0 0.0
  %636 = vmatpush1.msra.mxu0 0.0
  %637 = vmatprep.subr.mxu0 0.0
  %638 = vmatpush1.msra.mxu0 0.0
  %639 = vmatprep.subr.mxu0 0.0
  %640 = vmatpush1.msra.mxu0 0.0
  %641 = vmatprep.subr.mxu0 0.0
  %642 = vmatpush1.msra.mxu0 0.0
  %643 = vmatprep.subr.mxu0 0.0
  %644 = vmatpush1.msra.mxu0 0.0
  %645 = vmatprep.subr.mxu0 0.0
  %646 = vmatpush1.msra.mxu0 0.0
  %647 = vmatprep.subr.mxu0 0.0
  %648 = vmatpush1.msra.mxu0 0.0
  %649 = vmatprep.subr.mxu0 0.0
  %650 = vmatpush1.msra.mxu0 0.0
  %651 = vmatprep.subr.mxu0 0.0
  %652 = vmatpush1.msra.mxu0 0.0
  %653 = vmatprep.subr.mxu0 0.0
  %654 = vmatpush1.msra.mxu0 0.0
  %655 = vmatprep.subr.mxu0 0.0
  %656 = vmatpush1.msra.mxu0 0.0
  %657 = vmatprep.subr.mxu0 0.0
  %658 = vmatpush1.msra.mxu0 0.0
  %659 = vmatprep.subr.mxu0 0.0
  %660 = vmatpush1.msra.mxu0 0.0
  %661 = vmatprep.subr.mxu0 0.0
  %662 = vmatpush1.msra.mxu0 0.0
  %663 = vmatprep.subr.mxu0 0.0
  %664 = vmatpush1.msra.mxu0 0.0
  %665 = vmatprep.subr.mxu0 0.0
  %666 = vmatpush1.msra.mxu0 0.0
  %667 = vmatprep.subr.mxu0 0.0
  %668 = vmatpush1.msra.mxu0 0.0
  %669 = vmatprep.subr.mxu0 0.0
  %670 = vmatpush1.msra.mxu0 0.0
  %671 = vmatprep.subr.mxu0 0.0
  %672 = vmatpush1.msra.mxu0 0.0
  %673 = vmatprep.subr.mxu0 0.0
  %674 = vmatpush1.msra.mxu0 0.0
  %675 = vmatprep.subr.mxu0 0.0
  %676 = vmatpush1.msra.mxu0 0.0
  %677 = vmatprep.subr.mxu0 0.0
  %678 = vmatpush1.msra.mxu0 0.0
  %679 = vmatprep.subr.mxu0 0.0
  %680 = vmatpush1.msra.mxu0 0.0
  %681 = vmatprep.subr.mxu0 0.0
  %682 = vmatpush1.msra.mxu0 0.0
  %683 = vmatprep.subr.mxu0 0.0
  %684 = vmatpush1.msra.mxu0 0.0
  %685 = vmatprep.subr.mxu0 0.0
  %686 = vmatpush1.msra.mxu0 0.0
  %687 = vmatprep.subr.mxu0 0.0
  %688 = vmatpush1.msra.mxu0 0.0
  %689 = vmatprep.mubr.f32.mxu0 0.0
  %690 = vmatmul.mubr.f32.gmra.mrb[0].mxu0 %v616
  %v691 = vpop.f32.mrb[0].mxu0
  %v692 = vadd.f32 0.0, %v691
  %v693 = vpop.f32.mrb[0].mxu0
  %694 = vmatprep.mubr.f32.mxu0 0.0
  %695 = vmatmul.mubr.f32.gmra.mrb[0].mxu0 %v619
  %v696 = vpop.f32.mrb[0].mxu0
  %v697 = vadd.f32 0.0, %v696
  %v698 = vpop.f32.mrb[0].mxu0
  %699 = vdwg.mxu0
  %700 = vrot.lane.b32.xlu0 %v289, 120
  %v701 = vpop.permute.xlu0 %700
  %702 = vrot.lane.b32.xlu0 %v290, 120
  %v703 = vpop.permute.xlu0 %702
  %704 = vrot.lane.b32.xlu0 %v380, 120
  %v705 = vpop.permute.xlu0 %704
  %706 = vrot.lane.b32.xlu0 %v385, 120
  %v707 = vpop.permute.xlu0 %706
  %v708 = vsel %vm503, %v701, 0
  %v710 = vsel %vm503, %v703, 0
  %v712 = vsel %vm503, %v705, 0
  %v714 = vsel %vm503, %v707, 0
  %716 = vmatprep.subr.mxu0 0.0
  %717 = vmatpush1.xpose.msra.mxu0 %v712
  %718 = vmatprep.subr.mxu0 0.0
  %719 = vmatpush1.xpose.msra.mxu0 %v714
  %720 = vmatprep.subr.mxu0 0.0
  %721 = vmatpush1.xpose.msra.mxu0 0.0
  %722 = vmatprep.subr.mxu0 0.0
  %723 = vmatpush1.xpose.msra.mxu0 0.0
  %724 = vmatprep.subr.mxu0 0.0
  %725 = vmatpush1.xpose.msra.mxu0 0.0
  %726 = vmatprep.subr.mxu0 0.0
  %727 = vmatpush1.xpose.msra.mxu0 0.0
  %728 = vmatprep.subr.mxu0 0.0
  %729 = vmatpush1.xpose.msra.mxu0 0.0
  %730 = vmatprep.subr.mxu0 0.0
  %731 = vmatpush1.xpose.msra.mxu0 0.0
  %732 = vmatprep.subr.mxu0 0.0
  %733 = vmatpush1.xpose.msra.mxu0 0.0
  %734 = vmatprep.subr.mxu0 0.0
  %735 = vmatpush1.xpose.msra.mxu0 0.0
  %736 = vmatprep.subr.mxu0 0.0
  %737 = vmatpush1.xpose.msra.mxu0 0.0
  %738 = vmatprep.subr.mxu0 0.0
  %739 = vmatpush1.xpose.msra.mxu0 0.0
  %740 = vmatprep.subr.mxu0 0.0
  %741 = vmatpush1.xpose.msra.mxu0 0.0
  %742 = vmatprep.subr.mxu0 0.0
  %743 = vmatpush1.xpose.msra.mxu0 0.0
  %744 = vmatprep.subr.mxu0 0.0
  %745 = vmatpush1.xpose.msra.mxu0 0.0
  %746 = vmatprep.subr.mxu0 0.0
  %747 = vmatpush1.xpose.msra.mxu0 0.0
  %748 = vmatprep.subr.mxu0 0.0
  %749 = vmatpush1.xpose.msra.mxu0 0.0
  %750 = vmatprep.subr.mxu0 0.0
  %751 = vmatpush1.xpose.msra.mxu0 0.0
  %752 = vmatprep.subr.mxu0 0.0
  %753 = vmatpush1.xpose.msra.mxu0 0.0
  %754 = vmatprep.subr.mxu0 0.0
  %755 = vmatpush1.xpose.msra.mxu0 0.0
  %756 = vmatprep.subr.mxu0 0.0
  %757 = vmatpush1.xpose.msra.mxu0 0.0
  %758 = vmatprep.subr.mxu0 0.0
  %759 = vmatpush1.xpose.msra.mxu0 0.0
  %760 = vmatprep.subr.mxu0 0.0
  %761 = vmatpush1.xpose.msra.mxu0 0.0
  %762 = vmatprep.subr.mxu0 0.0
  %763 = vmatpush1.xpose.msra.mxu0 0.0
  %764 = vmatprep.subr.mxu0 0.0
  %765 = vmatpush1.xpose.msra.mxu0 0.0
  %766 = vmatprep.subr.mxu0 0.0
  %767 = vmatpush1.xpose.msra.mxu0 0.0
  %768 = vmatprep.subr.mxu0 0.0
  %769 = vmatpush1.xpose.msra.mxu0 0.0
  %770 = vmatprep.subr.mxu0 0.0
  %771 = vmatpush1.xpose.msra.mxu0 0.0
  %772 = vmatprep.subr.mxu0 0.0
  %773 = vmatpush1.xpose.msra.mxu0 0.0
  %774 = vmatprep.subr.mxu0 0.0
  %775 = vmatpush1.xpose.msra.mxu0 0.0
  %776 = vmatprep.subr.mxu0 0.0
  %777 = vmatpush1.xpose.msra.mxu0 0.0
  %778 = vmatprep.subr.mxu0 0.0
  %779 = vmatpush1.xpose.msra.mxu0 0.0
  %780 = vmatprep.mubr.f32.mxu0 0.0
  %781 = vmatmul.mubr.f32.gmra.mrb[0].mxu0 %v708
  %v782 = vpop.f32.mrb[0].mxu0
  %v783 = vadd.f32 0.0, %v782
  %v784 = vpop.f32.mrb[0].mxu0
  %785 = vmatprep.mubr.f32.mxu0 0.0
  %786 = vmatmul.mubr.f32.gmra.mrb[0].mxu0 %v710
  %v787 = vpop.f32.mrb[0].mxu0
  %v788 = vadd.f32 0.0, %v787
  %v789 = vpop.f32.mrb[0].mxu0
  %790 = vdwg.mxu0
  %v791 = vsel %vm591, %v783, -inf
  %792 = vmax.xlane.f32.xlu0 %v791
  %v793 = vpop.xlane.xlu0 %792
  %v794 = vsel %vm595, %v788, -inf
  %795 = vmax.xlane.f32.xlu0 %v794
  %v796 = vpop.xlane.xlu0 %795
  %v797 = vsub.f32 %v783, %v793
  %v798 = vsub.f32 %v788, %v796
  %v799 = vmul.f32 %v797, 1.442695
  %v800 = vpow.pop %v799
  %v801 = vmul.f32 %v798, 1.442695
  %v802 = vpow.pop %v801
  %v803 = vsel %vm591, %v800, 0.0
  %804 = vadd.xlane.f32.xlu0 %v803
  %v805 = vpop.xlane.xlu0 %804
  %v806 = vsel %vm595, %v802, 0.0
  %807 = vadd.xlane.f32.xlu0 %v806
  %v808 = vpop.xlane.xlu0 %807
  %v809 = vrcp.pop %v805
  %v810 = vmul.f32 %v800, %v809
  %v811 = vrcp.pop %v808
  %v812 = vmul.f32 %v802, %v811
  %814 = vrot.lane.b32.xlu0 %v485, 120
  %v815 = vpop.permute.xlu0 %814
  %816 = vrot.lane.b32.xlu0 %v490, 120
  %v817 = vpop.permute.xlu0 %816
  %v820 = vsel %vm591, %v810, 0
  %v823 = vsel %vm591, %v812, 0
  %v825 = vsel %vm621, %v817, 0
  %827 = vmatprep.subr.mxu0 0.0
  %828 = vmatpush1.msra.mxu0 %v815
  %829 = vmatprep.subr.mxu0 0.0
  %830 = vmatpush1.msra.mxu0 %v825
  %831 = vmatprep.subr.mxu0 0.0
  %832 = vmatpush1.msra.mxu0 0.0
  %833 = vmatprep.subr.mxu0 0.0
  %834 = vmatpush1.msra.mxu0 0.0
  %835 = vmatprep.subr.mxu0 0.0
  %836 = vmatpush1.msra.mxu0 0.0
  %837 = vmatprep.subr.mxu0 0.0
  %838 = vmatpush1.msra.mxu0 0.0
  %839 = vmatprep.subr.mxu0 0.0
  %840 = vmatpush1.msra.mxu0 0.0
  %841 = vmatprep.subr.mxu0 0.0
  %842 = vmatpush1.msra.mxu0 0.0
  %843 = vmatprep.subr.mxu0 0.0
  %844 = vmatpush1.msra.mxu0 0.0
  %845 = vmatprep.subr.mxu0 0.0
  %846 = vmatpush1.msra.mxu0 0.0
  %847 = vmatprep.subr.mxu0 0.0
  %848 = vmatpush1.msra.mxu0 0.0
  %849 = vmatprep.subr.mxu0 0.0
  %850 = vmatpush1.msra.mxu0 0.0
  %851 = vmatprep.subr.mxu0 0.0
  %852 = vmatpush1.msra.mxu0 0.0
  %853 = vmatprep.subr.mxu0 0.0
  %854 = vmatpush1.msra.mxu0 0.0
  %855 = vmatprep.subr.mxu0 0.0
  %856 = vmatpush1.msra.mxu0 0.0
  %857 = vmatprep.subr.mxu0 0.0
  %858 = vmatpush1.msra.mxu0 0.0
  %859 = vmatprep.subr.mxu0 0.0
  %860 = vmatpush1.msra.mxu0 0.0
  %861 = vmatprep.subr.mxu0 0.0
  %862 = vmatpush1.msra.mxu0 0.0
  %863 = vmatprep.subr.mxu0 0.0
  %864 = vmatpush1.msra.mxu0 0.0
  %865 = vmatprep.subr.mxu0 0.0
  %866 = vmatpush1.msra.mxu0 0.0
  %867 = vmatprep.subr.mxu0 0.0
  %868 = vmatpush1.msra.mxu0 0.0
  %869 = vmatprep.subr.mxu0 0.0
  %870 = vmatpush1.msra.mxu0 0.0
  %871 = vmatprep.subr.mxu0 0.0
  %872 = vmatpush1.msra.mxu0 0.0
  %873 = vmatprep.subr.mxu0 0.0
  %874 = vmatpush1.msra.mxu0 0.0
  %875 = vmatprep.subr.mxu0 0.0
  %876 = vmatpush1.msra.mxu0 0.0
  %877 = vmatprep.subr.mxu0 0.0
  %878 = vmatpush1.msra.mxu0 0.0
  %879 = vmatprep.subr.mxu0 0.0
  %880 = vmatpush1.msra.mxu0 0.0
  %881 = vmatprep.subr.mxu0 0.0
  %882 = vmatpush1.msra.mxu0 0.0
  %883 = vmatprep.subr.mxu0 0.0
  %884 = vmatpush1.msra.mxu0 0.0
  %885 = vmatprep.subr.mxu0 0.0
  %886 = vmatpush1.msra.mxu0 0.0
  %887 = vmatprep.subr.mxu0 0.0
  %888 = vmatpush1.msra.mxu0 0.0
  %889 = vmatprep.subr.mxu0 0.0
  %890 = vmatpush1.msra.mxu0 0.0
  %891 = vmatprep.mubr.f32.mxu0 0.0
  %892 = vmatmul.mubr.f32.gmra.mrb[0].mxu0 %v820
  %v893 = vpop.f32.mrb[0].mxu0
  %v894 = vadd.f32 0.0, %v893
  %v895 = vpop.f32.mrb[0].mxu0
  %896 = vmatprep.mubr.f32.mxu0 0.0
  %897 = vmatmul.mubr.f32.gmra.mrb[0].mxu0 %v823
  %v898 = vpop.f32.mrb[0].mxu0
  %v899 = vadd.f32 0.0, %v898
  %v900 = vpop.f32.mrb[0].mxu0
  %901 = vdwg.mxu0
  %902 = vrot.lane.b32.xlu0 %v289, 112
  %v903 = vpop.permute.xlu0 %902
  %904 = vrot.lane.b32.xlu0 %v290, 112
  %v905 = vpop.permute.xlu0 %904
  %906 = vrot.lane.b32.xlu0 %v380, 112
  %v907 = vpop.permute.xlu0 %906
  %908 = vrot.lane.b32.xlu0 %v385, 112
  %v909 = vpop.permute.xlu0 %908
  %v910 = vsel %vm503, %v903, 0
  %v912 = vsel %vm503, %v905, 0
  %v914 = vsel %vm503, %v907, 0
  %v916 = vsel %vm503, %v909, 0
  %918 = vmatprep.subr.mxu0 0.0
  %919 = vmatpush1.xpose.msra.mxu0 %v914
  %920 = vmatprep.subr.mxu0 0.0
  %921 = vmatpush1.xpose.msra.mxu0 %v916
  %922 = vmatprep.subr.mxu0 0.0
  %923 = vmatpush1.xpose.msra.mxu0 0.0
  %924 = vmatprep.subr.mxu0 0.0
  %925 = vmatpush1.xpose.msra.mxu0 0.0
  %926 = vmatprep.subr.mxu0 0.0
  %927 = vmatpush1.xpose.msra.mxu0 0.0
  %928 = vmatprep.subr.mxu0 0.0
  %929 = vmatpush1.xpose.msra.mxu0 0.0
  %930 = vmatprep.subr.mxu0 0.0
  %931 = vmatpush1.xpose.msra.mxu0 0.0
  %932 = vmatprep.subr.mxu0 0.0
  %933 = vmatpush1.xpose.msra.mxu0 0.0
  %934 = vmatprep.subr.mxu0 0.0
  %935 = vmatpush1.xpose.msra.mxu0 0.0
  %936 = vmatprep.subr.mxu0 0.0
  %937 = vmatpush1.xpose.msra.mxu0 0.0
  %938 = vmatprep.subr.mxu0 0.0
  %939 = vmatpush1.xpose.msra.mxu0 0.0
  %940 = vmatprep.subr.mxu0 0.0
  %941 = vmatpush1.xpose.msra.mxu0 0.0
  %942 = vmatprep.subr.mxu0 0.0
  %943 = vmatpush1.xpose.msra.mxu0 0.0
  %944 = vmatprep.subr.mxu0 0.0
  %945 = vmatpush1.xpose.msra.mxu0 0.0
  %946 = vmatprep.subr.mxu0 0.0
  %947 = vmatpush1.xpose.msra.mxu0 0.0
  %948 = vmatprep.subr.mxu0 0.0
  %949 = vmatpush1.xpose.msra.mxu0 0.0
  %950 = vmatprep.subr.mxu0 0.0
  %951 = vmatpush1.xpose.msra.mxu0 0.0
  %952 = vmatprep.subr.mxu0 0.0
  %953 = vmatpush1.xpose.msra.mxu0 0.0
  %954 = vmatprep.subr.mxu0 0.0
  %955 = vmatpush1.xpose.msra.mxu0 0.0
  %956 = vmatprep.subr.mxu0 0.0
  %957 = vmatpush1.xpose.msra.mxu0 0.0
  %958 = vmatprep.subr.mxu0 0.0
  %959 = vmatpush1.xpose.msra.mxu0 0.0
  %960 = vmatprep.subr.mxu0 0.0
  %961 = vmatpush1.xpose.msra.mxu0 0.0
  %962 = vmatprep.subr.mxu0 0.0
  %963 = vmatpush1.xpose.msra.mxu0 0.0
  %964 = vmatprep.subr.mxu0 0.0
  %965 = vmatpush1.xpose.msra.mxu0 0.0
  %966 = vmatprep.subr.mxu0 0.0
  %967 = vmatpush1.xpose.msra.mxu0 0.0
  %968 = vmatprep.subr.mxu0 0.0
  %969 = vmatpush1.xpose.msra.mxu0 0.0
  %970 = vmatprep.subr.mxu0 0.0
  %971 = vmatpush1.xpose.msra.mxu0 0.0
  %972 = vmatprep.subr.mxu0 0.0
  %973 = vmatpush1.xpose.msra.mxu0 0.0
  %974 = vmatprep.subr.mxu0 0.0
  %975 = vmatpush1.xpose.msra.mxu0 0.0
  %976 = vmatprep.subr.mxu0 0.0
  %977 = vmatpush1.xpose.msra.mxu0 0.0
  %978 = vmatprep.subr.mxu0 0.0
  %979 = vmatpush1.xpose.msra.mxu0 0.0
  %980 = vmatprep.subr.mxu0 0.0
  %981 = vmatpush1.xpose.msra.mxu0 0.0
  %982 = vmatprep.mubr.f32.mxu0 0.0
  %983 = vmatmul.mubr.f32.gmra.mrb[0].mxu0 %v910
  %v984 = vpop.f32.mrb[0].mxu0
  %v985 = vadd.f32 0.0, %v984
  %v986 = vpop.f32.mrb[0].mxu0
  %987 = vmatprep.mubr.f32.mxu0 0.0
  %988 = vmatmul.mubr.f32.gmra.mrb[0].mxu0 %v912
  %v989 = vpop.f32.mrb[0].mxu0
  %v990 = vadd.f32 0.0, %v989
  %v991 = vpop.f32.mrb[0].mxu0
  %992 = vdwg.mxu0
  %v993 = vsel %vm591, %v985, -inf
  %994 = vmax.xlane.f32.xlu0 %v993
  %v995 = vpop.xlane.xlu0 %994
  %v996 = vsel %vm595, %v990, -inf
  %997 = vmax.xlane.f32.xlu0 %v996
  %v998 = vpop.xlane.xlu0 %997
  %v999 = vsub.f32 %v985, %v995
  %v1000 = vsub.f32 %v990, %v998
  %v1001 = vmul.f32 %v999, 1.442695
  %v1002 = vpow.pop %v1001
  %v1003 = vmul.f32 %v1000, 1.442695
  %v1004 = vpow.pop %v1003
  %v1005 = vsel %vm591, %v1002, 0.0
  %1006 = vadd.xlane.f32.xlu0 %v1005
  %v1007 = vpop.xlane.xlu0 %1006
  %v1008 = vsel %vm595, %v1004, 0.0
  %1009 = vadd.xlane.f32.xlu0 %v1008
  %v1010 = vpop.xlane.xlu0 %1009
  %v1011 = vrcp.pop %v1007
  %v1012 = vmul.f32 %v1002, %v1011
  %v1013 = vrcp.pop %v1010
  %v1014 = vmul.f32 %v1004, %v1013
  %1015 = vrot.lane.b32.xlu0 %v485, 112
  %v1016 = vpop.permute.xlu0 %1015
  %1017 = vrot.lane.b32.xlu0 %v490, 112
  %v1018 = vpop.permute.xlu0 %1017
  %v1021 = vsel %vm591, %v1012, 0
  %v1024 = vsel %vm591, %v1014, 0
  %v1026 = vsel %vm621, %v1018, 0
  %1028 = vmatprep.subr.mxu0 0.0
  %1029 = vmatpush1.msra.mxu0 %v1016
  %1030 = vmatprep.subr.mxu0 0.0
  %1031 = vmatpush1.msra.mxu0 %v1026
  %1032 = vmatprep.subr.mxu0 0.0
  %1033 = vmatpush1.msra.mxu0 0.0
  %1034 = vmatprep.subr.mxu0 0.0
  %1035 = vmatpush1.msra.mxu0 0.0
  %1036 = vmatprep.subr.mxu0 0.0
  %1037 = vmatpush1.msra.mxu0 0.0
  %1038 = vmatprep.subr.mxu0 0.0
  %1039 = vmatpush1.msra.mxu0 0.0
  %1040 = vmatprep.subr.mxu0 0.0
  %1041 = vmatpush1.msra.mxu0 0.0
  %1042 = vmatprep.subr.mxu0 0.0
  %1043 = vmatpush1.msra.mxu0 0.0
  %1044 = vmatprep.subr.mxu0 0.0
  %1045 = vmatpush1.msra.mxu0 0.0
  %1046 = vmatprep.subr.mxu0 0.0
  %1047 = vmatpush1.msra.mxu0 0.0
  %1048 = vmatprep.subr.mxu0 0.0
  %1049 = vmatpush1.msra.mxu0 0.0
  %1050 = vmatprep.subr.mxu0 0.0
  %1051 = vmatpush1.msra.mxu0 0.0
  %1052 = vmatprep.subr.mxu0 0.0
  %1053 = vmatpush1.msra.mxu0 0.0
  %1054 = vmatprep.subr.mxu0 0.0
  %1055 = vmatpush1.msra.mxu0 0.0
  %1056 = vmatprep.subr.mxu0 0.0
  %1057 = vmatpush1.msra.mxu0 0.0
  %1058 = vmatprep.subr.mxu0 0.0
  %1059 = vmatpush1.msra.mxu0 0.0
  %1060 = vmatprep.subr.mxu0 0.0
  %1061 = vmatpush1.msra.mxu0 0.0
  %1062 = vmatprep.subr.mxu0 0.0
  %1063 = vmatpush1.msra.mxu0 0.0
  %1064 = vmatprep.subr.mxu0 0.0
  %1065 = vmatpush1.msra.mxu0 0.0
  %1066 = vmatprep.subr.mxu0 0.0
  %1067 = vmatpush1.msra.mxu0 0.0
  %1068 = vmatprep.subr.mxu0 0.0
  %1069 = vmatpush1.msra.mxu0 0.0
  %1070 = vmatprep.subr.mxu0 0.0
  %1071 = vmatpush1.msra.mxu0 0.0
  %1072 = vmatprep.subr.mxu0 0.0
  %1073 = vmatpush1.msra.mxu0 0.0
  %1074 = vmatprep.subr.mxu0 0.0
  %1075 = vmatpush1.msra.mxu0 0.0
  %1076 = vmatprep.subr.mxu0 0.0
  %1077 = vmatpush1.msra.mxu0 0.0
  %1078 = vmatprep.subr.mxu0 0.0
  %1079 = vmatpush1.msra.mxu0 0.0
  %1080 = vmatprep.subr.mxu0 0.0
  %1081 = vmatpush1.msra.mxu0 0.0
  %1082 = vmatprep.subr.mxu0 0.0
  %1083 = vmatpush1.msra.mxu0 0.0
  %1084 = vmatprep.subr.mxu0 0.0
  %1085 = vmatpush1.msra.mxu0 0.0
  %1086 = vmatprep.subr.mxu0 0.0
  %1087 = vmatpush1.msra.mxu0 0.0
  %1088 = vmatprep.subr.mxu0 0.0
  %1089 = vmatpush1.msra.mxu0 0.0
  %1090 = vmatprep.subr.mxu0 0.0
  %1091 = vmatpush1.msra.mxu0 0.0
  %1092 = vmatprep.mubr.f32.mxu0 0.0
  %1093 = vmatmul.mubr.f32.gmra.mrb[0].mxu0 %v1021
  %v1094 = vpop.f32.mrb[0].mxu0
  %v1095 = vadd.f32 0.0, %v1094
  %v1096 = vpop.f32.mrb[0].mxu0
  %1097 = vmatprep.mubr.f32.mxu0 0.0
  %1098 = vmatmul.mubr.f32.gmra.mrb[0].mxu0 %v1024
  %v1099 = vpop.f32.mrb[0].mxu0
  %v1100 = vadd.f32 0.0, %v1099
  %v1101 = vpop.f32.mrb[0].mxu0
  %1102 = vdwg.mxu0
  %1103 = vrot.lane.b32.xlu0 %v289, 104
  %v1104 = vpop.permute.xlu0 %1103
  %1105 = vrot.lane.b32.xlu0 %v290, 104
  %v1106 = vpop.permute.xlu0 %1105
  %1107 = vrot.lane.b32.xlu0 %v380, 104
  %v1108 = vpop.permute.xlu0 %1107
  %1109 = vrot.lane.b32.xlu0 %v385, 104
  %v1110 = vpop.permute.xlu0 %1109
  %v1111 = vsel %vm503, %v1104, 0
  %v1113 = vsel %vm503, %v1106, 0
  %v1115 = vsel %vm503, %v1108, 0
  %v1117 = vsel %vm503, %v1110, 0
  %1119 = vmatprep.subr.mxu0 0.0
  %1120 = vmatpush1.xpose.msra.mxu0 %v1115
  %1121 = vmatprep.subr.mxu0 0.0
  %1122 = vmatpush1.xpose.msra.mxu0 %v1117
  %1123 = vmatprep.subr.mxu0 0.0
  %1124 = vmatpush1.xpose.msra.mxu0 0.0
  %1125 = vmatprep.subr.mxu0 0.0
  %1126 = vmatpush1.xpose.msra.mxu0 0.0
  %1127 = vmatprep.subr.mxu0 0.0
  %1128 = vmatpush1.xpose.msra.mxu0 0.0
  %1129 = vmatprep.subr.mxu0 0.0
  %1130 = vmatpush1.xpose.msra.mxu0 0.0
  %1131 = vmatprep.subr.mxu0 0.0
  %1132 = vmatpush1.xpose.msra.mxu0 0.0
  %1133 = vmatprep.subr.mxu0 0.0
  %1134 = vmatpush1.xpose.msra.mxu0 0.0
  %1135 = vmatprep.subr.mxu0 0.0
  %1136 = vmatpush1.xpose.msra.mxu0 0.0
  %1137 = vmatprep.subr.mxu0 0.0
  %1138 = vmatpush1.xpose.msra.mxu0 0.0
  %1139 = vmatprep.subr.mxu0 0.0
  %1140 = vmatpush1.xpose.msra.mxu0 0.0
  %1141 = vmatprep.subr.mxu0 0.0
  %1142 = vmatpush1.xpose.msra.mxu0 0.0
  %1143 = vmatprep.subr.mxu0 0.0
  %1144 = vmatpush1.xpose.msra.mxu0 0.0
  %1145 = vmatprep.subr.mxu0 0.0
  %1146 = vmatpush1.xpose.msra.mxu0 0.0
  %1147 = vmatprep.subr.mxu0 0.0
  %1148 = vmatpush1.xpose.msra.mxu0 0.0
  %1149 = vmatprep.subr.mxu0 0.0
  %1150 = vmatpush1.xpose.msra.mxu0 0.0
  %1151 = vmatprep.subr.mxu0 0.0
  %1152 = vmatpush1.xpose.msra.mxu0 0.0
  %1153 = vmatprep.subr.mxu0 0.0
  %1154 = vmatpush1.xpose.msra.mxu0 0.0
  %1155 = vmatprep.subr.mxu0 0.0
  %1156 = vmatpush1.xpose.msra.mxu0 0.0
  %1157 = vmatprep.subr.mxu0 0.0
  %1158 = vmatpush1.xpose.msra.mxu0 0.0
  %1159 = vmatprep.subr.mxu0 0.0
  %1160 = vmatpush1.xpose.msra.mxu0 0.0
  %1161 = vmatprep.subr.mxu0 0.0
  %1162 = vmatpush1.xpose.msra.mxu0 0.0
  %1163 = vmatprep.subr.mxu0 0.0
  %1164 = vmatpush1.xpose.msra.mxu0 0.0
  %1165 = vmatprep.subr.mxu0 0.0
  %1166 = vmatpush1.xpose.msra.mxu0 0.0
  %1167 = vmatprep.subr.mxu0 0.0
  %1168 = vmatpush1.xpose.msra.mxu0 0.0
  %1169 = vmatprep.subr.mxu0 0.0
  %1170 = vmatpush1.xpose.msra.mxu0 0.0
  %1171 = vmatprep.subr.mxu0 0.0
  %1172 = vmatpush1.xpose.msra.mxu0 0.0
  %1173 = vmatprep.subr.mxu0 0.0
  %1174 = vmatpush1.xpose.msra.mxu0 0.0
  %1175 = vmatprep.subr.mxu0 0.0
  %1176 = vmatpush1.xpose.msra.mxu0 0.0
  %1177 = vmatprep.subr.mxu0 0.0
  %1178 = vmatpush1.xpose.msra.mxu0 0.0
  %1179 = vmatprep.subr.mxu0 0.0
  %1180 = vmatpush1.xpose.msra.mxu0 0.0
  %1181 = vmatprep.subr.mxu0 0.0
  %1182 = vmatpush1.xpose.msra.mxu0 0.0
  %1183 = vmatprep.mubr.f32.mxu0 0.0
  %1184 = vmatmul.mubr.f32.gmra.mrb[0].mxu0 %v1111
  %v1185 = vpop.f32.mrb[0].mxu0
  %v1186 = vadd.f32 0.0, %v1185
  %v1187 = vpop.f32.mrb[0].mxu0
  %1188 = vmatprep.mubr.f32.mxu0 0.0
  %1189 = vmatmul.mubr.f32.gmra.mrb[0].mxu0 %v1113
  %v1190 = vpop.f32.mrb[0].mxu0
  %v1191 = vadd.f32 0.0, %v1190
  %v1192 = vpop.f32.mrb[0].mxu0
  %1193 = vdwg.mxu0
  %v1194 = vsel %vm591, %v1186, -inf
  %1195 = vmax.xlane.f32.xlu0 %v1194
  %v1196 = vpop.xlane.xlu0 %1195
  %v1197 = vsel %vm595, %v1191, -inf
  %1198 = vmax.xlane.f32.xlu0 %v1197
  %v1199 = vpop.xlane.xlu0 %1198
  %v1200 = vsub.f32 %v1186, %v1196
  %v1201 = vsub.f32 %v1191, %v1199
  %v1202 = vmul.f32 %v1200, 1.442695
  %v1203 = vpow.pop %v1202
  %v1204 = vmul.f32 %v1201, 1.442695
  %v1205 = vpow.pop %v1204
  %v1206 = vsel %vm591, %v1203, 0.0
  %1207 = vadd.xlane.f32.xlu0 %v1206
  %v1208 = vpop.xlane.xlu0 %1207
  %v1209 = vsel %vm595, %v1205, 0.0
  %1210 = vadd.xlane.f32.xlu0 %v1209
  %v1211 = vpop.xlane.xlu0 %1210
  %v1212 = vrcp.pop %v1208
  %v1213 = vmul.f32 %v1203, %v1212
  %v1214 = vrcp.pop %v1211
  %v1215 = vmul.f32 %v1205, %v1214
  %1216 = vrot.lane.b32.xlu0 %v485, 104
  %v1217 = vpop.permute.xlu0 %1216
  %1218 = vrot.lane.b32.xlu0 %v490, 104
  %v1219 = vpop.permute.xlu0 %1218
  %v1222 = vsel %vm591, %v1213, 0
  %v1225 = vsel %vm591, %v1215, 0
  %v1227 = vsel %vm621, %v1219, 0
  %1229 = vmatprep.subr.mxu0 0.0
  %1230 = vmatpush1.msra.mxu0 %v1217
  %1231 = vmatprep.subr.mxu0 0.0
  %1232 = vmatpush1.msra.mxu0 %v1227
  %1233 = vmatprep.subr.mxu0 0.0
  %1234 = vmatpush1.msra.mxu0 0.0
  %1235 = vmatprep.subr.mxu0 0.0
  %1236 = vmatpush1.msra.mxu0 0.0
  %1237 = vmatprep.subr.mxu0 0.0
  %1238 = vmatpush1.msra.mxu0 0.0
  %1239 = vmatprep.subr.mxu0 0.0
  %1240 = vmatpush1.msra.mxu0 0.0
  %1241 = vmatprep.subr.mxu0 0.0
  %1242 = vmatpush1.msra.mxu0 0.0
  %1243 = vmatprep.subr.mxu0 0.0
  %1244 = vmatpush1.msra.mxu0 0.0
  %1245 = vmatprep.subr.mxu0 0.0
  %1246 = vmatpush1.msra.mxu0 0.0
  %1247 = vmatprep.subr.mxu0 0.0
  %1248 = vmatpush1.msra.mxu0 0.0
  %1249 = vmatprep.subr.mxu0 0.0
  %1250 = vmatpush1.msra.mxu0 0.0
  %1251 = vmatprep.subr.mxu0 0.0
  %1252 = vmatpush1.msra.mxu0 0.0
  %1253 = vmatprep.subr.mxu0 0.0
  %1254 = vmatpush1.msra.mxu0 0.0
  %1255 = vmatprep.subr.mxu0 0.0
  %1256 = vmatpush1.msra.mxu0 0.0
  %1257 = vmatprep.subr.mxu0 0.0
  %1258 = vmatpush1.msra.mxu0 0.0
  %1259 = vmatprep.subr.mxu0 0.0
  %1260 = vmatpush1.msra.mxu0 0.0
  %1261 = vmatprep.subr.mxu0 0.0
  %1262 = vmatpush1.msra.mxu0 0.0
  %1263 = vmatprep.subr.mxu0 0.0
  %1264 = vmatpush1.msra.mxu0 0.0
  %1265 = vmatprep.subr.mxu0 0.0
  %1266 = vmatpush1.msra.mxu0 0.0
  %1267 = vmatprep.subr.mxu0 0.0
  %1268 = vmatpush1.msra.mxu0 0.0
  %1269 = vmatprep.subr.mxu0 0.0
  %1270 = vmatpush1.msra.mxu0 0.0
  %1271 = vmatprep.subr.mxu0 0.0
  %1272 = vmatpush1.msra.mxu0 0.0
  %1273 = vmatprep.subr.mxu0 0.0
  %1274 = vmatpush1.msra.mxu0 0.0
  %1275 = vmatprep.subr.mxu0 0.0
  %1276 = vmatpush1.msra.mxu0 0.0
  %1277 = vmatprep.subr.mxu0 0.0
  %1278 = vmatpush1.msra.mxu0 0.0
  %1279 = vmatprep.subr.mxu0 0.0
  %1280 = vmatpush1.msra.mxu0 0.0
  %1281 = vmatprep.subr.mxu0 0.0
  %1282 = vmatpush1.msra.mxu0 0.0
  %1283 = vmatprep.subr.mxu0 0.0
  %1284 = vmatpush1.msra.mxu0 0.0
  %1285 = vmatprep.subr.mxu0 0.0
  %1286 = vmatpush1.msra.mxu0 0.0
  %1287 = vmatprep.subr.mxu0 0.0
  %1288 = vmatpush1.msra.mxu0 0.0
  %1289 = vmatprep.subr.mxu0 0.0
  %1290 = vmatpush1.msra.mxu0 0.0
  %1291 = vmatprep.subr.mxu0 0.0
  %1292 = vmatpush1.msra.mxu0 0.0
  %1293 = vmatprep.mubr.f32.mxu0 0.0
  %1294 = vmatmul.mubr.f32.gmra.mrb[0].mxu0 %v1222
  %v1295 = vpop.f32.mrb[0].mxu0
  %v1296 = vadd.f32 0.0, %v1295
  %v1297 = vpop.f32.mrb[0].mxu0
  %1298 = vmatprep.mubr.f32.mxu0 0.0
  %1299 = vmatmul.mubr.f32.gmra.mrb[0].mxu0 %v1225
  %v1300 = vpop.f32.mrb[0].mxu0
  %v1301 = vadd.f32 0.0, %v1300
  %v1302 = vpop.f32.mrb[0].mxu0
  %1303 = vdwg.mxu0
  %1306 = vrot.lane.b32.xlu0 %v894, 8
  %v1307 = vpop.permute.xlu0 %1306
  %1308 = vrot.lane.b32.xlu0 %v899, 8
  %v1309 = vpop.permute.xlu0 %1308
  %1314 = vrot.lane.b32.xlu0 %v1095, 16
  %v1315 = vpop.permute.xlu0 %1314
  %1316 = vrot.lane.b32.xlu0 %v1100, 16
  %v1317 = vpop.permute.xlu0 %1316
  %1322 = vrot.lane.b32.xlu0 %v1296, 24
  %v1323 = vpop.permute.xlu0 %1322
  %1324 = vrot.lane.b32.xlu0 %v1301, 24
  %v1325 = vpop.permute.xlu0 %1324
  %v1328 = vsel %vm503, %v692, %v1307
  %v1329 = vsel %vm503, %v697, %v1309
  %v1330 = vsel %vm72, %v1328, %v1315
  %v1331 = vsel %vm72, %v1329, %v1317
  %vm1332 = vcmask 195584
  %v1333 = vsel %vm1332, %v1330, %v1323
  %v1334 = vsel %vm1332, %v1331, %v1325
  %1335 = vst.msk [vmem:[#allocation3] sm:$0xff] %vm42, %v1333
  %vm1336 = vcmask 257024
  %1337 = vst.msk [vmem:[#allocation3 + $0x8] sm:$0xf] %vm1336, %v1334
  %v1339 = vsel %vm503, %v291, 0
  %v1342 = vsel %vm503, %v292, 0
  %v1345 = vsel %vm503, %v390, 0
  %v1348 = vsel %vm503, %v395, 0
  %1350 = vmatprep.subr.mxu0 0.0
  %1351 = vmatpush1.xpose.msra.mxu0 %v1345
  %1352 = vmatprep.subr.mxu0 0.0
  %1353 = vmatpush1.xpose.msra.mxu0 %v1348
  %1354 = vmatprep.subr.mxu0 0.0
  %1355 = vmatpush1.xpose.msra.mxu0 0.0
  %1356 = vmatprep.subr.mxu0 0.0
  %1357 = vmatpush1.xpose.msra.mxu0 0.0
  %1358 = vmatprep.subr.mxu0 0.0
  %1359 = vmatpush1.xpose.msra.mxu0 0.0
  %1360 = vmatprep.subr.mxu0 0.0
  %1361 = vmatpush1.xpose.msra.mxu0 0.0
  %1362 = vmatprep.subr.mxu0 0.0
  %1363 = vmatpush1.xpose.msra.mxu0 0.0
  %1364 = vmatprep.subr.mxu0 0.0
  %1365 = vmatpush1.xpose.msra.mxu0 0.0
  %1366 = vmatprep.subr.mxu0 0.0
  %1367 = vmatpush1.xpose.msra.mxu0 0.0
  %1368 = vmatprep.subr.mxu0 0.0
  %1369 = vmatpush1.xpose.msra.mxu0 0.0
  %1370 = vmatprep.subr.mxu0 0.0
  %1371 = vmatpush1.xpose.msra.mxu0 0.0
  %1372 = vmatprep.subr.mxu0 0.0
  %1373 = vmatpush1.xpose.msra.mxu0 0.0
  %1374 = vmatprep.subr.mxu0 0.0
  %1375 = vmatpush1.xpose.msra.mxu0 0.0
  %1376 = vmatprep.subr.mxu0 0.0
  %1377 = vmatpush1.xpose.msra.mxu0 0.0
  %1378 = vmatprep.subr.mxu0 0.0
  %1379 = vmatpush1.xpose.msra.mxu0 0.0
  %1380 = vmatprep.subr.mxu0 0.0
  %1381 = vmatpush1.xpose.msra.mxu0 0.0
  %1382 = vmatprep.subr.mxu0 0.0
  %1383 = vmatpush1.xpose.msra.mxu0 0.0
  %1384 = vmatprep.subr.mxu0 0.0
  %1385 = vmatpush1.xpose.msra.mxu0 0.0
  %1386 = vmatprep.subr.mxu0 0.0
  %1387 = vmatpush1.xpose.msra.mxu0 0.0
  %1388 = vmatprep.subr.mxu0 0.0
  %1389 = vmatpush1.xpose.msra.mxu0 0.0
  %1390 = vmatprep.subr.mxu0 0.0
  %1391 = vmatpush1.xpose.msra.mxu0 0.0
  %1392 = vmatprep.subr.mxu0 0.0
  %1393 = vmatpush1.xpose.msra.mxu0 0.0
  %1394 = vmatprep.subr.mxu0 0.0
  %1395 = vmatpush1.xpose.msra.mxu0 0.0
  %1396 = vmatprep.subr.mxu0 0.0
  %1397 = vmatpush1.xpose.msra.mxu0 0.0
  %1398 = vmatprep.subr.mxu0 0.0
  %1399 = vmatpush1.xpose.msra.mxu0 0.0
  %1400 = vmatprep.subr.mxu0 0.0
  %1401 = vmatpush1.xpose.msra.mxu0 0.0
  %1402 = vmatprep.subr.mxu0 0.0
  %1403 = vmatpush1.xpose.msra.mxu0 0.0
  %1404 = vmatprep.subr.mxu0 0.0
  %1405 = vmatpush1.xpose.msra.mxu0 0.0
  %1406 = vmatprep.subr.mxu0 0.0
  %1407 = vmatpush1.xpose.msra.mxu0 0.0
  %1408 = vmatprep.subr.mxu0 0.0
  %1409 = vmatpush1.xpose.msra.mxu0 0.0
  %1410 = vmatprep.subr.mxu0 0.0
  %1411 = vmatpush1.xpose.msra.mxu0 0.0
  %1412 = vmatprep.subr.mxu0 0.0
  %1413 = vmatpush1.xpose.msra.mxu0 0.0
  %1414 = vmatprep.mubr.f32.mxu0 0.0
  %1415 = vmatmul.mubr.f32.gmra.mrb[0].mxu0 %v1339
  %v1416 = vpop.f32.mrb[0].mxu0
  %v1417 = vadd.f32 0.0, %v1416
  %v1418 = vpop.f32.mrb[0].mxu0
  %1419 = vmatprep.mubr.f32.mxu0 0.0
  %1420 = vmatmul.mubr.f32.gmra.mrb[0].mxu0 %v1342
  %v1421 = vpop.f32.mrb[0].mxu0
  %v1422 = vadd.f32 0.0, %v1421
  %v1423 = vpop.f32.mrb[0].mxu0
  %1424 = vdwg.mxu0
  %v1425 = vsel %vm591, %v1417, -inf
  %1426 = vmax.xlane.f32.xlu0 %v1425
  %v1427 = vpop.xlane.xlu0 %1426
  %v1428 = vsel %vm595, %v1422, -inf
  %1429 = vmax.xlane.f32.xlu0 %v1428
  %v1430 = vpop.xlane.xlu0 %1429
  %v1431 = vsub.f32 %v1417, %v1427
  %v1432 = vsub.f32 %v1422, %v1430
  %v1433 = vmul.f32 %v1431, 1.442695
  %v1434 = vpow.pop %v1433
  %v1435 = vmul.f32 %v1432, 1.442695
  %v1436 = vpow.pop %v1435
  %v1437 = vsel %vm591, %v1434, 0.0
  %1438 = vadd.xlane.f32.xlu0 %v1437
  %v1439 = vpop.xlane.xlu0 %1438
  %v1440 = vsel %vm595, %v1436, 0.0
  %1441 = vadd.xlane.f32.xlu0 %v1440
  %v1442 = vpop.xlane.xlu0 %1441
  %v1443 = vrcp.pop %v1439
  %v1444 = vmul.f32 %v1434, %v1443
  %v1445 = vrcp.pop %v1442
  %v1446 = vmul.f32 %v1436, %v1445
  %v1448 = vsel %vm591, %v1444, 0
  %v1451 = vsel %vm591, %v1446, 0
  %v1454 = vsel %vm621, %v500, 0
  %1456 = vmatprep.subr.mxu0 0.0
  %1457 = vmatpush1.msra.mxu0 %v495
  %1458 = vmatprep.subr.mxu0 0.0
  %1459 = vmatpush1.msra.mxu0 %v1454
  %1460 = vmatprep.subr.mxu0 0.0
  %1461 = vmatpush1.msra.mxu0 0.0
  %1462 = vmatprep.subr.mxu0 0.0
  %1463 = vmatpush1.msra.mxu0 0.0
  %1464 = vmatprep.subr.mxu0 0.0
  %1465 = vmatpush1.msra.mxu0 0.0
  %1466 = vmatprep.subr.mxu0 0.0
  %1467 = vmatpush1.msra.mxu0 0.0
  %1468 = vmatprep.subr.mxu0 0.0
  %1469 = vmatpush1.msra.mxu0 0.0
  %1470 = vmatprep.subr.mxu0 0.0
  %1471 = vmatpush1.msra.mxu0 0.0
  %1472 = vmatprep.subr.mxu0 0.0
  %1473 = vmatpush1.msra.mxu0 0.0
  %1474 = vmatprep.subr.mxu0 0.0
  %1475 = vmatpush1.msra.mxu0 0.0
  %1476 = vmatprep.subr.mxu0 0.0
  %1477 = vmatpush1.msra.mxu0 0.0
  %1478 = vmatprep.subr.mxu0 0.0
  %1479 = vmatpush1.msra.mxu0 0.0
  %1480 = vmatprep.subr.mxu0 0.0
  %1481 = vmatpush1.msra.mxu0 0.0
  %1482 = vmatprep.subr.mxu0 0.0
  %1483 = vmatpush1.msra.mxu0 0.0
  %1484 = vmatprep.subr.mxu0 0.0
  %1485 = vmatpush1.msra.mxu0 0.0
  %1486 = vmatprep.subr.mxu0 0.0
  %1487 = vmatpush1.msra.mxu0 0.0
  %1488 = vmatprep.subr.mxu0 0.0
  %1489 = vmatpush1.msra.mxu0 0.0
  %1490 = vmatprep.subr.mxu0 0.0
  %1491 = vmatpush1.msra.mxu0 0.0
  %1492 = vmatprep.subr.mxu0 0.0
  %1493 = vmatpush1.msra.mxu0 0.0
  %1494 = vmatprep.subr.mxu0 0.0
  %1495 = vmatpush1.msra.mxu0 0.0
  %1496 = vmatprep.subr.mxu0 0.0
  %1497 = vmatpush1.msra.mxu0 0.0
  %1498 = vmatprep.subr.mxu0 0.0
  %1499 = vmatpush1.msra.mxu0 0.0
  %1500 = vmatprep.subr.mxu0 0.0
  %1501 = vmatpush1.msra.mxu0 0.0
  %1502 = vmatprep.subr.mxu0 0.0
  %1503 = vmatpush1.msra.mxu0 0.0
  %1504 = vmatprep.subr.mxu0 0.0
  %1505 = vmatpush1.msra.mxu0 0.0
  %1506 = vmatprep.subr.mxu0 0.0
  %1507 = vmatpush1.msra.mxu0 0.0
  %1508 = vmatprep.subr.mxu0 0.0
  %1509 = vmatpush1.msra.mxu0 0.0
  %1510 = vmatprep.subr.mxu0 0.0
  %1511 = vmatpush1.msra.mxu0 0.0
  %1512 = vmatprep.subr.mxu0 0.0
  %1513 = vmatpush1.msra.mxu0 0.0
  %1514 = vmatprep.subr.mxu0 0.0
  %1515 = vmatpush1.msra.mxu0 0.0
  %1516 = vmatprep.subr.mxu0 0.0
  %1517 = vmatpush1.msra.mxu0 0.0
  %1518 = vmatprep.subr.mxu0 0.0
  %1519 = vmatpush1.msra.mxu0 0.0
  %1520 = vmatprep.mubr.f32.mxu0 0.0
  %1521 = vmatmul.mubr.f32.gmra.mrb[0].mxu0 %v1448
  %v1522 = vpop.f32.mrb[0].mxu0
  %v1523 = vadd.f32 0.0, %v1522
  %v1524 = vpop.f32.mrb[0].mxu0
  %1525 = vmatprep.mubr.f32.mxu0 0.0
  %1526 = vmatmul.mubr.f32.gmra.mrb[0].mxu0 %v1451
  %v1527 = vpop.f32.mrb[0].mxu0
  %v1528 = vadd.f32 0.0, %v1527
  %v1529 = vpop.f32.mrb[0].mxu0
  %1530 = vdwg.mxu0
  %1531 = vrot.lane.b32.xlu0 %v291, 120
  %v1532 = vpop.permute.xlu0 %1531
  %1533 = vrot.lane.b32.xlu0 %v292, 120
  %v1534 = vpop.permute.xlu0 %1533
  %1535 = vrot.lane.b32.xlu0 %v390, 120
  %v1536 = vpop.permute.xlu0 %1535
  %1537 = vrot.lane.b32.xlu0 %v395, 120
  %v1538 = vpop.permute.xlu0 %1537
  %v1539 = vsel %vm503, %v1532, 0
  %v1541 = vsel %vm503, %v1534, 0
  %v1543 = vsel %vm503, %v1536, 0
  %v1545 = vsel %vm503, %v1538, 0
  %1547 = vmatprep.subr.mxu0 0.0
  %1548 = vmatpush1.xpose.msra.mxu0 %v1543
  %1549 = vmatprep.subr.mxu0 0.0
  %1550 = vmatpush1.xpose.msra.mxu0 %v1545
  %1551 = vmatprep.subr.mxu0 0.0
  %1552 = vmatpush1.xpose.msra.mxu0 0.0
  %1553 = vmatprep.subr.mxu0 0.0
  %1554 = vmatpush1.xpose.msra.mxu0 0.0
  %1555 = vmatprep.subr.mxu0 0.0
  %1556 = vmatpush1.xpose.msra.mxu0 0.0
  %1557 = vmatprep.subr.mxu0 0.0
  %1558 = vmatpush1.xpose.msra.mxu0 0.0
  %1559 = vmatprep.subr.mxu0 0.0
  %1560 = vmatpush1.xpose.msra.mxu0 0.0
  %1561 = vmatprep.subr.mxu0 0.0
  %1562 = vmatpush1.xpose.msra.mxu0 0.0
  %1563 = vmatprep.subr.mxu0 0.0
  %1564 = vmatpush1.xpose.msra.mxu0 0.0
  %1565 = vmatprep.subr.mxu0 0.0
  %1566 = vmatpush1.xpose.msra.mxu0 0.0
  %1567 = vmatprep.subr.mxu0 0.0
  %1568 = vmatpush1.xpose.msra.mxu0 0.0
  %1569 = vmatprep.subr.mxu0 0.0
  %1570 = vmatpush1.xpose.msra.mxu0 0.0
  %1571 = vmatprep.subr.mxu0 0.0
  %1572 = vmatpush1.xpose.msra.mxu0 0.0
  %1573 = vmatprep.subr.mxu0 0.0
  %1574 = vmatpush1.xpose.msra.mxu0 0.0
  %1575 = vmatprep.subr.mxu0 0.0
  %1576 = vmatpush1.xpose.msra.mxu0 0.0
  %1577 = vmatprep.subr.mxu0 0.0
  %1578 = vmatpush1.xpose.msra.mxu0 0.0
  %1579 = vmatprep.subr.mxu0 0.0
  %1580 = vmatpush1.xpose.msra.mxu0 0.0
  %1581 = vmatprep.subr.mxu0 0.0
  %1582 = vmatpush1.xpose.msra.mxu0 0.0
  %1583 = vmatprep.subr.mxu0 0.0
  %1584 = vmatpush1.xpose.msra.mxu0 0.0
  %1585 = vmatprep.subr.mxu0 0.0
  %1586 = vmatpush1.xpose.msra.mxu0 0.0
  %1587 = vmatprep.subr.mxu0 0.0
  %1588 = vmatpush1.xpose.msra.mxu0 0.0
  %1589 = vmatprep.subr.mxu0 0.0
  %1590 = vmatpush1.xpose.msra.mxu0 0.0
  %1591 = vmatprep.subr.mxu0 0.0
  %1592 = vmatpush1.xpose.msra.mxu0 0.0
  %1593 = vmatprep.subr.mxu0 0.0
  %1594 = vmatpush1.xpose.msra.mxu0 0.0
  %1595 = vmatprep.subr.mxu0 0.0
  %1596 = vmatpush1.xpose.msra.mxu0 0.0
  %1597 = vmatprep.subr.mxu0 0.0
  %1598 = vmatpush1.xpose.msra.mxu0 0.0
  %1599 = vmatprep.subr.mxu0 0.0
  %1600 = vmatpush1.xpose.msra.mxu0 0.0
  %1601 = vmatprep.subr.mxu0 0.0
  %1602 = vmatpush1.xpose.msra.mxu0 0.0
  %1603 = vmatprep.subr.mxu0 0.0
  %1604 = vmatpush1.xpose.msra.mxu0 0.0
  %1605 = vmatprep.subr.mxu0 0.0
  %1606 = vmatpush1.xpose.msra.mxu0 0.0
  %1607 = vmatprep.subr.mxu0 0.0
  %1608 = vmatpush1.xpose.msra.mxu0 0.0
  %1609 = vmatprep.subr.mxu0 0.0
  %1610 = vmatpush1.xpose.msra.mxu0 0.0
  %1611 = vmatprep.mubr.f32.mxu0 0.0
  %1612 = vmatmul.mubr.f32.gmra.mrb[0].mxu0 %v1539
  %v1613 = vpop.f32.mrb[0].mxu0
  %v1614 = vadd.f32 0.0, %v1613
  %v1615 = vpop.f32.mrb[0].mxu0
  %1616 = vmatprep.mubr.f32.mxu0 0.0
  %1617 = vmatmul.mubr.f32.gmra.mrb[0].mxu0 %v1541
  %v1618 = vpop.f32.mrb[0].mxu0
  %v1619 = vadd.f32 0.0, %v1618
  %v1620 = vpop.f32.mrb[0].mxu0
  %1621 = vdwg.mxu0
  %v1622 = vsel %vm591, %v1614, -inf
  %1623 = vmax.xlane.f32.xlu0 %v1622
  %v1624 = vpop.xlane.xlu0 %1623
  %v1625 = vsel %vm595, %v1619, -inf
  %1626 = vmax.xlane.f32.xlu0 %v1625
  %v1627 = vpop.xlane.xlu0 %1626
  %v1628 = vsub.f32 %v1614, %v1624
  %v1629 = vsub.f32 %v1619, %v1627
  %v1630 = vmul.f32 %v1628, 1.442695
  %v1631 = vpow.pop %v1630
  %v1632 = vmul.f32 %v1629, 1.442695
  %v1633 = vpow.pop %v1632
  %v1634 = vsel %vm591, %v1631, 0.0
  %1635 = vadd.xlane.f32.xlu0 %v1634
  %v1636 = vpop.xlane.xlu0 %1635
  %v1637 = vsel %vm595, %v1633, 0.0
  %1638 = vadd.xlane.f32.xlu0 %v1637
  %v1639 = vpop.xlane.xlu0 %1638
  %v1640 = vrcp.pop %v1636
  %v1641 = vmul.f32 %v1631, %v1640
  %v1642 = vrcp.pop %v1639
  %v1643 = vmul.f32 %v1633, %v1642
  %1645 = vrot.lane.b32.xlu0 %v495, 120
  %v1646 = vpop.permute.xlu0 %1645
  %1647 = vrot.lane.b32.xlu0 %v500, 120
  %v1648 = vpop.permute.xlu0 %1647
  %v1651 = vsel %vm591, %v1641, 0
  %v1654 = vsel %vm591, %v1643, 0
  %v1656 = vsel %vm621, %v1648, 0
  %1658 = vmatprep.subr.mxu0 0.0
  %1659 = vmatpush1.msra.mxu0 %v1646
  %1660 = vmatprep.subr.mxu0 0.0
  %1661 = vmatpush1.msra.mxu0 %v1656
  %1662 = vmatprep.subr.mxu0 0.0
  %1663 = vmatpush1.msra.mxu0 0.0
  %1664 = vmatprep.subr.mxu0 0.0
  %1665 = vmatpush1.msra.mxu0 0.0
  %1666 = vmatprep.subr.mxu0 0.0
  %1667 = vmatpush1.msra.mxu0 0.0
  %1668 = vmatprep.subr.mxu0 0.0
  %1669 = vmatpush1.msra.mxu0 0.0
  %1670 = vmatprep.subr.mxu0 0.0
  %1671 = vmatpush1.msra.mxu0 0.0
  %1672 = vmatprep.subr.mxu0 0.0
  %1673 = vmatpush1.msra.mxu0 0.0
  %1674 = vmatprep.subr.mxu0 0.0
  %1675 = vmatpush1.msra.mxu0 0.0
  %1676 = vmatprep.subr.mxu0 0.0
  %1677 = vmatpush1.msra.mxu0 0.0
  %1678 = vmatprep.subr.mxu0 0.0
  %1679 = vmatpush1.msra.mxu0 0.0
  %1680 = vmatprep.subr.mxu0 0.0
  %1681 = vmatpush1.msra.mxu0 0.0
  %1682 = vmatprep.subr.mxu0 0.0
  %1683 = vmatpush1.msra.mxu0 0.0
  %1684 = vmatprep.subr.mxu0 0.0
  %1685 = vmatpush1.msra.mxu0 0.0
  %1686 = vmatprep.subr.mxu0 0.0
  %1687 = vmatpush1.msra.mxu0 0.0
  %1688 = vmatprep.subr.mxu0 0.0
  %1689 = vmatpush1.msra.mxu0 0.0
  %1690 = vmatprep.subr.mxu0 0.0
  %1691 = vmatpush1.msra.mxu0 0.0
  %1692 = vmatprep.subr.mxu0 0.0
  %1693 = vmatpush1.msra.mxu0 0.0
  %1694 = vmatprep.subr.mxu0 0.0
  %1695 = vmatpush1.msra.mxu0 0.0
  %1696 = vmatprep.subr.mxu0 0.0
  %1697 = vmatpush1.msra.mxu0 0.0
  %1698 = vmatprep.subr.mxu0 0.0
  %1699 = vmatpush1.msra.mxu0 0.0
  %1700 = vmatprep.subr.mxu0 0.0
  %1701 = vmatpush1.msra.mxu0 0.0
  %1702 = vmatprep.subr.mxu0 0.0
  %1703 = vmatpush1.msra.mxu0 0.0
  %1704 = vmatprep.subr.mxu0 0.0
  %1705 = vmatpush1.msra.mxu0 0.0
  %1706 = vmatprep.subr.mxu0 0.0
  %1707 = vmatpush1.msra.mxu0 0.0
  %1708 = vmatprep.subr.mxu0 0.0
  %1709 = vmatpush1.msra.mxu0 0.0
  %1710 = vmatprep.subr.mxu0 0.0
  %1711 = vmatpush1.msra.mxu0 0.0
  %1712 = vmatprep.subr.mxu0 0.0
  %1713 = vmatpush1.msra.mxu0 0.0
  %1714 = vmatprep.subr.mxu0 0.0
  %1715 = vmatpush1.msra.mxu0 0.0
  %1716 = vmatprep.subr.mxu0 0.0
  %1717 = vmatpush1.msra.mxu0 0.0
  %1718 = vmatprep.subr.mxu0 0.0
  %1719 = vmatpush1.msra.mxu0 0.0
  %1720 = vmatprep.subr.mxu0 0.0
  %1721 = vmatpush1.msra.mxu0 0.0
  %1722 = vmatprep.mubr.f32.mxu0 0.0
  %1723 = vmatmul.mubr.f32.gmra.mrb[0].mxu0 %v1651
  %v1724 = vpop.f32.mrb[0].mxu0
  %v1725 = vadd.f32 0.0, %v1724
  %v1726 = vpop.f32.mrb[0].mxu0
  %1727 = vmatprep.mubr.f32.mxu0 0.0
  %1728 = vmatmul.mubr.f32.gmra.mrb[0].mxu0 %v1654
  %v1729 = vpop.f32.mrb[0].mxu0
  %v1730 = vadd.f32 0.0, %v1729
  %v1731 = vpop.f32.mrb[0].mxu0
  %1732 = vdwg.mxu0
  %1733 = vrot.lane.b32.xlu0 %v291, 112
  %v1734 = vpop.permute.xlu0 %1733
  %1735 = vrot.lane.b32.xlu0 %v292, 112
  %v1736 = vpop.permute.xlu0 %1735
  %1737 = vrot.lane.b32.xlu0 %v390, 112
  %v1738 = vpop.permute.xlu0 %1737
  %1739 = vrot.lane.b32.xlu0 %v395, 112
  %v1740 = vpop.permute.xlu0 %1739
  %v1741 = vsel %vm503, %v1734, 0
  %v1743 = vsel %vm503, %v1736, 0
  %v1745 = vsel %vm503, %v1738, 0
  %v1747 = vsel %vm503, %v1740, 0
  %1749 = vmatprep.subr.mxu0 0.0
  %1750 = vmatpush1.xpose.msra.mxu0 %v1745
  %1751 = vmatprep.subr.mxu0 0.0
  %1752 = vmatpush1.xpose.msra.mxu0 %v1747
  %1753 = vmatprep.subr.mxu0 0.0
  %1754 = vmatpush1.xpose.msra.mxu0 0.0
  %1755 = vmatprep.subr.mxu0 0.0
  %1756 = vmatpush1.xpose.msra.mxu0 0.0
  %1757 = vmatprep.subr.mxu0 0.0
  %1758 = vmatpush1.xpose.msra.mxu0 0.0
  %1759 = vmatprep.subr.mxu0 0.0
  %1760 = vmatpush1.xpose.msra.mxu0 0.0
  %1761 = vmatprep.subr.mxu0 0.0
  %1762 = vmatpush1.xpose.msra.mxu0 0.0
  %1763 = vmatprep.subr.mxu0 0.0
  %1764 = vmatpush1.xpose.msra.mxu0 0.0
  %1765 = vmatprep.subr.mxu0 0.0
  %1766 = vmatpush1.xpose.msra.mxu0 0.0
  %1767 = vmatprep.subr.mxu0 0.0
  %1768 = vmatpush1.xpose.msra.mxu0 0.0
  %1769 = vmatprep.subr.mxu0 0.0
  %1770 = vmatpush1.xpose.msra.mxu0 0.0
  %1771 = vmatprep.subr.mxu0 0.0
  %1772 = vmatpush1.xpose.msra.mxu0 0.0
  %1773 = vmatprep.subr.mxu0 0.0
  %1774 = vmatpush1.xpose.msra.mxu0 0.0
  %1775 = vmatprep.subr.mxu0 0.0
  %1776 = vmatpush1.xpose.msra.mxu0 0.0
  %1777 = vmatprep.subr.mxu0 0.0
  %1778 = vmatpush1.xpose.msra.mxu0 0.0
  %1779 = vmatprep.subr.mxu0 0.0
  %1780 = vmatpush1.xpose.msra.mxu0 0.0
  %1781 = vmatprep.subr.mxu0 0.0
  %1782 = vmatpush1.xpose.msra.mxu0 0.0
  %1783 = vmatprep.subr.mxu0 0.0
  %1784 = vmatpush1.xpose.msra.mxu0 0.0
  %1785 = vmatprep.subr.mxu0 0.0
  %1786 = vmatpush1.xpose.msra.mxu0 0.0
  %1787 = vmatprep.subr.mxu0 0.0
  %1788 = vmatpush1.xpose.msra.mxu0 0.0
  %1789 = vmatprep.subr.mxu0 0.0
  %1790 = vmatpush1.xpose.msra.mxu0 0.0
  %1791 = vmatprep.subr.mxu0 0.0
  %1792 = vmatpush1.xpose.msra.mxu0 0.0
  %1793 = vmatprep.subr.mxu0 0.0
  %1794 = vmatpush1.xpose.msra.mxu0 0.0
  %1795 = vmatprep.subr.mxu0 0.0
  %1796 = vmatpush1.xpose.msra.mxu0 0.0
  %1797 = vmatprep.subr.mxu0 0.0
  %1798 = vmatpush1.xpose.msra.mxu0 0.0
  %1799 = vmatprep.subr.mxu0 0.0
  %1800 = vmatpush1.xpose.msra.mxu0 0.0
  %1801 = vmatprep.subr.mxu0 0.0
  %1802 = vmatpush1.xpose.msra.mxu0 0.0
  %1803 = vmatprep.subr.mxu0 0.0
  %1804 = vmatpush1.xpose.msra.mxu0 0.0
  %1805 = vmatprep.subr.mxu0 0.0
  %1806 = vmatpush1.xpose.msra.mxu0 0.0
  %1807 = vmatprep.subr.mxu0 0.0
  %1808 = vmatpush1.xpose.msra.mxu0 0.0
  %1809 = vmatprep.subr.mxu0 0.0
  %1810 = vmatpush1.xpose.msra.mxu0 0.0
  %1811 = vmatprep.subr.mxu0 0.0
  %1812 = vmatpush1.xpose.msra.mxu0 0.0
  %1813 = vmatprep.mubr.f32.mxu0 0.0
  %1814 = vmatmul.mubr.f32.gmra.mrb[0].mxu0 %v1741
  %v1815 = vpop.f32.mrb[0].mxu0
  %v1816 = vadd.f32 0.0, %v1815
  %v1817 = vpop.f32.mrb[0].mxu0
  %1818 = vmatprep.mubr.f32.mxu0 0.0
  %1819 = vmatmul.mubr.f32.gmra.mrb[0].mxu0 %v1743
  %v1820 = vpop.f32.mrb[0].mxu0
  %v1821 = vadd.f32 0.0, %v1820
  %v1822 = vpop.f32.mrb[0].mxu0
  %1823 = vdwg.mxu0
  %v1824 = vsel %vm591, %v1816, -inf
  %1825 = vmax.xlane.f32.xlu0 %v1824
  %v1826 = vpop.xlane.xlu0 %1825
  %v1827 = vsel %vm595, %v1821, -inf
  %1828 = vmax.xlane.f32.xlu0 %v1827
  %v1829 = vpop.xlane.xlu0 %1828
  %v1830 = vsub.f32 %v1816, %v1826
  %v1831 = vsub.f32 %v1821, %v1829
  %v1832 = vmul.f32 %v1830, 1.442695
  %v1833 = vpow.pop %v1832
  %v1834 = vmul.f32 %v1831, 1.442695
  %v1835 = vpow.pop %v1834
  %v1836 = vsel %vm591, %v1833, 0.0
  %1837 = vadd.xlane.f32.xlu0 %v1836
  %v1838 = vpop.xlane.xlu0 %1837
  %v1839 = vsel %vm595, %v1835, 0.0
  %1840 = vadd.xlane.f32.xlu0 %v1839
  %v1841 = vpop.xlane.xlu0 %1840
  %v1842 = vrcp.pop %v1838
  %v1843 = vmul.f32 %v1833, %v1842
  %v1844 = vrcp.pop %v1841
  %v1845 = vmul.f32 %v1835, %v1844
  %1846 = vrot.lane.b32.xlu0 %v495, 112
  %v1847 = vpop.permute.xlu0 %1846
  %1848 = vrot.lane.b32.xlu0 %v500, 112
  %v1849 = vpop.permute.xlu0 %1848
  %v1852 = vsel %vm591, %v1843, 0
  %v1855 = vsel %vm591, %v1845, 0
  %v1857 = vsel %vm621, %v1849, 0
  %1859 = vmatprep.subr.mxu0 0.0
  %1860 = vmatpush1.msra.mxu0 %v1847
  %1861 = vmatprep.subr.mxu0 0.0
  %1862 = vmatpush1.msra.mxu0 %v1857
  %1863 = vmatprep.subr.mxu0 0.0
  %1864 = vmatpush1.msra.mxu0 0.0
  %1865 = vmatprep.subr.mxu0 0.0
  %1866 = vmatpush1.msra.mxu0 0.0
  %1867 = vmatprep.subr.mxu0 0.0
  %1868 = vmatpush1.msra.mxu0 0.0
  %1869 = vmatprep.subr.mxu0 0.0
  %1870 = vmatpush1.msra.mxu0 0.0
  %1871 = vmatprep.subr.mxu0 0.0
  %1872 = vmatpush1.msra.mxu0 0.0
  %1873 = vmatprep.subr.mxu0 0.0
  %1874 = vmatpush1.msra.mxu0 0.0
  %1875 = vmatprep.subr.mxu0 0.0
  %1876 = vmatpush1.msra.mxu0 0.0
  %1877 = vmatprep.subr.mxu0 0.0
  %1878 = vmatpush1.msra.mxu0 0.0
  %1879 = vmatprep.subr.mxu0 0.0
  %1880 = vmatpush1.msra.mxu0 0.0
  %1881 = vmatprep.subr.mxu0 0.0
  %1882 = vmatpush1.msra.mxu0 0.0
  %1883 = vmatprep.subr.mxu0 0.0
  %1884 = vmatpush1.msra.mxu0 0.0
  %1885 = vmatprep.subr.mxu0 0.0
  %1886 = vmatpush1.msra.mxu0 0.0
  %1887 = vmatprep.subr.mxu0 0.0
  %1888 = vmatpush1.msra.mxu0 0.0
  %1889 = vmatprep.subr.mxu0 0.0
  %1890 = vmatpush1.msra.mxu0 0.0
  %1891 = vmatprep.subr.mxu0 0.0
  %1892 = vmatpush1.msra.mxu0 0.0
  %1893 = vmatprep.subr.mxu0 0.0
  %1894 = vmatpush1.msra.mxu0 0.0
  %1895 = vmatprep.subr.mxu0 0.0
  %1896 = vmatpush1.msra.mxu0 0.0
  %1897 = vmatprep.subr.mxu0 0.0
  %1898 = vmatpush1.msra.mxu0 0.0
  %1899 = vmatprep.subr.mxu0 0.0
  %1900 = vmatpush1.msra.mxu0 0.0
  %1901 = vmatprep.subr.mxu0 0.0
  %1902 = vmatpush1.msra.mxu0 0.0
  %1903 = vmatprep.subr.mxu0 0.0
  %1904 = vmatpush1.msra.mxu0 0.0
  %1905 = vmatprep.subr.mxu0 0.0
  %1906 = vmatpush1.msra.mxu0 0.0
  %1907 = vmatprep.subr.mxu0 0.0
  %1908 = vmatpush1.msra.mxu0 0.0
  %1909 = vmatprep.subr.mxu0 0.0
  %1910 = vmatpush1.msra.mxu0 0.0
  %1911 = vmatprep.subr.mxu0 0.0
  %1912 = vmatpush1.msra.mxu0 0.0
  %1913 = vmatprep.subr.mxu0 0.0
  %1914 = vmatpush1.msra.mxu0 0.0
  %1915 = vmatprep.subr.mxu0 0.0
  %1916 = vmatpush1.msra.mxu0 0.0
  %1917 = vmatprep.subr.mxu0 0.0
  %1918 = vmatpush1.msra.mxu0 0.0
  %1919 = vmatprep.subr.mxu0 0.0
  %1920 = vmatpush1.msra.mxu0 0.0
  %1921 = vmatprep.subr.mxu0 0.0
  %1922 = vmatpush1.msra.mxu0 0.0
  %1923 = vmatprep.mubr.f32.mxu0 0.0
  %1924 = vmatmul.mubr.f32.gmra.mrb[0].mxu0 %v1852
  %v1925 = vpop.f32.mrb[0].mxu0
  %v1926 = vadd.f32 0.0, %v1925
  %v1927 = vpop.f32.mrb[0].mxu0
  %1928 = vmatprep.mubr.f32.mxu0 0.0
  %1929 = vmatmul.mubr.f32.gmra.mrb[0].mxu0 %v1855
  %v1930 = vpop.f32.mrb[0].mxu0
  %v1931 = vadd.f32 0.0, %v1930
  %v1932 = vpop.f32.mrb[0].mxu0
  %1933 = vdwg.mxu0
  %1934 = vrot.lane.b32.xlu0 %v291, 104
  %v1935 = vpop.permute.xlu0 %1934
  %1936 = vrot.lane.b32.xlu0 %v292, 104
  %v1937 = vpop.permute.xlu0 %1936
  %1938 = vrot.lane.b32.xlu0 %v390, 104
  %v1939 = vpop.permute.xlu0 %1938
  %1940 = vrot.lane.b32.xlu0 %v395, 104
  %v1941 = vpop.permute.xlu0 %1940
  %v1942 = vsel %vm503, %v1935, 0
  %v1944 = vsel %vm503, %v1937, 0
  %v1946 = vsel %vm503, %v1939, 0
  %v1948 = vsel %vm503, %v1941, 0
  %1950 = vmatprep.subr.mxu0 0.0
  %1951 = vmatpush1.xpose.msra.mxu0 %v1946
  %1952 = vmatprep.subr.mxu0 0.0
  %1953 = vmatpush1.xpose.msra.mxu0 %v1948
  %1954 = vmatprep.subr.mxu0 0.0
  %1955 = vmatpush1.xpose.msra.mxu0 0.0
  %1956 = vmatprep.subr.mxu0 0.0
  %1957 = vmatpush1.xpose.msra.mxu0 0.0
  %1958 = vmatprep.subr.mxu0 0.0
  %1959 = vmatpush1.xpose.msra.mxu0 0.0
  %1960 = vmatprep.subr.mxu0 0.0
  %1961 = vmatpush1.xpose.msra.mxu0 0.0
  %1962 = vmatprep.subr.mxu0 0.0
  %1963 = vmatpush1.xpose.msra.mxu0 0.0
  %1964 = vmatprep.subr.mxu0 0.0
  %1965 = vmatpush1.xpose.msra.mxu0 0.0
  %1966 = vmatprep.subr.mxu0 0.0
  %1967 = vmatpush1.xpose.msra.mxu0 0.0
  %1968 = vmatprep.subr.mxu0 0.0
  %1969 = vmatpush1.xpose.msra.mxu0 0.0
  %1970 = vmatprep.subr.mxu0 0.0
  %1971 = vmatpush1.xpose.msra.mxu0 0.0
  %1972 = vmatprep.subr.mxu0 0.0
  %1973 = vmatpush1.xpose.msra.mxu0 0.0
  %1974 = vmatprep.subr.mxu0 0.0
  %1975 = vmatpush1.xpose.msra.mxu0 0.0
  %1976 = vmatprep.subr.mxu0 0.0
  %1977 = vmatpush1.xpose.msra.mxu0 0.0
  %1978 = vmatprep.subr.mxu0 0.0
  %1979 = vmatpush1.xpose.msra.mxu0 0.0
  %1980 = vmatprep.subr.mxu0 0.0
  %1981 = vmatpush1.xpose.msra.mxu0 0.0
  %1982 = vmatprep.subr.mxu0 0.0
  %1983 = vmatpush1.xpose.msra.mxu0 0.0
  %1984 = vmatprep.subr.mxu0 0.0
  %1985 = vmatpush1.xpose.msra.mxu0 0.0
  %1986 = vmatprep.subr.mxu0 0.0
  %1987 = vmatpush1.xpose.msra.mxu0 0.0
  %1988 = vmatprep.subr.mxu0 0.0
  %1989 = vmatpush1.xpose.msra.mxu0 0.0
  %1990 = vmatprep.subr.mxu0 0.0
  %1991 = vmatpush1.xpose.msra.mxu0 0.0
  %1992 = vmatprep.subr.mxu0 0.0
  %1993 = vmatpush1.xpose.msra.mxu0 0.0
  %1994 = vmatprep.subr.mxu0 0.0
  %1995 = vmatpush1.xpose.msra.mxu0 0.0
  %1996 = vmatprep.subr.mxu0 0.0
  %1997 = vmatpush1.xpose.msra.mxu0 0.0
  %1998 = vmatprep.subr.mxu0 0.0
  %1999 = vmatpush1.xpose.msra.mxu0 0.0
  %2000 = vmatprep.subr.mxu0 0.0
  %2001 = vmatpush1.xpose.msra.mxu0 0.0
  %2002 = vmatprep.subr.mxu0 0.0
  %2003 = vmatpush1.xpose.msra.mxu0 0.0
  %2004 = vmatprep.subr.mxu0 0.0
  %2005 = vmatpush1.xpose.msra.mxu0 0.0
  %2006 = vmatprep.subr.mxu0 0.0
  %2007 = vmatpush1.xpose.msra.mxu0 0.0
  %2008 = vmatprep.subr.mxu0 0.0
  %2009 = vmatpush1.xpose.msra.mxu0 0.0
  %2010 = vmatprep.subr.mxu0 0.0
  %2011 = vmatpush1.xpose.msra.mxu0 0.0
  %2012 = vmatprep.subr.mxu0 0.0
  %2013 = vmatpush1.xpose.msra.mxu0 0.0
  %2014 = vmatprep.mubr.f32.mxu0 0.0
  %2015 = vmatmul.mubr.f32.gmra.mrb[0].mxu0 %v1942
  %v2016 = vpop.f32.mrb[0].mxu0
  %v2017 = vadd.f32 0.0, %v2016
  %v2018 = vpop.f32.mrb[0].mxu0
  %2019 = vmatprep.mubr.f32.mxu0 0.0
  %2020 = vmatmul.mubr.f32.gmra.mrb[0].mxu0 %v1944
  %v2021 = vpop.f32.mrb[0].mxu0
  %v2022 = vadd.f32 0.0, %v2021
  %v2023 = vpop.f32.mrb[0].mxu0
  %2024 = vdwg.mxu0
  %v2025 = vsel %vm591, %v2017, -inf
  %2026 = vmax.xlane.f32.xlu0 %v2025
  %v2027 = vpop.xlane.xlu0 %2026
  %v2028 = vsel %vm595, %v2022, -inf
  %2029 = vmax.xlane.f32.xlu0 %v2028
  %v2030 = vpop.xlane.xlu0 %2029
  %v2031 = vsub.f32 %v2017, %v2027
  %v2032 = vsub.f32 %v2022, %v2030
  %v2033 = vmul.f32 %v2031, 1.442695
  %v2034 = vpow.pop %v2033
  %v2035 = vmul.f32 %v2032, 1.442695
  %v2036 = vpow.pop %v2035
  %v2037 = vsel %vm591, %v2034, 0.0
  %2038 = vadd.xlane.f32.xlu0 %v2037
  %v2039 = vpop.xlane.xlu0 %2038
  %v2040 = vsel %vm595, %v2036, 0.0
  %2041 = vadd.xlane.f32.xlu0 %v2040
  %v2042 = vpop.xlane.xlu0 %2041
  %v2043 = vrcp.pop %v2039
  %v2044 = vmul.f32 %v2034, %v2043
  %v2045 = vrcp.pop %v2042
  %v2046 = vmul.f32 %v2036, %v2045
  %2047 = vrot.lane.b32.xlu0 %v495, 104
  %v2048 = vpop.permute.xlu0 %2047
  %2049 = vrot.lane.b32.xlu0 %v500, 104
  %v2050 = vpop.permute.xlu0 %2049
  %v2053 = vsel %vm591, %v2044, 0
  %v2056 = vsel %vm591, %v2046, 0
  %v2058 = vsel %vm621, %v2050, 0
  %2060 = vmatprep.subr.mxu0 0.0
  %2061 = vmatpush1.msra.mxu0 %v2048
  %2062 = vmatprep.subr.mxu0 0.0
  %2063 = vmatpush1.msra.mxu0 %v2058
  %2064 = vmatprep.subr.mxu0 0.0
  %2065 = vmatpush1.msra.mxu0 0.0
  %2066 = vmatprep.subr.mxu0 0.0
  %2067 = vmatpush1.msra.mxu0 0.0
  %2068 = vmatprep.subr.mxu0 0.0
  %2069 = vmatpush1.msra.mxu0 0.0
  %2070 = vmatprep.subr.mxu0 0.0
  %2071 = vmatpush1.msra.mxu0 0.0
  %2072 = vmatprep.subr.mxu0 0.0
  %2073 = vmatpush1.msra.mxu0 0.0
  %2074 = vmatprep.subr.mxu0 0.0
  %2075 = vmatpush1.msra.mxu0 0.0
  %2076 = vmatprep.subr.mxu0 0.0
  %2077 = vmatpush1.msra.mxu0 0.0
  %2078 = vmatprep.subr.mxu0 0.0
  %2079 = vmatpush1.msra.mxu0 0.0
  %2080 = vmatprep.subr.mxu0 0.0
  %2081 = vmatpush1.msra.mxu0 0.0
  %2082 = vmatprep.subr.mxu0 0.0
  %2083 = vmatpush1.msra.mxu0 0.0
  %2084 = vmatprep.subr.mxu0 0.0
  %2085 = vmatpush1.msra.mxu0 0.0
  %2086 = vmatprep.subr.mxu0 0.0
  %2087 = vmatpush1.msra.mxu0 0.0
  %2088 = vmatprep.subr.mxu0 0.0
  %2089 = vmatpush1.msra.mxu0 0.0
  %2090 = vmatprep.subr.mxu0 0.0
  %2091 = vmatpush1.msra.mxu0 0.0
  %2092 = vmatprep.subr.mxu0 0.0
  %2093 = vmatpush1.msra.mxu0 0.0
  %2094 = vmatprep.subr.mxu0 0.0
  %2095 = vmatpush1.msra.mxu0 0.0
  %2096 = vmatprep.subr.mxu0 0.0
  %2097 = vmatpush1.msra.mxu0 0.0
  %2098 = vmatprep.subr.mxu0 0.0
  %2099 = vmatpush1.msra.mxu0 0.0
  %2100 = vmatprep.subr.mxu0 0.0
  %2101 = vmatpush1.msra.mxu0 0.0
  %2102 = vmatprep.subr.mxu0 0.0
  %2103 = vmatpush1.msra.mxu0 0.0
  %2104 = vmatprep.subr.mxu0 0.0
  %2105 = vmatpush1.msra.mxu0 0.0
  %2106 = vmatprep.subr.mxu0 0.0
  %2107 = vmatpush1.msra.mxu0 0.0
  %2108 = vmatprep.subr.mxu0 0.0
  %2109 = vmatpush1.msra.mxu0 0.0
  %2110 = vmatprep.subr.mxu0 0.0
  %2111 = vmatpush1.msra.mxu0 0.0
  %2112 = vmatprep.subr.mxu0 0.0
  %2113 = vmatpush1.msra.mxu0 0.0
  %2114 = vmatprep.subr.mxu0 0.0
  %2115 = vmatpush1.msra.mxu0 0.0
  %2116 = vmatprep.subr.mxu0 0.0
  %2117 = vmatpush1.msra.mxu0 0.0
  %2118 = vmatprep.subr.mxu0 0.0
  %2119 = vmatpush1.msra.mxu0 0.0
  %2120 = vmatprep.subr.mxu0 0.0
  %2121 = vmatpush1.msra.mxu0 0.0
  %2122 = vmatprep.subr.mxu0 0.0
  %2123 = vmatpush1.msra.mxu0 0.0
  %2124 = vmatprep.mubr.f32.mxu0 0.0
  %2125 = vmatmul.mubr.f32.gmra.mrb[0].mxu0 %v2053
  %v2126 = vpop.f32.mrb[0].mxu0
  %v2127 = vadd.f32 0.0, %v2126
  %v2128 = vpop.f32.mrb[0].mxu0
  %2129 = vmatprep.mubr.f32.mxu0 0.0
  %2130 = vmatmul.mubr.f32.gmra.mrb[0].mxu0 %v2056
  %v2131 = vpop.f32.mrb[0].mxu0
  %v2132 = vadd.f32 0.0, %v2131
  %v2133 = vpop.f32.mrb[0].mxu0
  %2134 = vdwg.mxu0
  %2137 = vrot.lane.b32.xlu0 %v1725, 8
  %v2138 = vpop.permute.xlu0 %2137
  %2139 = vrot.lane.b32.xlu0 %v1730, 8
  %v2140 = vpop.permute.xlu0 %2139
  %2145 = vrot.lane.b32.xlu0 %v1926, 16
  %v2146 = vpop.permute.xlu0 %2145
  %2147 = vrot.lane.b32.xlu0 %v1931, 16
  %v2148 = vpop.permute.xlu0 %2147
  %2153 = vrot.lane.b32.xlu0 %v2127, 24
  %v2154 = vpop.permute.xlu0 %2153
  %2155 = vrot.lane.b32.xlu0 %v2132, 24
  %v2156 = vpop.permute.xlu0 %2155
  %v2159 = vsel %vm503, %v1523, %v2138
  %v2160 = vsel %vm503, %v1528, %v2140
  %v2161 = vsel %vm72, %v2159, %v2146
  %v2162 = vsel %vm72, %v2160, %v2148
  %v2163 = vsel %vm1332, %v2161, %v2154
  %v2164 = vsel %vm1332, %v2162, %v2156
  %2165 = vst.msk [vmem:[#allocation3 + $0x10] sm:$0xff] %vm42, %v2163
  %2166 = vst.msk [vmem:[#allocation3 + $0x18] sm:$0xf] %vm1336, %v2164
  %v2167 = vld [vmem:[#allocation3] sm:$0xff]
  %v2168 = vld [vmem:[#allocation3 + $0x8] sm:$0xff]
  %v2169 = vld [vmem:[#allocation3 + $0x10] sm:$0xff]
  %v2170 = vld [vmem:[#allocation3 + $0x18] sm:$0xff]
  %v2171 = vld [vmem:[%s6] sm:$0xff]
  %v2172 = vld [vmem:[%s6 + $0x8] sm:$0xff]
  %v2173 = vld [vmem:[%s6 + $0x10] sm:$0xff]
  %v2174 = vld [vmem:[%s6 + $0x18] sm:$0xff]
  %v2175 = vlaneseq
  %v2176 = vshrl.u32 %v2175, 7
  %v2177 = vsub.s32 0, %v2176
  %v2178 = vrot.slane %v57, %v2177
  %v2180 = vsel %vm42, %v2167, 0
  %v2183 = vsel %vm42, %v2168, 0
  %v2186 = vsel %vm42, %v2169, 0
  %v2189 = vsel %vm42, %v2170, 0
  %v2192 = vsel %vm42, %v2171, 0
  %v2195 = vsel %vm42, %v2172, 0
  %v2198 = vsel %vm42, %v2173, 0
  %v2201 = vsel %vm42, %v2174, 0
  %2203 = vmatprep.subr.mxu0 0.0
  %2204 = vmatpush1.xpose.msra.mxu0 %v2192
  %2205 = vmatprep.subr.mxu0 0.0
  %2206 = vmatpush1.xpose.msra.mxu0 %v2195
  %2207 = vmatprep.subr.mxu0 0.0
  %2208 = vmatpush1.xpose.msra.mxu0 %v2198
  %2209 = vmatprep.subr.mxu0 0.0
  %2210 = vmatpush1.xpose.msra.mxu0 %v2201
  %2211 = vmatprep.subr.mxu0 0.0
  %2212 = vmatpush1.xpose.msra.mxu0 0.0
  %2213 = vmatprep.subr.mxu0 0.0
  %2214 = vmatpush1.xpose.msra.mxu0 0.0
  %2215 = vmatprep.subr.mxu0 0.0
  %2216 = vmatpush1.xpose.msra.mxu0 0.0
  %2217 = vmatprep.subr.mxu0 0.0
  %2218 = vmatpush1.xpose.msra.mxu0 0.0
  %2219 = vmatprep.subr.mxu0 0.0
  %2220 = vmatpush1.xpose.msra.mxu0 0.0
  %2221 = vmatprep.subr.mxu0 0.0
  %2222 = vmatpush1.xpose.msra.mxu0 0.0
  %2223 = vmatprep.subr.mxu0 0.0
  %2224 = vmatpush1.xpose.msra.mxu0 0.0
  %2225 = vmatprep.subr.mxu0 0.0
  %2226 = vmatpush1.xpose.msra.mxu0 0.0
  %2227 = vmatprep.subr.mxu0 0.0
  %2228 = vmatpush1.xpose.msra.mxu0 0.0
  %2229 = vmatprep.subr.mxu0 0.0
  %2230 = vmatpush1.xpose.msra.mxu0 0.0
  %2231 = vmatprep.subr.mxu0 0.0
  %2232 = vmatpush1.xpose.msra.mxu0 0.0
  %2233 = vmatprep.subr.mxu0 0.0
  %2234 = vmatpush1.xpose.msra.mxu0 0.0
  %2235 = vmatprep.subr.mxu0 0.0
  %2236 = vmatpush1.xpose.msra.mxu0 0.0
  %2237 = vmatprep.subr.mxu0 0.0
  %2238 = vmatpush1.xpose.msra.mxu0 0.0
  %2239 = vmatprep.subr.mxu0 0.0
  %2240 = vmatpush1.xpose.msra.mxu0 0.0
  %2241 = vmatprep.subr.mxu0 0.0
  %2242 = vmatpush1.xpose.msra.mxu0 0.0
  %2243 = vmatprep.subr.mxu0 0.0
  %2244 = vmatpush1.xpose.msra.mxu0 0.0
  %2245 = vmatprep.subr.mxu0 0.0
  %2246 = vmatpush1.xpose.msra.mxu0 0.0
  %2247 = vmatprep.subr.mxu0 0.0
  %2248 = vmatpush1.xpose.msra.mxu0 0.0
  %2249 = vmatprep.subr.mxu0 0.0
  %2250 = vmatpush1.xpose.msra.mxu0 0.0
  %2251 = vmatprep.subr.mxu0 0.0
  %2252 = vmatpush1.xpose.msra.mxu0 0.0
  %2253 = vmatprep.subr.mxu0 0.0
  %2254 = vmatpush1.xpose.msra.mxu0 0.0
  %2255 = vmatprep.subr.mxu0 0.0
  %2256 = vmatpush1.xpose.msra.mxu0 0.0
  %2257 = vmatprep.subr.mxu0 0.0
  %2258 = vmatpush1.xpose.msra.mxu0 0.0
  %2259 = vmatprep.subr.mxu0 0.0
  %2260 = vmatpush1.xpose.msra.mxu0 0.0
  %2261 = vmatprep.subr.mxu0 0.0
  %2262 = vmatpush1.xpose.msra.mxu0 0.0
  %2263 = vmatprep.subr.mxu0 0.0
  %2264 = vmatpush1.xpose.msra.mxu0 0.0
  %2265 = vmatprep.subr.mxu0 0.0
  %2266 = vmatpush1.xpose.msra.mxu0 0.0
  %2267 = vmatprep.mubr.f32.mxu0 0.0
  %2268 = vmatmul.mubr.f32.gmra.mrb[0].mxu0 %v2180
  %v2269 = vpop.f32.mrb[0].mxu0
  %v2270 = vadd.f32 %v2178, %v2269
  %v2271 = vpop.f32.mrb[0].mxu0
  %2272 = vmatprep.mubr.f32.mxu0 0.0
  %2273 = vmatmul.mubr.f32.gmra.mrb[0].mxu0 %v2183
  %v2274 = vpop.f32.mrb[0].mxu0
  %v2275 = vadd.f32 %v2178, %v2274
  %v2276 = vpop.f32.mrb[0].mxu0
  %2277 = vmatprep.mubr.f32.mxu0 0.0
  %2278 = vmatmul.mubr.f32.gmra.mrb[0].mxu0 %v2186
  %v2279 = vpop.f32.mrb[0].mxu0
  %v2280 = vadd.f32 %v2178, %v2279
  %v2281 = vpop.f32.mrb[0].mxu0
  %2282 = vmatprep.mubr.f32.mxu0 0.0
  %2283 = vmatmul.mubr.f32.gmra.mrb[0].mxu0 %v2189
  %v2284 = vpop.f32.mrb[0].mxu0
  %v2285 = vadd.f32 %v2178, %v2284
  %v2286 = vpop.f32.mrb[0].mxu0
  %2287 = vdwg.mxu0
  %v2288 = vadd.f32 %v168, %v2270
  %v2289 = vadd.f32 %v169, %v2275
  %v2290 = vadd.f32 %v170, %v2280
  %v2291 = vadd.f32 %v171, %v2285
  %v2292 = vsel %vm42, %v2288, 0.0
  %2293 = vadd.xlane.f32.xlu0 %v2292
  %v2294 = vpop.xlane.xlu0 %2293
  %v2295 = vsel %vm42, %v2289, 0.0
  %2296 = vadd.xlane.f32.xlu0 %v2295
  %v2297 = vpop.xlane.xlu0 %2296
  %v2298 = vsel %vm42, %v2290, 0.0
  %2299 = vadd.xlane.f32.xlu0 %v2298
  %v2300 = vpop.xlane.xlu0 %2299
  %v2301 = vsel %vm42, %v2291, 0.0
  %2302 = vadd.xlane.f32.xlu0 %v2301
  %v2303 = vpop.xlane.xlu0 %2302
  %v2304 = vrcp.pop 32.0
  %v2305 = vmul.f32 %v2294, %v2304
  %v2306 = vmul.f32 %v2297, %v2304
  %v2307 = vmul.f32 %v2300, %v2304
  %v2308 = vmul.f32 %v2303, %v2304
  %v2309 = vsub.f32 %v2288, %v2305
  %v2310 = vsub.f32 %v2289, %v2306
  %v2311 = vsub.f32 %v2290, %v2307
  %v2312 = vsub.f32 %v2291, %v2308
  %v2313 = vmul.f32 %v2309, %v2309
  %v2314 = vmul.f32 %v2310, %v2310
  %v2315 = vmul.f32 %v2311, %v2311
  %v2316 = vmul.f32 %v2312, %v2312
  %v2317 = vsel %vm42, %v2313, 0.0
  %2318 = vadd.xlane.f32.xlu0 %v2317
  %v2319 = vpop.xlane.xlu0 %2318
  %v2320 = vsel %vm42, %v2314, 0.0
  %2321 = vadd.xlane.f32.xlu0 %v2320
  %v2322 = vpop.xlane.xlu0 %2321
  %v2323 = vsel %vm42, %v2315, 0.0
  %2324 = vadd.xlane.f32.xlu0 %v2323
  %v2325 = vpop.xlane.xlu0 %2324
  %v2326 = vsel %vm42, %v2316, 0.0
  %2327 = vadd.xlane.f32.xlu0 %v2326
  %v2328 = vpop.xlane.xlu0 %2327
  %v2329 = vmul.f32 %v2319, %v2304
  %v2330 = vmul.f32 %v2322, %v2304
  %v2331 = vmul.f32 %v2325, %v2304
  %v2332 = vmul.f32 %v2328, %v2304
  %v2333 = vadd.f32 %v2329, 1e-05
  %v2334 = vadd.f32 %v2330, 1e-05
  %v2335 = vadd.f32 %v2331, 1e-05
  %v2336 = vadd.f32 %v2332, 1e-05
  %v2337 = vrsqrt.pop %v2333
  %v2338 = vrsqrt.pop %v2334
  %v2339 = vrsqrt.pop %v2335
  %v2340 = vrsqrt.pop %v2336
  %v2341 = vmul.f32 %v2309, %v2337
  %v2342 = vmul.f32 %v2310, %v2338
  %v2343 = vmul.f32 %v2311, %v2339
  %v2344 = vmul.f32 %v2312, %v2340
  %v2345 = vlaneseq
  %v2346 = vshrl.u32 %v2345, 7
  %v2347 = vsub.s32 0, %v2346
  %v2348 = vrot.slane %v58, %v2347
  %v2349 = vmul.f32 %v2341, %v2348
  %v2350 = vmul.f32 %v2342, %v2348
  %v2351 = vmul.f32 %v2343, %v2348
  %v2352 = vmul.f32 %v2344, %v2348
  %v2353 = vlaneseq
  %v2354 = vshrl.u32 %v2353, 7
  %v2355 = vsub.s32 0, %v2354
  %v2356 = vrot.slane %v59, %v2355
  %v2357 = vadd.f32 %v2349, %v2356
  %v2358 = vadd.f32 %v2350, %v2356
  %v2359 = vadd.f32 %v2351, %v2356
  %v2360 = vadd.f32 %v2352, %v2356
  %v2361 = vld [vmem:[%s7] sm:$0xff]
  %v2362 = vld [vmem:[%s7 + $0x8] sm:$0xff]
  %v2363 = vld [vmem:[%s7 + $0x10] sm:$0xff]
  %v2364 = vld [vmem:[%s7 + $0x18] sm:$0xff]
  %v2365 = vld [vmem:[%s7 + $0x20] sm:$0xff]
  %v2366 = vld [vmem:[%s7 + $0x28] sm:$0xff]
  %v2367 = vld [vmem:[%s7 + $0x30] sm:$0xff]
  %v2368 = vld [vmem:[%s7 + $0x38] sm:$0xff]
  %v2369 = vlaneseq
  %v2370 = vshrl.u32 %v2369, 7
  %v2371 = vsub.s32 0, %v2370
  %v2372 = vrot.slane %v63, %v2371
  %v2374 = vsel %vm42, %v2357, 0
  %v2377 = vsel %vm42, %v2358, 0
  %v2380 = vsel %vm42, %v2359, 0
  %v2383 = vsel %vm42, %v2360, 0
  %v2386 = vsel %vm42, %v2361, 0
  %v2389 = vsel %vm42, %v2362, 0
  %v2392 = vsel %vm42, %v2363, 0
  %v2395 = vsel %vm42, %v2364, 0
  %v2398 = vsel %vm42, %v2365, 0
  %v2401 = vsel %vm42, %v2366, 0
  %v2404 = vsel %vm42, %v2367, 0
  %v2407 = vsel %vm42, %v2368, 0
  %2409 = vmatprep.subr.mxu0 0.0
  %2410 = vmatpush1.xpose.msra.mxu0 %v2386
  %2411 = vmatprep.subr.mxu0 0.0
  %2412 = vmatpush1.xpose.msra.mxu0 %v2389
  %2413 = vmatprep.subr.mxu0 0.0
  %2414 = vmatpush1.xpose.msra.mxu0 %v2392
  %2415 = vmatprep.subr.mxu0 0.0
  %2416 = vmatpush1.xpose.msra.mxu0 %v2395
  %2417 = vmatprep.subr.mxu0 0.0
  %2418 = vmatpush1.xpose.msra.mxu0 %v2398
  %2419 = vmatprep.subr.mxu0 0.0
  %2420 = vmatpush1.xpose.msra.mxu0 %v2401
  %2421 = vmatprep.subr.mxu0 0.0
  %2422 = vmatpush1.xpose.msra.mxu0 %v2404
  %2423 = vmatprep.subr.mxu0 0.0
  %2424 = vmatpush1.xpose.msra.mxu0 %v2407
  %2425 = vmatprep.subr.mxu0 0.0
  %2426 = vmatpush1.xpose.msra.mxu0 0.0
  %2427 = vmatprep.subr.mxu0 0.0
  %2428 = vmatpush1.xpose.msra.mxu0 0.0
  %2429 = vmatprep.subr.mxu0 0.0
  %2430 = vmatpush1.xpose.msra.mxu0 0.0
  %2431 = vmatprep.subr.mxu0 0.0
  %2432 = vmatpush1.xpose.msra.mxu0 0.0
  %2433 = vmatprep.subr.mxu0 0.0
  %2434 = vmatpush1.xpose.msra.mxu0 0.0
  %2435 = vmatprep.subr.mxu0 0.0
  %2436 = vmatpush1.xpose.msra.mxu0 0.0
  %2437 = vmatprep.subr.mxu0 0.0
  %2438 = vmatpush1.xpose.msra.mxu0 0.0
  %2439 = vmatprep.subr.mxu0 0.0
  %2440 = vmatpush1.xpose.msra.mxu0 0.0
  %2441 = vmatprep.subr.mxu0 0.0
  %2442 = vmatpush1.xpose.msra.mxu0 0.0
  %2443 = vmatprep.subr.mxu0 0.0
  %2444 = vmatpush1.xpose.msra.mxu0 0.0
  %2445 = vmatprep.subr.mxu0 0.0
  %2446 = vmatpush1.xpose.msra.mxu0 0.0
  %2447 = vmatprep.subr.mxu0 0.0
  %2448 = vmatpush1.xpose.msra.mxu0 0.0
  %2449 = vmatprep.subr.mxu0 0.0
  %2450 = vmatpush1.xpose.msra.mxu0 0.0
  %2451 = vmatprep.subr.mxu0 0.0
  %2452 = vmatpush1.xpose.msra.mxu0 0.0
  %2453 = vmatprep.subr.mxu0 0.0
  %2454 = vmatpush1.xpose.msra.mxu0 0.0
  %2455 = vmatprep.subr.mxu0 0.0
  %2456 = vmatpush1.xpose.msra.mxu0 0.0
  %2457 = vmatprep.subr.mxu0 0.0
  %2458 = vmatpush1.xpose.msra.mxu0 0.0
  %2459 = vmatprep.subr.mxu0 0.0
  %2460 = vmatpush1.xpose.msra.mxu0 0.0
  %2461 = vmatprep.subr.mxu0 0.0
  %2462 = vmatpush1.xpose.msra.mxu0 0.0
  %2463 = vmatprep.subr.mxu0 0.0
  %2464 = vmatpush1.xpose.msra.mxu0 0.0
  %2465 = vmatprep.subr.mxu0 0.0
  %2466 = vmatpush1.xpose.msra.mxu0 0.0
  %2467 = vmatprep.subr.mxu0 0.0
  %2468 = vmatpush1.xpose.msra.mxu0 0.0
  %2469 = vmatprep.subr.mxu0 0.0
  %2470 = vmatpush1.xpose.msra.mxu0 0.0
  %2471 = vmatprep.subr.mxu0 0.0
  %2472 = vmatpush1.xpose.msra.mxu0 0.0
  %2473 = vmatprep.mubr.f32.mxu0 0.0
  %2474 = vmatmul.mubr.f32.gmra.mrb[0].mxu0 %v2374
  %v2475 = vpop.f32.mrb[0].mxu0
  %v2476 = vadd.f32 %v2372, %v2475
  %v2477 = vpop.f32.mrb[0].mxu0
  %2478 = vmatprep.mubr.f32.mxu0 0.0
  %2479 = vmatmul.mubr.f32.gmra.mrb[0].mxu0 %v2377
  %v2480 = vpop.f32.mrb[0].mxu0
  %v2481 = vadd.f32 %v2372, %v2480
  %v2482 = vpop.f32.mrb[0].mxu0
  %2483 = vmatprep.mubr.f32.mxu0 0.0
  %2484 = vmatmul.mubr.f32.gmra.mrb[0].mxu0 %v2380
  %v2485 = vpop.f32.mrb[0].mxu0
  %v2486 = vadd.f32 %v2372, %v2485
  %v2487 = vpop.f32.mrb[0].mxu0
  %2488 = vmatprep.mubr.f32.mxu0 0.0
  %2489 = vmatmul.mubr.f32.gmra.mrb[0].mxu0 %v2383
  %v2490 = vpop.f32.mrb[0].mxu0
  %v2491 = vadd.f32 %v2372, %v2490
  %v2492 = vpop.f32.mrb[0].mxu0
  %2493 = vdwg.mxu0
  %v2494 = vmax.f32 %v2476, 0.0
  %v2495 = vmax.f32 %v2481, 0.0
  %v2496 = vmax.f32 %v2486, 0.0
  %v2497 = vmax.f32 %v2491, 0.0
  %v2498 = vld [vmem:[%s8] sm:$0xff]
  %v2499 = vld [vmem:[%s8 + $0x8] sm:$0xff]
  %v2500 = vld [vmem:[%s8 + $0x10] sm:$0xff]
  %v2501 = vld [vmem:[%s8 + $0x18] sm:$0xff]
  %v2502 = vlaneseq
  %v2503 = vshrl.u32 %v2502, 7
  %v2504 = vsub.s32 0, %v2503
  %v2505 = vrot.slane %v60, %v2504
  %vm2506 = vcmask 523264
  %v2508 = vsel %vm2506, %v2494, 0
  %v2511 = vsel %vm2506, %v2495, 0
  %v2514 = vsel %vm2506, %v2496, 0
  %v2517 = vsel %vm2506, %v2497, 0
  %v2520 = vsel %vm2506, %v2498, 0
  %v2523 = vsel %vm2506, %v2499, 0
  %v2526 = vsel %vm2506, %v2500, 0
  %v2529 = vsel %vm2506, %v2501, 0
  %2531 = vmatprep.subr.mxu0 0.0
  %2532 = vmatpush1.xpose.msra.mxu0 %v2520
  %2533 = vmatprep.subr.mxu0 0.0
  %2534 = vmatpush1.xpose.msra.mxu0 %v2523
  %2535 = vmatprep.subr.mxu0 0.0
  %2536 = vmatpush1.xpose.msra.mxu0 %v2526
  %2537 = vmatprep.subr.mxu0 0.0
  %2538 = vmatpush1.xpose.msra.mxu0 %v2529
  %2539 = vmatprep.subr.mxu0 0.0
  %2540 = vmatpush1.xpose.msra.mxu0 0.0
  %2541 = vmatprep.subr.mxu0 0.0
  %2542 = vmatpush1.xpose.msra.mxu0 0.0
  %2543 = vmatprep.subr.mxu0 0.0
  %2544 = vmatpush1.xpose.msra.mxu0 0.0
  %2545 = vmatprep.subr.mxu0 0.0
  %2546 = vmatpush1.xpose.msra.mxu0 0.0
  %2547 = vmatprep.subr.mxu0 0.0
  %2548 = vmatpush1.xpose.msra.mxu0 0.0
  %2549 = vmatprep.subr.mxu0 0.0
  %2550 = vmatpush1.xpose.msra.mxu0 0.0
  %2551 = vmatprep.subr.mxu0 0.0
  %2552 = vmatpush1.xpose.msra.mxu0 0.0
  %2553 = vmatprep.subr.mxu0 0.0
  %2554 = vmatpush1.xpose.msra.mxu0 0.0
  %2555 = vmatprep.subr.mxu0 0.0
  %2556 = vmatpush1.xpose.msra.mxu0 0.0
  %2557 = vmatprep.subr.mxu0 0.0
  %2558 = vmatpush1.xpose.msra.mxu0 0.0
  %2559 = vmatprep.subr.mxu0 0.0
  %2560 = vmatpush1.xpose.msra.mxu0 0.0
  %2561 = vmatprep.subr.mxu0 0.0
  %2562 = vmatpush1.xpose.msra.mxu0 0.0
  %2563 = vmatprep.subr.mxu0 0.0
  %2564 = vmatpush1.xpose.msra.mxu0 0.0
  %2565 = vmatprep.subr.mxu0 0.0
  %2566 = vmatpush1.xpose.msra.mxu0 0.0
  %2567 = vmatprep.subr.mxu0 0.0
  %2568 = vmatpush1.xpose.msra.mxu0 0.0
  %2569 = vmatprep.subr.mxu0 0.0
  %2570 = vmatpush1.xpose.msra.mxu0 0.0
  %2571 = vmatprep.subr.mxu0 0.0
  %2572 = vmatpush1.xpose.msra.mxu0 0.0
  %2573 = vmatprep.subr.mxu0 0.0
  %2574 = vmatpush1.xpose.msra.mxu0 0.0
  %2575 = vmatprep.subr.mxu0 0.0
  %2576 = vmatpush1.xpose.msra.mxu0 0.0
  %2577 = vmatprep.subr.mxu0 0.0
  %2578 = vmatpush1.xpose.msra.mxu0 0.0
  %2579 = vmatprep.subr.mxu0 0.0
  %2580 = vmatpush1.xpose.msra.mxu0 0.0
  %2581 = vmatprep.subr.mxu0 0.0
  %2582 = vmatpush1.xpose.msra.mxu0 0.0
  %2583 = vmatprep.subr.mxu0 0.0
  %2584 = vmatpush1.xpose.msra.mxu0 0.0
  %2585 = vmatprep.subr.mxu0 0.0
  %2586 = vmatpush1.xpose.msra.mxu0 0.0
  %2587 = vmatprep.subr.mxu0 0.0
  %2588 = vmatpush1.xpose.msra.mxu0 0.0
  %2589 = vmatprep.subr.mxu0 0.0
  %2590 = vmatpush1.xpose.msra.mxu0 0.0
  %2591 = vmatprep.subr.mxu0 0.0
  %2592 = vmatpush1.xpose.msra.mxu0 0.0
  %2593 = vmatprep.subr.mxu0 0.0
  %2594 = vmatpush1.xpose.msra.mxu0 0.0
  %2595 = vmatprep.mubr.f32.mxu0 0.0
  %2596 = vmatmul.mubr.f32.gmra.mrb[0].mxu0 %v2508
  %v2597 = vpop.f32.mrb[0].mxu0
  %v2598 = vadd.f32 %v2505, %v2597
  %v2599 = vpop.f32.mrb[0].mxu0
  %2600 = vmatprep.mubr.f32.mxu0 0.0
  %2601 = vmatmul.mubr.f32.gmra.mrb[0].mxu0 %v2511
  %v2602 = vpop.f32.mrb[0].mxu0
  %v2603 = vadd.f32 %v2505, %v2602
  %v2604 = vpop.f32.mrb[0].mxu0
  %2605 = vmatprep.mubr.f32.mxu0 0.0
  %2606 = vmatmul.mubr.f32.gmra.mrb[0].mxu0 %v2514
  %v2607 = vpop.f32.mrb[0].mxu0
  %v2608 = vadd.f32 %v2505, %v2607
  %v2609 = vpop.f32.mrb[0].mxu0
  %2610 = vmatprep.mubr.f32.mxu0 0.0
  %2611 = vmatmul.mubr.f32.gmra.mrb[0].mxu0 %v2517
  %v2612 = vpop.f32.mrb[0].mxu0
  %v2613 = vadd.f32 %v2505, %v2612
  %v2614 = vpop.f32.mrb[0].mxu0
  %2615 = vdwg.mxu0
  %v2616 = vadd.f32 %v2357, %v2598
  %v2617 = vadd.f32 %v2358, %v2603
  %v2618 = vadd.f32 %v2359, %v2608
  %v2619 = vadd.f32 %v2360, %v2613
  %v2620 = vsel %vm42, %v2616, 0.0
  %2621 = vadd.xlane.f32.xlu0 %v2620
  %v2622 = vpop.xlane.xlu0 %2621
  %v2623 = vsel %vm42, %v2617, 0.0
  %2624 = vadd.xlane.f32.xlu0 %v2623
  %v2625 = vpop.xlane.xlu0 %2624
  %v2626 = vsel %vm42, %v2618, 0.0
  %2627 = vadd.xlane.f32.xlu0 %v2626
  %v2628 = vpop.xlane.xlu0 %2627
  %v2629 = vsel %vm42, %v2619, 0.0
  %2630 = vadd.xlane.f32.xlu0 %v2629
  %v2631 = vpop.xlane.xlu0 %2630
  %v2632 = vmul.f32 %v2622, %v2304
  %v2633 = vmul.f32 %v2625, %v2304
  %v2634 = vmul.f32 %v2628, %v2304
  %v2635 = vmul.f32 %v2631, %v2304
  %v2636 = vsub.f32 %v2616, %v2632
  %v2637 = vsub.f32 %v2617, %v2633
  %v2638 = vsub.f32 %v2618, %v2634
  %v2639 = vsub.f32 %v2619, %v2635
  %v2640 = vmul.f32 %v2636, %v2636
  %v2641 = vmul.f32 %v2637, %v2637
  %v2642 = vmul.f32 %v2638, %v2638
  %v2643 = vmul.f32 %v2639, %v2639
  %v2644 = vsel %vm42, %v2640, 0.0
  %2645 = vadd.xlane.f32.xlu0 %v2644
  %v2646 = vpop.xlane.xlu0 %2645
  %v2647 = vsel %vm42, %v2641, 0.0
  %2648 = vadd.xlane.f32.xlu0 %v2647
  %v2649 = vpop.xlane.xlu0 %2648
  %v2650 = vsel %vm42, %v2642, 0.0
  %2651 = vadd.xlane.f32.xlu0 %v2650
  %v2652 = vpop.xlane.xlu0 %2651
  %v2653 = vsel %vm42, %v2643, 0.0
  %2654 = vadd.xlane.f32.xlu0 %v2653
  %v2655 = vpop.xlane.xlu0 %2654
  %v2656 = vmul.f32 %v2646, %v2304
  %v2657 = vmul.f32 %v2649, %v2304
  %v2658 = vmul.f32 %v2652, %v2304
  %v2659 = vmul.f32 %v2655, %v2304
  %v2660 = vadd.f32 %v2656, 1e-05
  %v2661 = vadd.f32 %v2657, 1e-05
  %v2662 = vadd.f32 %v2658, 1e-05
  %v2663 = vadd.f32 %v2659, 1e-05
  %v2664 = vrsqrt.pop %v2660
  %v2665 = vrsqrt.pop %v2661
  %v2666 = vrsqrt.pop %v2662
  %v2667 = vrsqrt.pop %v2663
  %v2668 = vmul.f32 %v2636, %v2664
  %v2669 = vmul.f32 %v2637, %v2665
  %v2670 = vmul.f32 %v2638, %v2666
  %v2671 = vmul.f32 %v2639, %v2667
  %v2672 = vlaneseq
  %v2673 = vshrl.u32 %v2672, 7
  %v2674 = vsub.s32 0, %v2673
  %v2675 = vrot.slane %v61, %v2674
  %v2676 = vmul.f32 %v2668, %v2675
  %v2677 = vmul.f32 %v2669, %v2675
  %v2678 = vmul.f32 %v2670, %v2675
  %v2679 = vmul.f32 %v2671, %v2675
  %v2680 = vlaneseq
  %v2681 = vshrl.u32 %v2680, 7
  %v2682 = vsub.s32 0, %v2681
  %v2683 = vrot.slane %v62, %v2682
  %v2684 = vadd.f32 %v2676, %v2683
  %v2685 = vadd.f32 %v2677, %v2683
  %v2686 = vadd.f32 %v2678, %v2683
  %v2687 = vadd.f32 %v2679, %v2683
  %2688 = vst.msk [vmem:[#allocation2] sm:$0xff] %vm42, %v2684
  %2689 = vst.msk [vmem:[#allocation2 + $0x8] sm:$0xff] %vm42, %v2685
  %2690 = vst.msk [vmem:[#allocation2 + $0x10] sm:$0xff] %vm42, %v2686
  %2691 = vst.msk [vmem:[#allocation2 + $0x18] sm:$0xff] %vm42, %v2687
  %v2692 = vld [vmem:[%s9 + $0xa] sm:$0x1]
  %v2693 = vld [vmem:[%s9 + $0xb] sm:$0x1]
  %v2694 = vld [vmem:[%s9 + $0xc] sm:$0x1]
  %v2695 = vld [vmem:[%s9 + $0xd] sm:$0x1]
  %v2696 = vld [vmem:[%s9 + $0xe] sm:$0x1]
  %v2697 = vld [vmem:[%s9 + $0xf] sm:$0x1]
  %v2698 = vld [vmem:[%s9 + $0x10] sm:$0x1]
  %v2699 = vld [vmem:[%s9 + $0x11] sm:$0x1]
  %v2700 = vld [vmem:[%s9 + $0x12] sm:$0x1]
  %v2701 = vld [vmem:[%s9 + $0x13] sm:$0x1]
  %v2702 = vld [vmem:[%s10 + $0x1] sm:$0x1]
  %s2703 = scalar_lea.vmem %s2, 32
  %v2704 = vld [vmem:[%s2703] sm:$0xff]
  %v2705 = vld [vmem:[%s2703 + $0x8] sm:$0xff]
  %v2706 = vld [vmem:[%s2703 + $0x10] sm:$0xff]
  %v2707 = vld [vmem:[%s2703 + $0x18] sm:$0xff]
  %v2708 = vlaneseq
  %v2709 = vshrl.u32 %v2708, 7
  %v2710 = vsub.s32 0, %v2709
  %v2711 = vrot.slane %v2692, %v2710
  %v2713 = vsel %vm72, %v2704, 0
  %v2716 = vsel %vm72, %v2705, 0
  %v2719 = vsel %vm72, %v2706, 0
  %v2722 = vsel %vm72, %v2707, 0
  %2724 = vmatprep.subr.mxu0 0.0
  %2725 = vmatpush1.xpose.msra.mxu0 %v2713
  %2726 = vmatprep.subr.mxu0 0.0
  %2727 = vmatpush1.xpose.msra.mxu0 %v2716
  %2728 = vmatprep.subr.mxu0 0.0
  %2729 = vmatpush1.xpose.msra.mxu0 %v2719
  %2730 = vmatprep.subr.mxu0 0.0
  %2731 = vmatpush1.xpose.msra.mxu0 %v2722
  %2732 = vmatprep.subr.mxu0 0.0
  %2733 = vmatpush1.xpose.msra.mxu0 0.0
  %2734 = vmatprep.subr.mxu0 0.0
  %2735 = vmatpush1.xpose.msra.mxu0 0.0
  %2736 = vmatprep.subr.mxu0 0.0
  %2737 = vmatpush1.xpose.msra.mxu0 0.0
  %2738 = vmatprep.subr.mxu0 0.0
  %2739 = vmatpush1.xpose.msra.mxu0 0.0
  %2740 = vmatprep.subr.mxu0 0.0
  %2741 = vmatpush1.xpose.msra.mxu0 0.0
  %2742 = vmatprep.subr.mxu0 0.0
  %2743 = vmatpush1.xpose.msra.mxu0 0.0
  %2744 = vmatprep.subr.mxu0 0.0
  %2745 = vmatpush1.xpose.msra.mxu0 0.0
  %2746 = vmatprep.subr.mxu0 0.0
  %2747 = vmatpush1.xpose.msra.mxu0 0.0
  %2748 = vmatprep.subr.mxu0 0.0
  %2749 = vmatpush1.xpose.msra.mxu0 0.0
  %2750 = vmatprep.subr.mxu0 0.0
  %2751 = vmatpush1.xpose.msra.mxu0 0.0
  %2752 = vmatprep.subr.mxu0 0.0
  %2753 = vmatpush1.xpose.msra.mxu0 0.0
  %2754 = vmatprep.subr.mxu0 0.0
  %2755 = vmatpush1.xpose.msra.mxu0 0.0
  %2756 = vmatprep.subr.mxu0 0.0
  %2757 = vmatpush1.xpose.msra.mxu0 0.0
  %2758 = vmatprep.subr.mxu0 0.0
  %2759 = vmatpush1.xpose.msra.mxu0 0.0
  %2760 = vmatprep.subr.mxu0 0.0
  %2761 = vmatpush1.xpose.msra.mxu0 0.0
  %2762 = vmatprep.subr.mxu0 0.0
  %2763 = vmatpush1.xpose.msra.mxu0 0.0
  %2764 = vmatprep.subr.mxu0 0.0
  %2765 = vmatpush1.xpose.msra.mxu0 0.0
  %2766 = vmatprep.subr.mxu0 0.0
  %2767 = vmatpush1.xpose.msra.mxu0 0.0
  %2768 = vmatprep.subr.mxu0 0.0
  %2769 = vmatpush1.xpose.msra.mxu0 0.0
  %2770 = vmatprep.subr.mxu0 0.0
  %2771 = vmatpush1.xpose.msra.mxu0 0.0
  %2772 = vmatprep.subr.mxu0 0.0
  %2773 = vmatpush1.xpose.msra.mxu0 0.0
  %2774 = vmatprep.subr.mxu0 0.0
  %2775 = vmatpush1.xpose.msra.mxu0 0.0
  %2776 = vmatprep.subr.mxu0 0.0
  %2777 = vmatpush1.xpose.msra.mxu0 0.0
  %2778 = vmatprep.subr.mxu0 0.0
  %2779 = vmatpush1.xpose.msra.mxu0 0.0
  %2780 = vmatprep.subr.mxu0 0.0
  %2781 = vmatpush1.xpose.msra.mxu0 0.0
  %2782 = vmatprep.subr.mxu0 0.0
  %2783 = vmatpush1.xpose.msra.mxu0 0.0
  %2784 = vmatprep.subr.mxu0 0.0
  %2785 = vmatpush1.xpose.msra.mxu0 0.0
  %2786 = vmatprep.subr.mxu0 0.0
  %2787 = vmatpush1.xpose.msra.mxu0 0.0
  %2788 = vmatprep.mubr.f32.mxu0 0.0
  %2789 = vmatmul.mubr.f32.gmra.mrb[0].mxu0 %v74
  %v2790 = vpop.f32.mrb[0].mxu0
  %v2791 = vadd.f32 %v2711, %v2790
  %v2792 = vpop.f32.mrb[0].mxu0
  %2793 = vmatprep.mubr.f32.mxu0 0.0
  %2794 = vmatmul.mubr.f32.gmra.mrb[0].mxu0 %v77
  %v2795 = vpop.f32.mrb[0].mxu0
  %v2796 = vadd.f32 %v2711, %v2795
  %v2797 = vpop.f32.mrb[0].mxu0
  %2798 = vdwg.mxu0
  %2799 = vst.msk [vmem:[#allocation2 + $0x8] sm:$0xff] %vm42, %v2791
  %2800 = vst.msk [vmem:[#allocation2 + $0x18] sm:$0xff] %vm42, %v2796
  %v2801 = vld [vmem:[#allocation2] sm:$0xff]
  %v2802 = vld [vmem:[#allocation2 + $0x8] sm:$0xff]
  %v2803 = vld [vmem:[#allocation2 + $0x10] sm:$0xff]
  %v2804 = vld [vmem:[#allocation2 + $0x18] sm:$0xff]
  %s2805 = scalar_lea.vmem %s3, 32
  %v2806 = vld [vmem:[%s2805] sm:$0xff]
  %v2807 = vld [vmem:[%s2805 + $0x8] sm:$0xff]
  %v2808 = vld [vmem:[%s2805 + $0x10] sm:$0xff]
  %v2809 = vld [vmem:[%s2805 + $0x18] sm:$0xff]
  %v2810 = vlaneseq
  %v2811 = vshrl.u32 %v2810, 7
  %v2812 = vsub.s32 0, %v2811
  %v2813 = vrot.slane %v2693, %v2812
  %v2815 = vsel %vm42, %v2801, 0
  %v2818 = vsel %vm42, %v2802, 0
  %v2821 = vsel %vm42, %v2803, 0
  %v2824 = vsel %vm42, %v2804, 0
  %v2827 = vsel %vm42, %v2806, 0
  %v2830 = vsel %vm42, %v2807, 0
  %v2833 = vsel %vm42, %v2808, 0
  %v2836 = vsel %vm42, %v2809, 0
  %2838 = vmatprep.subr.mxu0 0.0
  %2839 = vmatpush1.xpose.msra.mxu0 %v2827
  %2840 = vmatprep.subr.mxu0 0.0
  %2841 = vmatpush1.xpose.msra.mxu0 %v2830
  %2842 = vmatprep.subr.mxu0 0.0
  %2843 = vmatpush1.xpose.msra.mxu0 %v2833
  %2844 = vmatprep.subr.mxu0 0.0
  %2845 = vmatpush1.xpose.msra.mxu0 %v2836
  %2846 = vmatprep.subr.mxu0 0.0
  %2847 = vmatpush1.xpose.msra.mxu0 0.0
  %2848 = vmatprep.subr.mxu0 0.0
  %2849 = vmatpush1.xpose.msra.mxu0 0.0
  %2850 = vmatprep.subr.mxu0 0.0
  %2851 = vmatpush1.xpose.msra.mxu0 0.0
  %2852 = vmatprep.subr.mxu0 0.0
  %2853 = vmatpush1.xpose.msra.mxu0 0.0
  %2854 = vmatprep.subr.mxu0 0.0
  %2855 = vmatpush1.xpose.msra.mxu0 0.0
  %2856 = vmatprep.subr.mxu0 0.0
  %2857 = vmatpush1.xpose.msra.mxu0 0.0
  %2858 = vmatprep.subr.mxu0 0.0
  %2859 = vmatpush1.xpose.msra.mxu0 0.0
  %2860 = vmatprep.subr.mxu0 0.0
  %2861 = vmatpush1.xpose.msra.mxu0 0.0
  %2862 = vmatprep.subr.mxu0 0.0
  %2863 = vmatpush1.xpose.msra.mxu0 0.0
  %2864 = vmatprep.subr.mxu0 0.0
  %2865 = vmatpush1.xpose.msra.mxu0 0.0
  %2866 = vmatprep.subr.mxu0 0.0
  %2867 = vmatpush1.xpose.msra.mxu0 0.0
  %2868 = vmatprep.subr.mxu0 0.0
  %2869 = vmatpush1.xpose.msra.mxu0 0.0
  %2870 = vmatprep.subr.mxu0 0.0
  %2871 = vmatpush1.xpose.msra.mxu0 0.0
  %2872 = vmatprep.subr.mxu0 0.0
  %2873 = vmatpush1.xpose.msra.mxu0 0.0
  %2874 = vmatprep.subr.mxu0 0.0
  %2875 = vmatpush1.xpose.msra.mxu0 0.0
  %2876 = vmatprep.subr.mxu0 0.0
  %2877 = vmatpush1.xpose.msra.mxu0 0.0
  %2878 = vmatprep.subr.mxu0 0.0
  %2879 = vmatpush1.xpose.msra.mxu0 0.0
  %2880 = vmatprep.subr.mxu0 0.0
  %2881 = vmatpush1.xpose.msra.mxu0 0.0
  %2882 = vmatprep.subr.mxu0 0.0
  %2883 = vmatpush1.xpose.msra.mxu0 0.0
  %2884 = vmatprep.subr.mxu0 0.0
  %2885 = vmatpush1.xpose.msra.mxu0 0.0
  %2886 = vmatprep.subr.mxu0 0.0
  %2887 = vmatpush1.xpose.msra.mxu0 0.0
  %2888 = vmatprep.subr.mxu0 0.0
  %2889 = vmatpush1.xpose.msra.mxu0 0.0
  %2890 = vmatprep.subr.mxu0 0.0
  %2891 = vmatpush1.xpose.msra.mxu0 0.0
  %2892 = vmatprep.subr.mxu0 0.0
  %2893 = vmatpush1.xpose.msra.mxu0 0.0
  %2894 = vmatprep.subr.mxu0 0.0
  %2895 = vmatpush1.xpose.msra.mxu0 0.0
  %2896 = vmatprep.subr.mxu0 0.0
  %2897 = vmatpush1.xpose.msra.mxu0 0.0
  %2898 = vmatprep.subr.mxu0 0.0
  %2899 = vmatpush1.xpose.msra.mxu0 0.0
  %2900 = vmatprep.subr.mxu0 0.0
  %2901 = vmatpush1.xpose.msra.mxu0 0.0
  %2902 = vmatprep.mubr.f32.mxu0 0.0
  %2903 = vmatmul.mubr.f32.gmra.mrb[0].mxu0 %v2815
  %v2904 = vpop.f32.mrb[0].mxu0
  %v2905 = vadd.f32 %v2813, %v2904
  %v2906 = vpop.f32.mrb[0].mxu0
  %2907 = vmatprep.mubr.f32.mxu0 0.0
  %2908 = vmatmul.mubr.f32.gmra.mrb[0].mxu0 %v2818
  %v2909 = vpop.f32.mrb[0].mxu0
  %v2910 = vadd.f32 %v2813, %v2909
  %v2911 = vpop.f32.mrb[0].mxu0
  %2912 = vmatprep.mubr.f32.mxu0 0.0
  %2913 = vmatmul.mubr.f32.gmra.mrb[0].mxu0 %v2821
  %v2914 = vpop.f32.mrb[0].mxu0
  %v2915 = vadd.f32 %v2813, %v2914
  %v2916 = vpop.f32.mrb[0].mxu0
  %2917 = vmatprep.mubr.f32.mxu0 0.0
  %2918 = vmatmul.mubr.f32.gmra.mrb[0].mxu0 %v2824
  %v2919 = vpop.f32.mrb[0].mxu0
  %v2920 = vadd.f32 %v2813, %v2919
  %v2921 = vpop.f32.mrb[0].mxu0
  %2922 = vdwg.mxu0
  %v2923 = vmul.f32 %v2905, 0.35355338
  %v2924 = vmul.f32 %v2910, 0.35355338
  %v2925 = vmul.f32 %v2915, 0.35355338
  %v2926 = vmul.f32 %v2920, 0.35355338
  %s2927 = scalar_lea.vmem %s4, 32
  %v2928 = vld [vmem:[%s2927] sm:$0xff]
  %v2929 = vld [vmem:[%s2927 + $0x8] sm:$0xff]
  %v2930 = vld [vmem:[%s2927 + $0x10] sm:$0xff]
  %v2931 = vld [vmem:[%s2927 + $0x18] sm:$0xff]
  %v2932 = vlaneseq
  %v2933 = vshrl.u32 %v2932, 7
  %v2934 = vsub.s32 0, %v2933
  %v2935 = vrot.slane %v2694, %v2934
  %v2937 = vsel %vm42, %v2928, 0
  %v2940 = vsel %vm42, %v2929, 0
  %v2943 = vsel %vm42, %v2930, 0
  %v2946 = vsel %vm42, %v2931, 0
  %2948 = vmatprep.subr.mxu0 0.0
  %2949 = vmatpush1.xpose.msra.mxu0 %v2937
  %2950 = vmatprep.subr.mxu0 0.0
  %2951 = vmatpush1.xpose.msra.mxu0 %v2940
  %2952 = vmatprep.subr.mxu0 0.0
  %2953 = vmatpush1.xpose.msra.mxu0 %v2943
  %2954 = vmatprep.subr.mxu0 0.0
  %2955 = vmatpush1.xpose.msra.mxu0 %v2946
  %2956 = vmatprep.subr.mxu0 0.0
  %2957 = vmatpush1.xpose.msra.mxu0 0.0
  %2958 = vmatprep.subr.mxu0 0.0
  %2959 = vmatpush1.xpose.msra.mxu0 0.0
  %2960 = vmatprep.subr.mxu0 0.0
  %2961 = vmatpush1.xpose.msra.mxu0 0.0
  %2962 = vmatprep.subr.mxu0 0.0
  %2963 = vmatpush1.xpose.msra.mxu0 0.0
  %2964 = vmatprep.subr.mxu0 0.0
  %2965 = vmatpush1.xpose.msra.mxu0 0.0
  %2966 = vmatprep.subr.mxu0 0.0
  %2967 = vmatpush1.xpose.msra.mxu0 0.0
  %2968 = vmatprep.subr.mxu0 0.0
  %2969 = vmatpush1.xpose.msra.mxu0 0.0
  %2970 = vmatprep.subr.mxu0 0.0
  %2971 = vmatpush1.xpose.msra.mxu0 0.0
  %2972 = vmatprep.subr.mxu0 0.0
  %2973 = vmatpush1.xpose.msra.mxu0 0.0
  %2974 = vmatprep.subr.mxu0 0.0
  %2975 = vmatpush1.xpose.msra.mxu0 0.0
  %2976 = vmatprep.subr.mxu0 0.0
  %2977 = vmatpush1.xpose.msra.mxu0 0.0
  %2978 = vmatprep.subr.mxu0 0.0
  %2979 = vmatpush1.xpose.msra.mxu0 0.0
  %2980 = vmatprep.subr.mxu0 0.0
  %2981 = vmatpush1.xpose.msra.mxu0 0.0
  %2982 = vmatprep.subr.mxu0 0.0
  %2983 = vmatpush1.xpose.msra.mxu0 0.0
  %2984 = vmatprep.subr.mxu0 0.0
  %2985 = vmatpush1.xpose.msra.mxu0 0.0
  %2986 = vmatprep.subr.mxu0 0.0
  %2987 = vmatpush1.xpose.msra.mxu0 0.0
  %2988 = vmatprep.subr.mxu0 0.0
  %2989 = vmatpush1.xpose.msra.mxu0 0.0
  %2990 = vmatprep.subr.mxu0 0.0
  %2991 = vmatpush1.xpose.msra.mxu0 0.0
  %2992 = vmatprep.subr.mxu0 0.0
  %2993 = vmatpush1.xpose.msra.mxu0 0.0
  %2994 = vmatprep.subr.mxu0 0.0
  %2995 = vmatpush1.xpose.msra.mxu0 0.0
  %2996 = vmatprep.subr.mxu0 0.0
  %2997 = vmatpush1.xpose.msra.mxu0 0.0
  %2998 = vmatprep.subr.mxu0 0.0
  %2999 = vmatpush1.xpose.msra.mxu0 0.0
  %3000 = vmatprep.subr.mxu0 0.0
  %3001 = vmatpush1.xpose.msra.mxu0 0.0
  %3002 = vmatprep.subr.mxu0 0.0
  %3003 = vmatpush1.xpose.msra.mxu0 0.0
  %3004 = vmatprep.subr.mxu0 0.0
  %3005 = vmatpush1.xpose.msra.mxu0 0.0
  %3006 = vmatprep.subr.mxu0 0.0
  %3007 = vmatpush1.xpose.msra.mxu0 0.0
  %3008 = vmatprep.subr.mxu0 0.0
  %3009 = vmatpush1.xpose.msra.mxu0 0.0
  %3010 = vmatprep.subr.mxu0 0.0
  %3011 = vmatpush1.xpose.msra.mxu0 0.0
  %3012 = vmatprep.mubr.f32.mxu0 0.0
  %3013 = vmatmul.mubr.f32.gmra.mrb[0].mxu0 %v2815
  %v3014 = vpop.f32.mrb[0].mxu0
  %v3015 = vadd.f32 %v2935, %v3014
  %v3016 = vpop.f32.mrb[0].mxu0
  %3017 = vmatprep.mubr.f32.mxu0 0.0
  %3018 = vmatmul.mubr.f32.gmra.mrb[0].mxu0 %v2818
  %v3019 = vpop.f32.mrb[0].mxu0
  %v3020 = vadd.f32 %v2935, %v3019
  %v3021 = vpop.f32.mrb[0].mxu0
  %3022 = vmatprep.mubr.f32.mxu0 0.0
  %3023 = vmatmul.mubr.f32.gmra.mrb[0].mxu0 %v2821
  %v3024 = vpop.f32.mrb[0].mxu0
  %v3025 = vadd.f32 %v2935, %v3024
  %v3026 = vpop.f32.mrb[0].mxu0
  %3027 = vmatprep.mubr.f32.mxu0 0.0
  %3028 = vmatmul.mubr.f32.gmra.mrb[0].mxu0 %v2824
  %v3029 = vpop.f32.mrb[0].mxu0
  %v3030 = vadd.f32 %v2935, %v3029
  %v3031 = vpop.f32.mrb[0].mxu0
  %3032 = vdwg.mxu0
  %s3033 = scalar_lea.vmem %s5, 32
  %v3034 = vld [vmem:[%s3033] sm:$0xff]
  %v3035 = vld [vmem:[%s3033 + $0x8] sm:$0xff]
  %v3036 = vld [vmem:[%s3033 + $0x10] sm:$0xff]
  %v3037 = vld [vmem:[%s3033 + $0x18] sm:$0xff]
  %v3038 = vlaneseq
  %v3039 = vshrl.u32 %v3038, 7
  %v3040 = vsub.s32 0, %v3039
  %v3041 = vrot.slane %v2695, %v3040
  %v3043 = vsel %vm42, %v3034, 0
  %v3046 = vsel %vm42, %v3035, 0
  %v3049 = vsel %vm42, %v3036, 0
  %v3052 = vsel %vm42, %v3037, 0
  %3054 = vmatprep.subr.mxu0 0.0
  %3055 = vmatpush1.xpose.msra.mxu0 %v3043
  %3056 = vmatprep.subr.mxu0 0.0
  %3057 = vmatpush1.xpose.msra.mxu0 %v3046
  %3058 = vmatprep.subr.mxu0 0.0
  %3059 = vmatpush1.xpose.msra.mxu0 %v3049
  %3060 = vmatprep.subr.mxu0 0.0
  %3061 = vmatpush1.xpose.msra.mxu0 %v3052
  %3062 = vmatprep.subr.mxu0 0.0
  %3063 = vmatpush1.xpose.msra.mxu0 0.0
  %3064 = vmatprep.subr.mxu0 0.0
  %3065 = vmatpush1.xpose.msra.mxu0 0.0
  %3066 = vmatprep.subr.mxu0 0.0
  %3067 = vmatpush1.xpose.msra.mxu0 0.0
  %3068 = vmatprep.subr.mxu0 0.0
  %3069 = vmatpush1.xpose.msra.mxu0 0.0
  %3070 = vmatprep.subr.mxu0 0.0
  %3071 = vmatpush1.xpose.msra.mxu0 0.0
  %3072 = vmatprep.subr.mxu0 0.0
  %3073 = vmatpush1.xpose.msra.mxu0 0.0
  %3074 = vmatprep.subr.mxu0 0.0
  %3075 = vmatpush1.xpose.msra.mxu0 0.0
  %3076 = vmatprep.subr.mxu0 0.0
  %3077 = vmatpush1.xpose.msra.mxu0 0.0
  %3078 = vmatprep.subr.mxu0 0.0
  %3079 = vmatpush1.xpose.msra.mxu0 0.0
  %3080 = vmatprep.subr.mxu0 0.0
  %3081 = vmatpush1.xpose.msra.mxu0 0.0
  %3082 = vmatprep.subr.mxu0 0.0
  %3083 = vmatpush1.xpose.msra.mxu0 0.0
  %3084 = vmatprep.subr.mxu0 0.0
  %3085 = vmatpush1.xpose.msra.mxu0 0.0
  %3086 = vmatprep.subr.mxu0 0.0
  %3087 = vmatpush1.xpose.msra.mxu0 0.0
  %3088 = vmatprep.subr.mxu0 0.0
  %3089 = vmatpush1.xpose.msra.mxu0 0.0
  %3090 = vmatprep.subr.mxu0 0.0
  %3091 = vmatpush1.xpose.msra.mxu0 0.0
  %3092 = vmatprep.subr.mxu0 0.0
  %3093 = vmatpush1.xpose.msra.mxu0 0.0
  %3094 = vmatprep.subr.mxu0 0.0
  %3095 = vmatpush1.xpose.msra.mxu0 0.0
  %3096 = vmatprep.subr.mxu0 0.0
  %3097 = vmatpush1.xpose.msra.mxu0 0.0
  %3098 = vmatprep.subr.mxu0 0.0
  %3099 = vmatpush1.xpose.msra.mxu0 0.0
  %3100 = vmatprep.subr.mxu0 0.0
  %3101 = vmatpush1.xpose.msra.mxu0 0.0
  %3102 = vmatprep.subr.mxu0 0.0
  %3103 = vmatpush1.xpose.msra.mxu0 0.0
  %3104 = vmatprep.subr.mxu0 0.0
  %3105 = vmatpush1.xpose.msra.mxu0 0.0
  %3106 = vmatprep.subr.mxu0 0.0
  %3107 = vmatpush1.xpose.msra.mxu0 0.0
  %3108 = vmatprep.subr.mxu0 0.0
  %3109 = vmatpush1.xpose.msra.mxu0 0.0
  %3110 = vmatprep.subr.mxu0 0.0
  %3111 = vmatpush1.xpose.msra.mxu0 0.0
  %3112 = vmatprep.subr.mxu0 0.0
  %3113 = vmatpush1.xpose.msra.mxu0 0.0
  %3114 = vmatprep.subr.mxu0 0.0
  %3115 = vmatpush1.xpose.msra.mxu0 0.0
  %3116 = vmatprep.subr.mxu0 0.0
  %3117 = vmatpush1.xpose.msra.mxu0 0.0
  %3118 = vmatprep.mubr.f32.mxu0 0.0
  %3119 = vmatmul.mubr.f32.gmra.mrb[0].mxu0 %v2815
  %v3120 = vpop.f32.mrb[0].mxu0
  %v3121 = vadd.f32 %v3041, %v3120
  %v3122 = vpop.f32.mrb[0].mxu0
  %3123 = vmatprep.mubr.f32.mxu0 0.0
  %3124 = vmatmul.mubr.f32.gmra.mrb[0].mxu0 %v2818
  %v3125 = vpop.f32.mrb[0].mxu0
  %v3126 = vadd.f32 %v3041, %v3125
  %v3127 = vpop.f32.mrb[0].mxu0
  %3128 = vmatprep.mubr.f32.mxu0 0.0
  %3129 = vmatmul.mubr.f32.gmra.mrb[0].mxu0 %v2821
  %v3130 = vpop.f32.mrb[0].mxu0
  %v3131 = vadd.f32 %v3041, %v3130
  %v3132 = vpop.f32.mrb[0].mxu0
  %3133 = vmatprep.mubr.f32.mxu0 0.0
  %3134 = vmatmul.mubr.f32.gmra.mrb[0].mxu0 %v2824
  %v3135 = vpop.f32.mrb[0].mxu0
  %v3136 = vadd.f32 %v3041, %v3135
  %v3137 = vpop.f32.mrb[0].mxu0
  %3138 = vdwg.mxu0
  %v3140 = vsel %vm503, %v2923, 0
  %v3143 = vsel %vm503, %v2924, 0
  %v3146 = vsel %vm503, %v3015, 0
  %v3149 = vsel %vm503, %v3020, 0
  %3151 = vmatprep.subr.mxu0 0.0
  %3152 = vmatpush1.xpose.msra.mxu0 %v3146
  %3153 = vmatprep.subr.mxu0 0.0
  %3154 = vmatpush1.xpose.msra.mxu0 %v3149
  %3155 = vmatprep.subr.mxu0 0.0
  %3156 = vmatpush1.xpose.msra.mxu0 0.0
  %3157 = vmatprep.subr.mxu0 0.0
  %3158 = vmatpush1.xpose.msra.mxu0 0.0
  %3159 = vmatprep.subr.mxu0 0.0
  %3160 = vmatpush1.xpose.msra.mxu0 0.0
  %3161 = vmatprep.subr.mxu0 0.0
  %3162 = vmatpush1.xpose.msra.mxu0 0.0
  %3163 = vmatprep.subr.mxu0 0.0
  %3164 = vmatpush1.xpose.msra.mxu0 0.0
  %3165 = vmatprep.subr.mxu0 0.0
  %3166 = vmatpush1.xpose.msra.mxu0 0.0
  %3167 = vmatprep.subr.mxu0 0.0
  %3168 = vmatpush1.xpose.msra.mxu0 0.0
  %3169 = vmatprep.subr.mxu0 0.0
  %3170 = vmatpush1.xpose.msra.mxu0 0.0
  %3171 = vmatprep.subr.mxu0 0.0
  %3172 = vmatpush1.xpose.msra.mxu0 0.0
  %3173 = vmatprep.subr.mxu0 0.0
  %3174 = vmatpush1.xpose.msra.mxu0 0.0
  %3175 = vmatprep.subr.mxu0 0.0
  %3176 = vmatpush1.xpose.msra.mxu0 0.0
  %3177 = vmatprep.subr.mxu0 0.0
  %3178 = vmatpush1.xpose.msra.mxu0 0.0
  %3179 = vmatprep.subr.mxu0 0.0
  %3180 = vmatpush1.xpose.msra.mxu0 0.0
  %3181 = vmatprep.subr.mxu0 0.0
  %3182 = vmatpush1.xpose.msra.mxu0 0.0
  %3183 = vmatprep.subr.mxu0 0.0
  %3184 = vmatpush1.xpose.msra.mxu0 0.0
  %3185 = vmatprep.subr.mxu0 0.0
  %3186 = vmatpush1.xpose.msra.mxu0 0.0
  %3187 = vmatprep.subr.mxu0 0.0
  %3188 = vmatpush1.xpose.msra.mxu0 0.0
  %3189 = vmatprep.subr.mxu0 0.0
  %3190 = vmatpush1.xpose.msra.mxu0 0.0
  %3191 = vmatprep.subr.mxu0 0.0
  %3192 = vmatpush1.xpose.msra.mxu0 0.0
  %3193 = vmatprep.subr.mxu0 0.0
  %3194 = vmatpush1.xpose.msra.mxu0 0.0
  %3195 = vmatprep.subr.mxu0 0.0
  %3196 = vmatpush1.xpose.msra.mxu0 0.0
  %3197 = vmatprep.subr.mxu0 0.0
  %3198 = vmatpush1.xpose.msra.mxu0 0.0
  %3199 = vmatprep.subr.mxu0 0.0
  %3200 = vmatpush1.xpose.msra.mxu0 0.0
  %3201 = vmatprep.subr.mxu0 0.0
  %3202 = vmatpush1.xpose.msra.mxu0 0.0
  %3203 = vmatprep.subr.mxu0 0.0
  %3204 = vmatpush1.xpose.msra.mxu0 0.0
  %3205 = vmatprep.subr.mxu0 0.0
  %3206 = vmatpush1.xpose.msra.mxu0 0.0
  %3207 = vmatprep.subr.mxu0 0.0
  %3208 = vmatpush1.xpose.msra.mxu0 0.0
  %3209 = vmatprep.subr.mxu0 0.0
  %3210 = vmatpush1.xpose.msra.mxu0 0.0
  %3211 = vmatprep.subr.mxu0 0.0
  %3212 = vmatpush1.xpose.msra.mxu0 0.0
  %3213 = vmatprep.subr.mxu0 0.0
  %3214 = vmatpush1.xpose.msra.mxu0 0.0
  %3215 = vmatprep.mubr.f32.mxu0 0.0
  %3216 = vmatmul.mubr.f32.gmra.mrb[0].mxu0 %v3140
  %v3217 = vpop.f32.mrb[0].mxu0
  %v3218 = vadd.f32 0.0, %v3217
  %v3219 = vpop.f32.mrb[0].mxu0
  %3220 = vmatprep.mubr.f32.mxu0 0.0
  %3221 = vmatmul.mubr.f32.gmra.mrb[0].mxu0 %v3143
  %v3222 = vpop.f32.mrb[0].mxu0
  %v3223 = vadd.f32 0.0, %v3222
  %v3224 = vpop.f32.mrb[0].mxu0
  %3225 = vdwg.mxu0
  %v3226 = vsel %vm591, %v3218, -inf
  %3227 = vmax.xlane.f32.xlu0 %v3226
  %v3228 = vpop.xlane.xlu0 %3227
  %v3229 = vsel %vm595, %v3223, -inf
  %3230 = vmax.xlane.f32.xlu0 %v3229
  %v3231 = vpop.xlane.xlu0 %3230
  %v3232 = vsub.f32 %v3218, %v3228
  %v3233 = vsub.f32 %v3223, %v3231
  %v3234 = vmul.f32 %v3232, 1.442695
  %v3235 = vpow.pop %v3234
  %v3236 = vmul.f32 %v3233, 1.442695
  %v3237 = vpow.pop %v3236
  %v3238 = vsel %vm591, %v3235, 0.0
  %3239 = vadd.xlane.f32.xlu0 %v3238
  %v3240 = vpop.xlane.xlu0 %3239
  %v3241 = vsel %vm595, %v3237, 0.0
  %3242 = vadd.xlane.f32.xlu0 %v3241
  %v3243 = vpop.xlane.xlu0 %3242
  %v3244 = vrcp.pop %v3240
  %v3245 = vmul.f32 %v3235, %v3244
  %v3246 = vrcp.pop %v3243
  %v3247 = vmul.f32 %v3237, %v3246
  %v3249 = vsel %vm591, %v3245, 0
  %v3252 = vsel %vm591, %v3247, 0
  %v3255 = vsel %vm621, %v3126, 0
  %3257 = vmatprep.subr.mxu0 0.0
  %3258 = vmatpush1.msra.mxu0 %v3121
  %3259 = vmatprep.subr.mxu0 0.0
  %3260 = vmatpush1.msra.mxu0 %v3255
  %3261 = vmatprep.subr.mxu0 0.0
  %3262 = vmatpush1.msra.mxu0 0.0
  %3263 = vmatprep.subr.mxu0 0.0
  %3264 = vmatpush1.msra.mxu0 0.0
  %3265 = vmatprep.subr.mxu0 0.0
  %3266 = vmatpush1.msra.mxu0 0.0
  %3267 = vmatprep.subr.mxu0 0.0
  %3268 = vmatpush1.msra.mxu0 0.0
  %3269 = vmatprep.subr.mxu0 0.0
  %3270 = vmatpush1.msra.mxu0 0.0
  %3271 = vmatprep.subr.mxu0 0.0
  %3272 = vmatpush1.msra.mxu0 0.0
  %3273 = vmatprep.subr.mxu0 0.0
  %3274 = vmatpush1.msra.mxu0 0.0
  %3275 = vmatprep.subr.mxu0 0.0
  %3276 = vmatpush1.msra.mxu0 0.0
  %3277 = vmatprep.subr.mxu0 0.0
  %3278 = vmatpush1.msra.mxu0 0.0
  %3279 = vmatprep.subr.mxu0 0.0
  %3280 = vmatpush1.msra.mxu0 0.0
  %3281 = vmatprep.subr.mxu0 0.0
  %3282 = vmatpush1.msra.mxu0 0.0
  %3283 = vmatprep.subr.mxu0 0.0
  %3284 = vmatpush1.msra.mxu0 0.0
  %3285 = vmatprep.subr.mxu0 0.0
  %3286 = vmatpush1.msra.mxu0 0.0
  %3287 = vmatprep.subr.mxu0 0.0
  %3288 = vmatpush1.msra.mxu0 0.0
  %3289 = vmatprep.subr.mxu0 0.0
  %3290 = vmatpush1.msra.mxu0 0.0
  %3291 = vmatprep.subr.mxu0 0.0
  %3292 = vmatpush1.msra.mxu0 0.0
  %3293 = vmatprep.subr.mxu0 0.0
  %3294 = vmatpush1.msra.mxu0 0.0
  %3295 = vmatprep.subr.mxu0 0.0
  %3296 = vmatpush1.msra.mxu0 0.0
  %3297 = vmatprep.subr.mxu0 0.0
  %3298 = vmatpush1.msra.mxu0 0.0
  %3299 = vmatprep.subr.mxu0 0.0
  %3300 = vmatpush1.msra.mxu0 0.0
  %3301 = vmatprep.subr.mxu0 0.0
  %3302 = vmatpush1.msra.mxu0 0.0
  %3303 = vmatprep.subr.mxu0 0.0
  %3304 = vmatpush1.msra.mxu0 0.0
  %3305 = vmatprep.subr.mxu0 0.0
  %3306 = vmatpush1.msra.mxu0 0.0
  %3307 = vmatprep.subr.mxu0 0.0
  %3308 = vmatpush1.msra.mxu0 0.0
  %3309 = vmatprep.subr.mxu0 0.0
  %3310 = vmatpush1.msra.mxu0 0.0
  %3311 = vmatprep.subr.mxu0 0.0
  %3312 = vmatpush1.msra.mxu0 0.0
  %3313 = vmatprep.subr.mxu0 0.0
  %3314 = vmatpush1.msra.mxu0 0.0
  %3315 = vmatprep.subr.mxu0 0.0
  %3316 = vmatpush1.msra.mxu0 0.0
  %3317 = vmatprep.subr.mxu0 0.0
  %3318 = vmatpush1.msra.mxu0 0.0
  %3319 = vmatprep.subr.mxu0 0.0
  %3320 = vmatpush1.msra.mxu0 0.0
  %3321 = vmatprep.mubr.f32.mxu0 0.0
  %3322 = vmatmul.mubr.f32.gmra.mrb[0].mxu0 %v3249
  %v3323 = vpop.f32.mrb[0].mxu0
  %v3324 = vadd.f32 0.0, %v3323
  %v3325 = vpop.f32.mrb[0].mxu0
  %3326 = vmatprep.mubr.f32.mxu0 0.0
  %3327 = vmatmul.mubr.f32.gmra.mrb[0].mxu0 %v3252
  %v3328 = vpop.f32.mrb[0].mxu0
  %v3329 = vadd.f32 0.0, %v3328
  %v3330 = vpop.f32.mrb[0].mxu0
  %3331 = vdwg.mxu0
  %3332 = vrot.lane.b32.xlu0 %v2923, 120
  %v3333 = vpop.permute.xlu0 %3332
  %3334 = vrot.lane.b32.xlu0 %v2924, 120
  %v3335 = vpop.permute.xlu0 %3334
  %3336 = vrot.lane.b32.xlu0 %v3015, 120
  %v3337 = vpop.permute.xlu0 %3336
  %3338 = vrot.lane.b32.xlu0 %v3020, 120
  %v3339 = vpop.permute.xlu0 %3338
  %v3340 = vsel %vm503, %v3333, 0
  %v3342 = vsel %vm503, %v3335, 0
  %v3344 = vsel %vm503, %v3337, 0
  %v3346 = vsel %vm503, %v3339, 0
  %3348 = vmatprep.subr.mxu0 0.0
  %3349 = vmatpush1.xpose.msra.mxu0 %v3344
  %3350 = vmatprep.subr.mxu0 0.0
  %3351 = vmatpush1.xpose.msra.mxu0 %v3346
  %3352 = vmatprep.subr.mxu0 0.0
  %3353 = vmatpush1.xpose.msra.mxu0 0.0
  %3354 = vmatprep.subr.mxu0 0.0
  %3355 = vmatpush1.xpose.msra.mxu0 0.0
  %3356 = vmatprep.subr.mxu0 0.0
  %3357 = vmatpush1.xpose.msra.mxu0 0.0
  %3358 = vmatprep.subr.mxu0 0.0
  %3359 = vmatpush1.xpose.msra.mxu0 0.0
  %3360 = vmatprep.subr.mxu0 0.0
  %3361 = vmatpush1.xpose.msra.mxu0 0.0
  %3362 = vmatprep.subr.mxu0 0.0
  %3363 = vmatpush1.xpose.msra.mxu0 0.0
  %3364 = vmatprep.subr.mxu0 0.0
  %3365 = vmatpush1.xpose.msra.mxu0 0.0
  %3366 = vmatprep.subr.mxu0 0.0
  %3367 = vmatpush1.xpose.msra.mxu0 0.0
  %3368 = vmatprep.subr.mxu0 0.0
  %3369 = vmatpush1.xpose.msra.mxu0 0.0
  %3370 = vmatprep.subr.mxu0 0.0
  %3371 = vmatpush1.xpose.msra.mxu0 0.0
  %3372 = vmatprep.subr.mxu0 0.0
  %3373 = vmatpush1.xpose.msra.mxu0 0.0
  %3374 = vmatprep.subr.mxu0 0.0
  %3375 = vmatpush1.xpose.msra.mxu0 0.0
  %3376 = vmatprep.subr.mxu0 0.0
  %3377 = vmatpush1.xpose.msra.mxu0 0.0
  %3378 = vmatprep.subr.mxu0 0.0
  %3379 = vmatpush1.xpose.msra.mxu0 0.0
  %3380 = vmatprep.subr.mxu0 0.0
  %3381 = vmatpush1.xpose.msra.mxu0 0.0
  %3382 = vmatprep.subr.mxu0 0.0
  %3383 = vmatpush1.xpose.msra.mxu0 0.0
  %3384 = vmatprep.subr.mxu0 0.0
  %3385 = vmatpush1.xpose.msra.mxu0 0.0
  %3386 = vmatprep.subr.mxu0 0.0
  %3387 = vmatpush1.xpose.msra.mxu0 0.0
  %3388 = vmatprep.subr.mxu0 0.0
  %3389 = vmatpush1.xpose.msra.mxu0 0.0
  %3390 = vmatprep.subr.mxu0 0.0
  %3391 = vmatpush1.xpose.msra.mxu0 0.0
  %3392 = vmatprep.subr.mxu0 0.0
  %3393 = vmatpush1.xpose.msra.mxu0 0.0
  %3394 = vmatprep.subr.mxu0 0.0
  %3395 = vmatpush1.xpose.msra.mxu0 0.0
  %3396 = vmatprep.subr.mxu0 0.0
  %3397 = vmatpush1.xpose.msra.mxu0 0.0
  %3398 = vmatprep.subr.mxu0 0.0
  %3399 = vmatpush1.xpose.msra.mxu0 0.0
  %3400 = vmatprep.subr.mxu0 0.0
  %3401 = vmatpush1.xpose.msra.mxu0 0.0
  %3402 = vmatprep.subr.mxu0 0.0
  %3403 = vmatpush1.xpose.msra.mxu0 0.0
  %3404 = vmatprep.subr.mxu0 0.0
  %3405 = vmatpush1.xpose.msra.mxu0 0.0
  %3406 = vmatprep.subr.mxu0 0.0
  %3407 = vmatpush1.xpose.msra.mxu0 0.0
  %3408 = vmatprep.subr.mxu0 0.0
  %3409 = vmatpush1.xpose.msra.mxu0 0.0
  %3410 = vmatprep.subr.mxu0 0.0
  %3411 = vmatpush1.xpose.msra.mxu0 0.0
  %3412 = vmatprep.mubr.f32.mxu0 0.0
  %3413 = vmatmul.mubr.f32.gmra.mrb[0].mxu0 %v3340
  %v3414 = vpop.f32.mrb[0].mxu0
  %v3415 = vadd.f32 0.0, %v3414
  %v3416 = vpop.f32.mrb[0].mxu0
  %3417 = vmatprep.mubr.f32.mxu0 0.0
  %3418 = vmatmul.mubr.f32.gmra.mrb[0].mxu0 %v3342
  %v3419 = vpop.f32.mrb[0].mxu0
  %v3420 = vadd.f32 0.0, %v3419
  %v3421 = vpop.f32.mrb[0].mxu0
  %3422 = vdwg.mxu0
  %v3423 = vsel %vm591, %v3415, -inf
  %3424 = vmax.xlane.f32.xlu0 %v3423
  %v3425 = vpop.xlane.xlu0 %3424
  %v3426 = vsel %vm595, %v3420, -inf
  %3427 = vmax.xlane.f32.xlu0 %v3426
  %v3428 = vpop.xlane.xlu0 %3427
  %v3429 = vsub.f32 %v3415, %v3425
  %v3430 = vsub.f32 %v3420, %v3428
  %v3431 = vmul.f32 %v3429, 1.442695
  %v3432 = vpow.pop %v3431
  %v3433 = vmul.f32 %v3430, 1.442695
  %v3434 = vpow.pop %v3433
  %v3435 = vsel %vm591, %v3432, 0.0
  %3436 = vadd.xlane.f32.xlu0 %v3435
  %v3437 = vpop.xlane.xlu0 %3436
  %v3438 = vsel %vm595, %v3434, 0.0
  %3439 = vadd.xlane.f32.xlu0 %v3438
  %v3440 = vpop.xlane.xlu0 %3439
  %v3441 = vrcp.pop %v3437
  %v3442 = vmul.f32 %v3432, %v3441
  %v3443 = vrcp.pop %v3440
  %v3444 = vmul.f32 %v3434, %v3443
  %3446 = vrot.lane.b32.xlu0 %v3121, 120
  %v3447 = vpop.permute.xlu0 %3446
  %3448 = vrot.lane.b32.xlu0 %v3126, 120
  %v3449 = vpop.permute.xlu0 %3448
  %v3452 = vsel %vm591, %v3442, 0
  %v3455 = vsel %vm591, %v3444, 0
  %v3457 = vsel %vm621, %v3449, 0
  %3459 = vmatprep.subr.mxu0 0.0
  %3460 = vmatpush1.msra.mxu0 %v3447
  %3461 = vmatprep.subr.mxu0 0.0
  %3462 = vmatpush1.msra.mxu0 %v3457
  %3463 = vmatprep.subr.mxu0 0.0
  %3464 = vmatpush1.msra.mxu0 0.0
  %3465 = vmatprep.subr.mxu0 0.0
  %3466 = vmatpush1.msra.mxu0 0.0
  %3467 = vmatprep.subr.mxu0 0.0
  %3468 = vmatpush1.msra.mxu0 0.0
  %3469 = vmatprep.subr.mxu0 0.0
  %3470 = vmatpush1.msra.mxu0 0.0
  %3471 = vmatprep.subr.mxu0 0.0
  %3472 = vmatpush1.msra.mxu0 0.0
  %3473 = vmatprep.subr.mxu0 0.0
  %3474 = vmatpush1.msra.mxu0 0.0
  %3475 = vmatprep.subr.mxu0 0.0
  %3476 = vmatpush1.msra.mxu0 0.0
  %3477 = vmatprep.subr.mxu0 0.0
  %3478 = vmatpush1.msra.mxu0 0.0
  %3479 = vmatprep.subr.mxu0 0.0
  %3480 = vmatpush1.msra.mxu0 0.0
  %3481 = vmatprep.subr.mxu0 0.0
  %3482 = vmatpush1.msra.mxu0 0.0
  %3483 = vmatprep.subr.mxu0 0.0
  %3484 = vmatpush1.msra.mxu0 0.0
  %3485 = vmatprep.subr.mxu0 0.0
  %3486 = vmatpush1.msra.mxu0 0.0
  %3487 = vmatprep.subr.mxu0 0.0
  %3488 = vmatpush1.msra.mxu0 0.0
  %3489 = vmatprep.subr.mxu0 0.0
  %3490 = vmatpush1.msra.mxu0 0.0
  %3491 = vmatprep.subr.mxu0 0.0
  %3492 = vmatpush1.msra.mxu0 0.0
  %3493 = vmatprep.subr.mxu0 0.0
  %3494 = vmatpush1.msra.mxu0 0.0
  %3495 = vmatprep.subr.mxu0 0.0
  %3496 = vmatpush1.msra.mxu0 0.0
  %3497 = vmatprep.subr.mxu0 0.0
  %3498 = vmatpush1.msra.mxu0 0.0
  %3499 = vmatprep.subr.mxu0 0.0
  %3500 = vmatpush1.msra.mxu0 0.0
  %3501 = vmatprep.subr.mxu0 0.0
  %3502 = vmatpush1.msra.mxu0 0.0
  %3503 = vmatprep.subr.mxu0 0.0
  %3504 = vmatpush1.msra.mxu0 0.0
  %3505 = vmatprep.subr.mxu0 0.0
  %3506 = vmatpush1.msra.mxu0 0.0
  %3507 = vmatprep.subr.mxu0 0.0
  %3508 = vmatpush1.msra.mxu0 0.0
  %3509 = vmatprep.subr.mxu0 0.0
  %3510 = vmatpush1.msra.mxu0 0.0
  %3511 = vmatprep.subr.mxu0 0.0
  %3512 = vmatpush1.msra.mxu0 0.0
  %3513 = vmatprep.subr.mxu0 0.0
  %3514 = vmatpush1.msra.mxu0 0.0
  %3515 = vmatprep.subr.mxu0 0.0
  %3516 = vmatpush1.msra.mxu0 0.0
  %3517 = vmatprep.subr.mxu0 0.0
  %3518 = vmatpush1.msra.mxu0 0.0
  %3519 = vmatprep.subr.mxu0 0.0
  %3520 = vmatpush1.msra.mxu0 0.0
  %3521 = vmatprep.subr.mxu0 0.0
  %3522 = vmatpush1.msra.mxu0 0.0
  %3523 = vmatprep.mubr.f32.mxu0 0.0
  %3524 = vmatmul.mubr.f32.gmra.mrb[0].mxu0 %v3452
  %v3525 = vpop.f32.mrb[0].mxu0
  %v3526 = vadd.f32 0.0, %v3525
  %v3527 = vpop.f32.mrb[0].mxu0
  %3528 = vmatprep.mubr.f32.mxu0 0.0
  %3529 = vmatmul.mubr.f32.gmra.mrb[0].mxu0 %v3455
  %v3530 = vpop.f32.mrb[0].mxu0
  %v3531 = vadd.f32 0.0, %v3530
  %v3532 = vpop.f32.mrb[0].mxu0
  %3533 = vdwg.mxu0
  %3534 = vrot.lane.b32.xlu0 %v2923, 112
  %v3535 = vpop.permute.xlu0 %3534
  %3536 = vrot.lane.b32.xlu0 %v2924, 112
  %v3537 = vpop.permute.xlu0 %3536
  %3538 = vrot.lane.b32.xlu0 %v3015, 112
  %v3539 = vpop.permute.xlu0 %3538
  %3540 = vrot.lane.b32.xlu0 %v3020, 112
  %v3541 = vpop.permute.xlu0 %3540
  %v3542 = vsel %vm503, %v3535, 0
  %v3544 = vsel %vm503, %v3537, 0
  %v3546 = vsel %vm503, %v3539, 0
  %v3548 = vsel %vm503, %v3541, 0
  %3550 = vmatprep.subr.mxu0 0.0
  %3551 = vmatpush1.xpose.msra.mxu0 %v3546
  %3552 = vmatprep.subr.mxu0 0.0
  %3553 = vmatpush1.xpose.msra.mxu0 %v3548
  %3554 = vmatprep.subr.mxu0 0.0
  %3555 = vmatpush1.xpose.msra.mxu0 0.0
  %3556 = vmatprep.subr.mxu0 0.0
  %3557 = vmatpush1.xpose.msra.mxu0 0.0
  %3558 = vmatprep.subr.mxu0 0.0
  %3559 = vmatpush1.xpose.msra.mxu0 0.0
  %3560 = vmatprep.subr.mxu0 0.0
  %3561 = vmatpush1.xpose.msra.mxu0 0.0
  %3562 = vmatprep.subr.mxu0 0.0
  %3563 = vmatpush1.xpose.msra.mxu0 0.0
  %3564 = vmatprep.subr.mxu0 0.0
  %3565 = vmatpush1.xpose.msra.mxu0 0.0
  %3566 = vmatprep.subr.mxu0 0.0
  %3567 = vmatpush1.xpose.msra.mxu0 0.0
  %3568 = vmatprep.subr.mxu0 0.0
  %3569 = vmatpush1.xpose.msra.mxu0 0.0
  %3570 = vmatprep.subr.mxu0 0.0
  %3571 = vmatpush1.xpose.msra.mxu0 0.0
  %3572 = vmatprep.subr.mxu0 0.0
  %3573 = vmatpush1.xpose.msra.mxu0 0.0
  %3574 = vmatprep.subr.mxu0 0.0
  %3575 = vmatpush1.xpose.msra.mxu0 0.0
  %3576 = vmatprep.subr.mxu0 0.0
  %3577 = vmatpush1.xpose.msra.mxu0 0.0
  %3578 = vmatprep.subr.mxu0 0.0
  %3579 = vmatpush1.xpose.msra.mxu0 0.0
  %3580 = vmatprep.subr.mxu0 0.0
  %3581 = vmatpush1.xpose.msra.mxu0 0.0
  %3582 = vmatprep.subr.mxu0 0.0
  %3583 = vmatpush1.xpose.msra.mxu0 0.0
  %3584 = vmatprep.subr.mxu0 0.0
  %3585 = vmatpush1.xpose.msra.mxu0 0.0
  %3586 = vmatprep.subr.mxu0 0.0
  %3587 = vmatpush1.xpose.msra.mxu0 0.0
  %3588 = vmatprep.subr.mxu0 0.0
  %3589 = vmatpush1.xpose.msra.mxu0 0.0
  %3590 = vmatprep.subr.mxu0 0.0
  %3591 = vmatpush1.xpose.msra.mxu0 0.0
  %3592 = vmatprep.subr.mxu0 0.0
  %3593 = vmatpush1.xpose.msra.mxu0 0.0
  %3594 = vmatprep.subr.mxu0 0.0
  %3595 = vmatpush1.xpose.msra.mxu0 0.0
  %3596 = vmatprep.subr.mxu0 0.0
  %3597 = vmatpush1.xpose.msra.mxu0 0.0
  %3598 = vmatprep.subr.mxu0 0.0
  %3599 = vmatpush1.xpose.msra.mxu0 0.0
  %3600 = vmatprep.subr.mxu0 0.0
  %3601 = vmatpush1.xpose.msra.mxu0 0.0
  %3602 = vmatprep.subr.mxu0 0.0
  %3603 = vmatpush1.xpose.msra.mxu0 0.0
  %3604 = vmatprep.subr.mxu0 0.0
  %3605 = vmatpush1.xpose.msra.mxu0 0.0
  %3606 = vmatprep.subr.mxu0 0.0
  %3607 = vmatpush1.xpose.msra.mxu0 0.0
  %3608 = vmatprep.subr.mxu0 0.0
  %3609 = vmatpush1.xpose.msra.mxu0 0.0
  %3610 = vmatprep.subr.mxu0 0.0
  %3611 = vmatpush1.xpose.msra.mxu0 0.0
  %3612 = vmatprep.subr.mxu0 0.0
  %3613 = vmatpush1.xpose.msra.mxu0 0.0
  %3614 = vmatprep.mubr.f32.mxu0 0.0
  %3615 = vmatmul.mubr.f32.gmra.mrb[0].mxu0 %v3542
  %v3616 = vpop.f32.mrb[0].mxu0
  %v3617 = vadd.f32 0.0, %v3616
  %v3618 = vpop.f32.mrb[0].mxu0
  %3619 = vmatprep.mubr.f32.mxu0 0.0
  %3620 = vmatmul.mubr.f32.gmra.mrb[0].mxu0 %v3544
  %v3621 = vpop.f32.mrb[0].mxu0
  %v3622 = vadd.f32 0.0, %v3621
  %v3623 = vpop.f32.mrb[0].mxu0
  %3624 = vdwg.mxu0
  %v3625 = vsel %vm591, %v3617, -inf
  %3626 = vmax.xlane.f32.xlu0 %v3625
  %v3627 = vpop.xlane.xlu0 %3626
  %v3628 = vsel %vm595, %v3622, -inf
  %3629 = vmax.xlane.f32.xlu0 %v3628
  %v3630 = vpop.xlane.xlu0 %3629
  %v3631 = vsub.f32 %v3617, %v3627
  %v3632 = vsub.f32 %v3622, %v3630
  %v3633 = vmul.f32 %v3631, 1.442695
  %v3634 = vpow.pop %v3633
  %v3635 = vmul.f32 %v3632, 1.442695
  %v3636 = vpow.pop %v3635
  %v3637 = vsel %vm591, %v3634, 0.0
  %3638 = vadd.xlane.f32.xlu0 %v3637
  %v3639 = vpop.xlane.xlu0 %3638
  %v3640 = vsel %vm595, %v3636, 0.0
  %3641 = vadd.xlane.f32.xlu0 %v3640
  %v3642 = vpop.xlane.xlu0 %3641
  %v3643 = vrcp.pop %v3639
  %v3644 = vmul.f32 %v3634, %v3643
  %v3645 = vrcp.pop %v3642
  %v3646 = vmul.f32 %v3636, %v3645
  %3647 = vrot.lane.b32.xlu0 %v3121, 112
  %v3648 = vpop.permute.xlu0 %3647
  %3649 = vrot.lane.b32.xlu0 %v3126, 112
  %v3650 = vpop.permute.xlu0 %3649
  %v3653 = vsel %vm591, %v3644, 0
  %v3656 = vsel %vm591, %v3646, 0
  %v3658 = vsel %vm621, %v3650, 0
  %3660 = vmatprep.subr.mxu0 0.0
  %3661 = vmatpush1.msra.mxu0 %v3648
  %3662 = vmatprep.subr.mxu0 0.0
  %3663 = vmatpush1.msra.mxu0 %v3658
  %3664 = vmatprep.subr.mxu0 0.0
  %3665 = vmatpush1.msra.mxu0 0.0
  %3666 = vmatprep.subr.mxu0 0.0
  %3667 = vmatpush1.msra.mxu0 0.0
  %3668 = vmatprep.subr.mxu0 0.0
  %3669 = vmatpush1.msra.mxu0 0.0
  %3670 = vmatprep.subr.mxu0 0.0
  %3671 = vmatpush1.msra.mxu0 0.0
  %3672 = vmatprep.subr.mxu0 0.0
  %3673 = vmatpush1.msra.mxu0 0.0
  %3674 = vmatprep.subr.mxu0 0.0
  %3675 = vmatpush1.msra.mxu0 0.0
  %3676 = vmatprep.subr.mxu0 0.0
  %3677 = vmatpush1.msra.mxu0 0.0
  %3678 = vmatprep.subr.mxu0 0.0
  %3679 = vmatpush1.msra.mxu0 0.0
  %3680 = vmatprep.subr.mxu0 0.0
  %3681 = vmatpush1.msra.mxu0 0.0
  %3682 = vmatprep.subr.mxu0 0.0
  %3683 = vmatpush1.msra.mxu0 0.0
  %3684 = vmatprep.subr.mxu0 0.0
  %3685 = vmatpush1.msra.mxu0 0.0
  %3686 = vmatprep.subr.mxu0 0.0
  %3687 = vmatpush1.msra.mxu0 0.0
  %3688 = vmatprep.subr.mxu0 0.0
  %3689 = vmatpush1.msra.mxu0 0.0
  %3690 = vmatprep.subr.mxu0 0.0
  %3691 = vmatpush1.msra.mxu0 0.0
  %3692 = vmatprep.subr.mxu0 0.0
  %3693 = vmatpush1.msra.mxu0 0.0
  %3694 = vmatprep.subr.mxu0 0.0
  %3695 = vmatpush1.msra.mxu0 0.0
  %3696 = vmatprep.subr.mxu0 0.0
  %3697 = vmatpush1.msra.mxu0 0.0
  %3698 = vmatprep.subr.mxu0 0.0
  %3699 = vmatpush1.msra.mxu0 0.0
  %3700 = vmatprep.subr.mxu0 0.0
  %3701 = vmatpush1.msra.mxu0 0.0
  %3702 = vmatprep.subr.mxu0 0.0
  %3703 = vmatpush1.msra.mxu0 0.0
  %3704 = vmatprep.subr.mxu0 0.0
  %3705 = vmatpush1.msra.mxu0 0.0
  %3706 = vmatprep.subr.mxu0 0.0
  %3707 = vmatpush1.msra.mxu0 0.0
  %3708 = vmatprep.subr.mxu0 0.0
  %3709 = vmatpush1.msra.mxu0 0.0
  %3710 = vmatprep.subr.mxu0 0.0
  %3711 = vmatpush1.msra.mxu0 0.0
  %3712 = vmatprep.subr.mxu0 0.0
  %3713 = vmatpush1.msra.mxu0 0.0
  %3714 = vmatprep.subr.mxu0 0.0
  %3715 = vmatpush1.msra.mxu0 0.0
  %3716 = vmatprep.subr.mxu0 0.0
  %3717 = vmatpush1.msra.mxu0 0.0
  %3718 = vmatprep.subr.mxu0 0.0
  %3719 = vmatpush1.msra.mxu0 0.0
  %3720 = vmatprep.subr.mxu0 0.0
  %3721 = vmatpush1.msra.mxu0 0.0
  %3722 = vmatprep.subr.mxu0 0.0
  %3723 = vmatpush1.msra.mxu0 0.0
  %3724 = vmatprep.mubr.f32.mxu0 0.0
  %3725 = vmatmul.mubr.f32.gmra.mrb[0].mxu0 %v3653
  %v3726 = vpop.f32.mrb[0].mxu0
  %v3727 = vadd.f32 0.0, %v3726
  %v3728 = vpop.f32.mrb[0].mxu0
  %3729 = vmatprep.mubr.f32.mxu0 0.0
  %3730 = vmatmul.mubr.f32.gmra.mrb[0].mxu0 %v3656
  %v3731 = vpop.f32.mrb[0].mxu0
  %v3732 = vadd.f32 0.0, %v3731
  %v3733 = vpop.f32.mrb[0].mxu0
  %3734 = vdwg.mxu0
  %3735 = vrot.lane.b32.xlu0 %v2923, 104
  %v3736 = vpop.permute.xlu0 %3735
  %3737 = vrot.lane.b32.xlu0 %v2924, 104
  %v3738 = vpop.permute.xlu0 %3737
  %3739 = vrot.lane.b32.xlu0 %v3015, 104
  %v3740 = vpop.permute.xlu0 %3739
  %3741 = vrot.lane.b32.xlu0 %v3020, 104
  %v3742 = vpop.permute.xlu0 %3741
  %v3743 = vsel %vm503, %v3736, 0
  %v3745 = vsel %vm503, %v3738, 0
  %v3747 = vsel %vm503, %v3740, 0
  %v3749 = vsel %vm503, %v3742, 0
  %3751 = vmatprep.subr.mxu0 0.0
  %3752 = vmatpush1.xpose.msra.mxu0 %v3747
  %3753 = vmatprep.subr.mxu0 0.0
  %3754 = vmatpush1.xpose.msra.mxu0 %v3749
  %3755 = vmatprep.subr.mxu0 0.0
  %3756 = vmatpush1.xpose.msra.mxu0 0.0
  %3757 = vmatprep.subr.mxu0 0.0
  %3758 = vmatpush1.xpose.msra.mxu0 0.0
  %3759 = vmatprep.subr.mxu0 0.0
  %3760 = vmatpush1.xpose.msra.mxu0 0.0
  %3761 = vmatprep.subr.mxu0 0.0
  %3762 = vmatpush1.xpose.msra.mxu0 0.0
  %3763 = vmatprep.subr.mxu0 0.0
  %3764 = vmatpush1.xpose.msra.mxu0 0.0
  %3765 = vmatprep.subr.mxu0 0.0
  %3766 = vmatpush1.xpose.msra.mxu0 0.0
  %3767 = vmatprep.subr.mxu0 0.0
  %3768 = vmatpush1.xpose.msra.mxu0 0.0
  %3769 = vmatprep.subr.mxu0 0.0
  %3770 = vmatpush1.xpose.msra.mxu0 0.0
  %3771 = vmatprep.subr.mxu0 0.0
  %3772 = vmatpush1.xpose.msra.mxu0 0.0
  %3773 = vmatprep.subr.mxu0 0.0
  %3774 = vmatpush1.xpose.msra.mxu0 0.0
  %3775 = vmatprep.subr.mxu0 0.0
  %3776 = vmatpush1.xpose.msra.mxu0 0.0
  %3777 = vmatprep.subr.mxu0 0.0
  %3778 = vmatpush1.xpose.msra.mxu0 0.0
  %3779 = vmatprep.subr.mxu0 0.0
  %3780 = vmatpush1.xpose.msra.mxu0 0.0
  %3781 = vmatprep.subr.mxu0 0.0
  %3782 = vmatpush1.xpose.msra.mxu0 0.0
  %3783 = vmatprep.subr.mxu0 0.0
  %3784 = vmatpush1.xpose.msra.mxu0 0.0
  %3785 = vmatprep.subr.mxu0 0.0
  %3786 = vmatpush1.xpose.msra.mxu0 0.0
  %3787 = vmatprep.subr.mxu0 0.0
  %3788 = vmatpush1.xpose.msra.mxu0 0.0
  %3789 = vmatprep.subr.mxu0 0.0
  %3790 = vmatpush1.xpose.msra.mxu0 0.0
  %3791 = vmatprep.subr.mxu0 0.0
  %3792 = vmatpush1.xpose.msra.mxu0 0.0
  %3793 = vmatprep.subr.mxu0 0.0
  %3794 = vmatpush1.xpose.msra.mxu0 0.0
  %3795 = vmatprep.subr.mxu0 0.0
  %3796 = vmatpush1.xpose.msra.mxu0 0.0
  %3797 = vmatprep.subr.mxu0 0.0
  %3798 = vmatpush1.xpose.msra.mxu0 0.0
  %3799 = vmatprep.subr.mxu0 0.0
  %3800 = vmatpush1.xpose.msra.mxu0 0.0
  %3801 = vmatprep.subr.mxu0 0.0
  %3802 = vmatpush1.xpose.msra.mxu0 0.0
  %3803 = vmatprep.subr.mxu0 0.0
  %3804 = vmatpush1.xpose.msra.mxu0 0.0
  %3805 = vmatprep.subr.mxu0 0.0
  %3806 = vmatpush1.xpose.msra.mxu0 0.0
  %3807 = vmatprep.subr.mxu0 0.0
  %3808 = vmatpush1.xpose.msra.mxu0 0.0
  %3809 = vmatprep.subr.mxu0 0.0
  %3810 = vmatpush1.xpose.msra.mxu0 0.0
  %3811 = vmatprep.subr.mxu0 0.0
  %3812 = vmatpush1.xpose.msra.mxu0 0.0
  %3813 = vmatprep.subr.mxu0 0.0
  %3814 = vmatpush1.xpose.msra.mxu0 0.0
  %3815 = vmatprep.mubr.f32.mxu0 0.0
  %3816 = vmatmul.mubr.f32.gmra.mrb[0].mxu0 %v3743
  %v3817 = vpop.f32.mrb[0].mxu0
  %v3818 = vadd.f32 0.0, %v3817
  %v3819 = vpop.f32.mrb[0].mxu0
  %3820 = vmatprep.mubr.f32.mxu0 0.0
  %3821 = vmatmul.mubr.f32.gmra.mrb[0].mxu0 %v3745
  %v3822 = vpop.f32.mrb[0].mxu0
  %v3823 = vadd.f32 0.0, %v3822
  %v3824 = vpop.f32.mrb[0].mxu0
  %3825 = vdwg.mxu0
  %v3826 = vsel %vm591, %v3818, -inf
  %3827 = vmax.xlane.f32.xlu0 %v3826
  %v3828 = vpop.xlane.xlu0 %3827
  %v3829 = vsel %vm595, %v3823, -inf
  %3830 = vmax.xlane.f32.xlu0 %v3829
  %v3831 = vpop.xlane.xlu0 %3830
  %v3832 = vsub.f32 %v3818, %v3828
  %v3833 = vsub.f32 %v3823, %v3831
  %v3834 = vmul.f32 %v3832, 1.442695
  %v3835 = vpow.pop %v3834
  %v3836 = vmul.f32 %v3833, 1.442695
  %v3837 = vpow.pop %v3836
  %v3838 = vsel %vm591, %v3835, 0.0
  %3839 = vadd.xlane.f32.xlu0 %v3838
  %v3840 = vpop.xlane.xlu0 %3839
  %v3841 = vsel %vm595, %v3837, 0.0
  %3842 = vadd.xlane.f32.xlu0 %v3841
  %v3843 = vpop.xlane.xlu0 %3842
  %v3844 = vrcp.pop %v3840
  %v3845 = vmul.f32 %v3835, %v3844
  %v3846 = vrcp.pop %v3843
  %v3847 = vmul.f32 %v3837, %v3846
  %3848 = vrot.lane.b32.xlu0 %v3121, 104
  %v3849 = vpop.permute.xlu0 %3848
  %3850 = vrot.lane.b32.xlu0 %v3126, 104
  %v3851 = vpop.permute.xlu0 %3850
  %v3854 = vsel %vm591, %v3845, 0
  %v3857 = vsel %vm591, %v3847, 0
  %v3859 = vsel %vm621, %v3851, 0
  %3861 = vmatprep.subr.mxu0 0.0
  %3862 = vmatpush1.msra.mxu0 %v3849
  %3863 = vmatprep.subr.mxu0 0.0
  %3864 = vmatpush1.msra.mxu0 %v3859
  %3865 = vmatprep.subr.mxu0 0.0
  %3866 = vmatpush1.msra.mxu0 0.0
  %3867 = vmatprep.subr.mxu0 0.0
  %3868 = vmatpush1.msra.mxu0 0.0
  %3869 = vmatprep.subr.mxu0 0.0
  %3870 = vmatpush1.msra.mxu0 0.0
  %3871 = vmatprep.subr.mxu0 0.0
  %3872 = vmatpush1.msra.mxu0 0.0
  %3873 = vmatprep.subr.mxu0 0.0
  %3874 = vmatpush1.msra.mxu0 0.0
  %3875 = vmatprep.subr.mxu0 0.0
  %3876 = vmatpush1.msra.mxu0 0.0
  %3877 = vmatprep.subr.mxu0 0.0
  %3878 = vmatpush1.msra.mxu0 0.0
  %3879 = vmatprep.subr.mxu0 0.0
  %3880 = vmatpush1.msra.mxu0 0.0
  %3881 = vmatprep.subr.mxu0 0.0
  %3882 = vmatpush1.msra.mxu0 0.0
  %3883 = vmatprep.subr.mxu0 0.0
  %3884 = vmatpush1.msra.mxu0 0.0
  %3885 = vmatprep.subr.mxu0 0.0
  %3886 = vmatpush1.msra.mxu0 0.0
  %3887 = vmatprep.subr.mxu0 0.0
  %3888 = vmatpush1.msra.mxu0 0.0
  %3889 = vmatprep.subr.mxu0 0.0
  %3890 = vmatpush1.msra.mxu0 0.0
  %3891 = vmatprep.subr.mxu0 0.0
  %3892 = vmatpush1.msra.mxu0 0.0
  %3893 = vmatprep.subr.mxu0 0.0
  %3894 = vmatpush1.msra.mxu0 0.0
  %3895 = vmatprep.subr.mxu0 0.0
  %3896 = vmatpush1.msra.mxu0 0.0
  %3897 = vmatprep.subr.mxu0 0.0
  %3898 = vmatpush1.msra.mxu0 0.0
  %3899 = vmatprep.subr.mxu0 0.0
  %3900 = vmatpush1.msra.mxu0 0.0
  %3901 = vmatprep.subr.mxu0 0.0
  %3902 = vmatpush1.msra.mxu0 0.0
  %3903 = vmatprep.subr.mxu0 0.0
  %3904 = vmatpush1.msra.mxu0 0.0
  %3905 = vmatprep.subr.mxu0 0.0
  %3906 = vmatpush1.msra.mxu0 0.0
  %3907 = vmatprep.subr.mxu0 0.0
  %3908 = vmatpush1.msra.mxu0 0.0
  %3909 = vmatprep.subr.mxu0 0.0
  %3910 = vmatpush1.msra.mxu0 0.0
  %3911 = vmatprep.subr.mxu0 0.0
  %3912 = vmatpush1.msra.mxu0 0.0
  %3913 = vmatprep.subr.mxu0 0.0
  %3914 = vmatpush1.msra.mxu0 0.0
  %3915 = vmatprep.subr.mxu0 0.0
  %3916 = vmatpush1.msra.mxu0 0.0
  %3917 = vmatprep.subr.mxu0 0.0
  %3918 = vmatpush1.msra.mxu0 0.0
  %3919 = vmatprep.subr.mxu0 0.0
  %3920 = vmatpush1.msra.mxu0 0.0
  %3921 = vmatprep.subr.mxu0 0.0
  %3922 = vmatpush1.msra.mxu0 0.0
  %3923 = vmatprep.subr.mxu0 0.0
  %3924 = vmatpush1.msra.mxu0 0.0
  %3925 = vmatprep.mubr.f32.mxu0 0.0
  %3926 = vmatmul.mubr.f32.gmra.mrb[0].mxu0 %v3854
  %v3927 = vpop.f32.mrb[0].mxu0
  %v3928 = vadd.f32 0.0, %v3927
  %v3929 = vpop.f32.mrb[0].mxu0
  %3930 = vmatprep.mubr.f32.mxu0 0.0
  %3931 = vmatmul.mubr.f32.gmra.mrb[0].mxu0 %v3857
  %v3932 = vpop.f32.mrb[0].mxu0
  %v3933 = vadd.f32 0.0, %v3932
  %v3934 = vpop.f32.mrb[0].mxu0
  %3935 = vdwg.mxu0
  %3938 = vrot.lane.b32.xlu0 %v3526, 8
  %v3939 = vpop.permute.xlu0 %3938
  %3940 = vrot.lane.b32.xlu0 %v3531, 8
  %v3941 = vpop.permute.xlu0 %3940
  %3946 = vrot.lane.b32.xlu0 %v3727, 16
  %v3947 = vpop.permute.xlu0 %3946
  %3948 = vrot.lane.b32.xlu0 %v3732, 16
  %v3949 = vpop.permute.xlu0 %3948
  %3954 = vrot.lane.b32.xlu0 %v3928, 24
  %v3955 = vpop.permute.xlu0 %3954
  %3956 = vrot.lane.b32.xlu0 %v3933, 24
  %v3957 = vpop.permute.xlu0 %3956
  %v3960 = vsel %vm503, %v3324, %v3939
  %v3961 = vsel %vm503, %v3329, %v3941
  %v3962 = vsel %vm72, %v3960, %v3947
  %v3963 = vsel %vm72, %v3961, %v3949
  %v3964 = vsel %vm1332, %v3962, %v3955
  %v3965 = vsel %vm1332, %v3963, %v3957
  %3966 = vst.msk [vmem:[#allocation3] sm:$0xff] %vm42, %v3964
  %3967 = vst.msk [vmem:[#allocation3 + $0x8] sm:$0xf] %vm1336, %v3965
  %v3969 = vsel %vm503, %v2925, 0
  %v3972 = vsel %vm503, %v2926, 0
  %v3975 = vsel %vm503, %v3025, 0
  %v3978 = vsel %vm503, %v3030, 0
  %3980 = vmatprep.subr.mxu0 0.0
  %3981 = vmatpush1.xpose.msra.mxu0 %v3975
  %3982 = vmatprep.subr.mxu0 0.0
  %3983 = vmatpush1.xpose.msra.mxu0 %v3978
  %3984 = vmatprep.subr.mxu0 0.0
  %3985 = vmatpush1.xpose.msra.mxu0 0.0
  %3986 = vmatprep.subr.mxu0 0.0
  %3987 = vmatpush1.xpose.msra.mxu0 0.0
  %3988 = vmatprep.subr.mxu0 0.0
  %3989 = vmatpush1.xpose.msra.mxu0 0.0
  %3990 = vmatprep.subr.mxu0 0.0
  %3991 = vmatpush1.xpose.msra.mxu0 0.0
  %3992 = vmatprep.subr.mxu0 0.0
  %3993 = vmatpush1.xpose.msra.mxu0 0.0
  %3994 = vmatprep.subr.mxu0 0.0
  %3995 = vmatpush1.xpose.msra.mxu0 0.0
  %3996 = vmatprep.subr.mxu0 0.0
  %3997 = vmatpush1.xpose.msra.mxu0 0.0
  %3998 = vmatprep.subr.mxu0 0.0
  %3999 = vmatpush1.xpose.msra.mxu0 0.0
  %4000 = vmatprep.subr.mxu0 0.0
  %4001 = vmatpush1.xpose.msra.mxu0 0.0
  %4002 = vmatprep.subr.mxu0 0.0
  %4003 = vmatpush1.xpose.msra.mxu0 0.0
  %4004 = vmatprep.subr.mxu0 0.0
  %4005 = vmatpush1.xpose.msra.mxu0 0.0
  %4006 = vmatprep.subr.mxu0 0.0
  %4007 = vmatpush1.xpose.msra.mxu0 0.0
  %4008 = vmatprep.subr.mxu0 0.0
  %4009 = vmatpush1.xpose.msra.mxu0 0.0
  %4010 = vmatprep.subr.mxu0 0.0
  %4011 = vmatpush1.xpose.msra.mxu0 0.0
  %4012 = vmatprep.subr.mxu0 0.0
  %4013 = vmatpush1.xpose.msra.mxu0 0.0
  %4014 = vmatprep.subr.mxu0 0.0
  %4015 = vmatpush1.xpose.msra.mxu0 0.0
  %4016 = vmatprep.subr.mxu0 0.0
  %4017 = vmatpush1.xpose.msra.mxu0 0.0
  %4018 = vmatprep.subr.mxu0 0.0
  %4019 = vmatpush1.xpose.msra.mxu0 0.0
  %4020 = vmatprep.subr.mxu0 0.0
  %4021 = vmatpush1.xpose.msra.mxu0 0.0
  %4022 = vmatprep.subr.mxu0 0.0
  %4023 = vmatpush1.xpose.msra.mxu0 0.0
  %4024 = vmatprep.subr.mxu0 0.0
  %4025 = vmatpush1.xpose.msra.mxu0 0.0
  %4026 = vmatprep.subr.mxu0 0.0
  %4027 = vmatpush1.xpose.msra.mxu0 0.0
  %4028 = vmatprep.subr.mxu0 0.0
  %4029 = vmatpush1.xpose.msra.mxu0 0.0
  %4030 = vmatprep.subr.mxu0 0.0
  %4031 = vmatpush1.xpose.msra.mxu0 0.0
  %4032 = vmatprep.subr.mxu0 0.0
  %4033 = vmatpush1.xpose.msra.mxu0 0.0
  %4034 = vmatprep.subr.mxu0 0.0
  %4035 = vmatpush1.xpose.msra.mxu0 0.0
  %4036 = vmatprep.subr.mxu0 0.0
  %4037 = vmatpush1.xpose.msra.mxu0 0.0
  %4038 = vmatprep.subr.mxu0 0.0
  %4039 = vmatpush1.xpose.msra.mxu0 0.0
  %4040 = vmatprep.subr.mxu0 0.0
  %4041 = vmatpush1.xpose.msra.mxu0 0.0
  %4042 = vmatprep.subr.mxu0 0.0
  %4043 = vmatpush1.xpose.msra.mxu0 0.0
  %4044 = vmatprep.mubr.f32.mxu0 0.0
  %4045 = vmatmul.mubr.f32.gmra.mrb[0].mxu0 %v3969
  %v4046 = vpop.f32.mrb[0].mxu0
  %v4047 = vadd.f32 0.0, %v4046
  %v4048 = vpop.f32.mrb[0].mxu0
  %4049 = vmatprep.mubr.f32.mxu0 0.0
  %4050 = vmatmul.mubr.f32.gmra.mrb[0].mxu0 %v3972
  %v4051 = vpop.f32.mrb[0].mxu0
  %v4052 = vadd.f32 0.0, %v4051
  %v4053 = vpop.f32.mrb[0].mxu0
  %4054 = vdwg.mxu0
  %v4055 = vsel %vm591, %v4047, -inf
  %4056 = vmax.xlane.f32.xlu0 %v4055
  %v4057 = vpop.xlane.xlu0 %4056
  %v4058 = vsel %vm595, %v4052, -inf
  %4059 = vmax.xlane.f32.xlu0 %v4058
  %v4060 = vpop.xlane.xlu0 %4059
  %v4061 = vsub.f32 %v4047, %v4057
  %v4062 = vsub.f32 %v4052, %v4060
  %v4063 = vmul.f32 %v4061, 1.442695
  %v4064 = vpow.pop %v4063
  %v4065 = vmul.f32 %v4062, 1.442695
  %v4066 = vpow.pop %v4065
  %v4067 = vsel %vm591, %v4064, 0.0
  %4068 = vadd.xlane.f32.xlu0 %v4067
  %v4069 = vpop.xlane.xlu0 %4068
  %v4070 = vsel %vm595, %v4066, 0.0
  %4071 = vadd.xlane.f32.xlu0 %v4070
  %v4072 = vpop.xlane.xlu0 %4071
  %v4073 = vrcp.pop %v4069
  %v4074 = vmul.f32 %v4064, %v4073
  %v4075 = vrcp.pop %v4072
  %v4076 = vmul.f32 %v4066, %v4075
  %v4078 = vsel %vm591, %v4074, 0
  %v4081 = vsel %vm591, %v4076, 0
  %v4084 = vsel %vm621, %v3136, 0
  %4086 = vmatprep.subr.mxu0 0.0
  %4087 = vmatpush1.msra.mxu0 %v3131
  %4088 = vmatprep.subr.mxu0 0.0
  %4089 = vmatpush1.msra.mxu0 %v4084
  %4090 = vmatprep.subr.mxu0 0.0
  %4091 = vmatpush1.msra.mxu0 0.0
  %4092 = vmatprep.subr.mxu0 0.0
  %4093 = vmatpush1.msra.mxu0 0.0
  %4094 = vmatprep.subr.mxu0 0.0
  %4095 = vmatpush1.msra.mxu0 0.0
  %4096 = vmatprep.subr.mxu0 0.0
  %4097 = vmatpush1.msra.mxu0 0.0
  %4098 = vmatprep.subr.mxu0 0.0
  %4099 = vmatpush1.msra.mxu0 0.0
  %4100 = vmatprep.subr.mxu0 0.0
  %4101 = vmatpush1.msra.mxu0 0.0
  %4102 = vmatprep.subr.mxu0 0.0
  %4103 = vmatpush1.msra.mxu0 0.0
  %4104 = vmatprep.subr.mxu0 0.0
  %4105 = vmatpush1.msra.mxu0 0.0
  %4106 = vmatprep.subr.mxu0 0.0
  %4107 = vmatpush1.msra.mxu0 0.0
  %4108 = vmatprep.subr.mxu0 0.0
  %4109 = vmatpush1.msra.mxu0 0.0
  %4110 = vmatprep.subr.mxu0 0.0
  %4111 = vmatpush1.msra.mxu0 0.0
  %4112 = vmatprep.subr.mxu0 0.0
  %4113 = vmatpush1.msra.mxu0 0.0
  %4114 = vmatprep.subr.mxu0 0.0
  %4115 = vmatpush1.msra.mxu0 0.0
  %4116 = vmatprep.subr.mxu0 0.0
  %4117 = vmatpush1.msra.mxu0 0.0
  %4118 = vmatprep.subr.mxu0 0.0
  %4119 = vmatpush1.msra.mxu0 0.0
  %4120 = vmatprep.subr.mxu0 0.0
  %4121 = vmatpush1.msra.mxu0 0.0
  %4122 = vmatprep.subr.mxu0 0.0
  %4123 = vmatpush1.msra.mxu0 0.0
  %4124 = vmatprep.subr.mxu0 0.0
  %4125 = vmatpush1.msra.mxu0 0.0
  %4126 = vmatprep.subr.mxu0 0.0
  %4127 = vmatpush1.msra.mxu0 0.0
  %4128 = vmatprep.subr.mxu0 0.0
  %4129 = vmatpush1.msra.mxu0 0.0
  %4130 = vmatprep.subr.mxu0 0.0
  %4131 = vmatpush1.msra.mxu0 0.0
  %4132 = vmatprep.subr.mxu0 0.0
  %4133 = vmatpush1.msra.mxu0 0.0
  %4134 = vmatprep.subr.mxu0 0.0
  %4135 = vmatpush1.msra.mxu0 0.0
  %4136 = vmatprep.subr.mxu0 0.0
  %4137 = vmatpush1.msra.mxu0 0.0
  %4138 = vmatprep.subr.mxu0 0.0
  %4139 = vmatpush1.msra.mxu0 0.0
  %4140 = vmatprep.subr.mxu0 0.0
  %4141 = vmatpush1.msra.mxu0 0.0
  %4142 = vmatprep.subr.mxu0 0.0
  %4143 = vmatpush1.msra.mxu0 0.0
  %4144 = vmatprep.subr.mxu0 0.0
  %4145 = vmatpush1.msra.mxu0 0.0
  %4146 = vmatprep.subr.mxu0 0.0
  %4147 = vmatpush1.msra.mxu0 0.0
  %4148 = vmatprep.subr.mxu0 0.0
  %4149 = vmatpush1.msra.mxu0 0.0
  %4150 = vmatprep.mubr.f32.mxu0 0.0
  %4151 = vmatmul.mubr.f32.gmra.mrb[0].mxu0 %v4078
  %v4152 = vpop.f32.mrb[0].mxu0
  %v4153 = vadd.f32 0.0, %v4152
  %v4154 = vpop.f32.mrb[0].mxu0
  %4155 = vmatprep.mubr.f32.mxu0 0.0
  %4156 = vmatmul.mubr.f32.gmra.mrb[0].mxu0 %v4081
  %v4157 = vpop.f32.mrb[0].mxu0
  %v4158 = vadd.f32 0.0, %v4157
  %v4159 = vpop.f32.mrb[0].mxu0
  %4160 = vdwg.mxu0
  %4161 = vrot.lane.b32.xlu0 %v2925, 120
  %v4162 = vpop.permute.xlu0 %4161
  %4163 = vrot.lane.b32.xlu0 %v2926, 120
  %v4164 = vpop.permute.xlu0 %4163
  %4165 = vrot.lane.b32.xlu0 %v3025, 120
  %v4166 = vpop.permute.xlu0 %4165
  %4167 = vrot.lane.b32.xlu0 %v3030, 120
  %v4168 = vpop.permute.xlu0 %4167
  %v4169 = vsel %vm503, %v4162, 0
  %v4171 = vsel %vm503, %v4164, 0
  %v4173 = vsel %vm503, %v4166, 0
  %v4175 = vsel %vm503, %v4168, 0
  %4177 = vmatprep.subr.mxu0 0.0
  %4178 = vmatpush1.xpose.msra.mxu0 %v4173
  %4179 = vmatprep.subr.mxu0 0.0
  %4180 = vmatpush1.xpose.msra.mxu0 %v4175
  %4181 = vmatprep.subr.mxu0 0.0
  %4182 = vmatpush1.xpose.msra.mxu0 0.0
  %4183 = vmatprep.subr.mxu0 0.0
  %4184 = vmatpush1.xpose.msra.mxu0 0.0
  %4185 = vmatprep.subr.mxu0 0.0
  %4186 = vmatpush1.xpose.msra.mxu0 0.0
  %4187 = vmatprep.subr.mxu0 0.0
  %4188 = vmatpush1.xpose.msra.mxu0 0.0
  %4189 = vmatprep.subr.mxu0 0.0
  %4190 = vmatpush1.xpose.msra.mxu0 0.0
  %4191 = vmatprep.subr.mxu0 0.0
  %4192 = vmatpush1.xpose.msra.mxu0 0.0
  %4193 = vmatprep.subr.mxu0 0.0
  %4194 = vmatpush1.xpose.msra.mxu0 0.0
  %4195 = vmatprep.subr.mxu0 0.0
  %4196 = vmatpush1.xpose.msra.mxu0 0.0
  %4197 = vmatprep.subr.mxu0 0.0
  %4198 = vmatpush1.xpose.msra.mxu0 0.0
  %4199 = vmatprep.subr.mxu0 0.0
  %4200 = vmatpush1.xpose.msra.mxu0 0.0
  %4201 = vmatprep.subr.mxu0 0.0
  %4202 = vmatpush1.xpose.msra.mxu0 0.0
  %4203 = vmatprep.subr.mxu0 0.0
  %4204 = vmatpush1.xpose.msra.mxu0 0.0
  %4205 = vmatprep.subr.mxu0 0.0
  %4206 = vmatpush1.xpose.msra.mxu0 0.0
  %4207 = vmatprep.subr.mxu0 0.0
  %4208 = vmatpush1.xpose.msra.mxu0 0.0
  %4209 = vmatprep.subr.mxu0 0.0
  %4210 = vmatpush1.xpose.msra.mxu0 0.0
  %4211 = vmatprep.subr.mxu0 0.0
  %4212 = vmatpush1.xpose.msra.mxu0 0.0
  %4213 = vmatprep.subr.mxu0 0.0
  %4214 = vmatpush1.xpose.msra.mxu0 0.0
  %4215 = vmatprep.subr.mxu0 0.0
  %4216 = vmatpush1.xpose.msra.mxu0 0.0
  %4217 = vmatprep.subr.mxu0 0.0
  %4218 = vmatpush1.xpose.msra.mxu0 0.0
  %4219 = vmatprep.subr.mxu0 0.0
  %4220 = vmatpush1.xpose.msra.mxu0 0.0
  %4221 = vmatprep.subr.mxu0 0.0
  %4222 = vmatpush1.xpose.msra.mxu0 0.0
  %4223 = vmatprep.subr.mxu0 0.0
  %4224 = vmatpush1.xpose.msra.mxu0 0.0
  %4225 = vmatprep.subr.mxu0 0.0
  %4226 = vmatpush1.xpose.msra.mxu0 0.0
  %4227 = vmatprep.subr.mxu0 0.0
  %4228 = vmatpush1.xpose.msra.mxu0 0.0
  %4229 = vmatprep.subr.mxu0 0.0
  %4230 = vmatpush1.xpose.msra.mxu0 0.0
  %4231 = vmatprep.subr.mxu0 0.0
  %4232 = vmatpush1.xpose.msra.mxu0 0.0
  %4233 = vmatprep.subr.mxu0 0.0
  %4234 = vmatpush1.xpose.msra.mxu0 0.0
  %4235 = vmatprep.subr.mxu0 0.0
  %4236 = vmatpush1.xpose.msra.mxu0 0.0
  %4237 = vmatprep.subr.mxu0 0.0
  %4238 = vmatpush1.xpose.msra.mxu0 0.0
  %4239 = vmatprep.subr.mxu0 0.0
  %4240 = vmatpush1.xpose.msra.mxu0 0.0
  %4241 = vmatprep.mubr.f32.mxu0 0.0
  %4242 = vmatmul.mubr.f32.gmra.mrb[0].mxu0 %v4169
  %v4243 = vpop.f32.mrb[0].mxu0
  %v4244 = vadd.f32 0.0, %v4243
  %v4245 = vpop.f32.mrb[0].mxu0
  %4246 = vmatprep.mubr.f32.mxu0 0.0
  %4247 = vmatmul.mubr.f32.gmra.mrb[0].mxu0 %v4171
  %v4248 = vpop.f32.mrb[0].mxu0
  %v4249 = vadd.f32 0.0, %v4248
  %v4250 = vpop.f32.mrb[0].mxu0
  %4251 = vdwg.mxu0
  %v4252 = vsel %vm591, %v4244, -inf
  %4253 = vmax.xlane.f32.xlu0 %v4252
  %v4254 = vpop.xlane.xlu0 %4253
  %v4255 = vsel %vm595, %v4249, -inf
  %4256 = vmax.xlane.f32.xlu0 %v4255
  %v4257 = vpop.xlane.xlu0 %4256
  %v4258 = vsub.f32 %v4244, %v4254
  %v4259 = vsub.f32 %v4249, %v4257
  %v4260 = vmul.f32 %v4258, 1.442695
  %v4261 = vpow.pop %v4260
  %v4262 = vmul.f32 %v4259, 1.442695
  %v4263 = vpow.pop %v4262
  %v4264 = vsel %vm591, %v4261, 0.0
  %4265 = vadd.xlane.f32.xlu0 %v4264
  %v4266 = vpop.xlane.xlu0 %4265
  %v4267 = vsel %vm595, %v4263, 0.0
  %4268 = vadd.xlane.f32.xlu0 %v4267
  %v4269 = vpop.xlane.xlu0 %4268
  %v4270 = vrcp.pop %v4266
  %v4271 = vmul.f32 %v4261, %v4270
  %v4272 = vrcp.pop %v4269
  %v4273 = vmul.f32 %v4263, %v4272
  %4275 = vrot.lane.b32.xlu0 %v3131, 120
  %v4276 = vpop.permute.xlu0 %4275
  %4277 = vrot.lane.b32.xlu0 %v3136, 120
  %v4278 = vpop.permute.xlu0 %4277
  %v4281 = vsel %vm591, %v4271, 0
  %v4284 = vsel %vm591, %v4273, 0
  %v4286 = vsel %vm621, %v4278, 0
  %4288 = vmatprep.subr.mxu0 0.0
  %4289 = vmatpush1.msra.mxu0 %v4276
  %4290 = vmatprep.subr.mxu0 0.0
  %4291 = vmatpush1.msra.mxu0 %v4286
  %4292 = vmatprep.subr.mxu0 0.0
  %4293 = vmatpush1.msra.mxu0 0.0
  %4294 = vmatprep.subr.mxu0 0.0
  %4295 = vmatpush1.msra.mxu0 0.0
  %4296 = vmatprep.subr.mxu0 0.0
  %4297 = vmatpush1.msra.mxu0 0.0
  %4298 = vmatprep.subr.mxu0 0.0
  %4299 = vmatpush1.msra.mxu0 0.0
  %4300 = vmatprep.subr.mxu0 0.0
  %4301 = vmatpush1.msra.mxu0 0.0
  %4302 = vmatprep.subr.mxu0 0.0
  %4303 = vmatpush1.msra.mxu0 0.0
  %4304 = vmatprep.subr.mxu0 0.0
  %4305 = vmatpush1.msra.mxu0 0.0
  %4306 = vmatprep.subr.mxu0 0.0
  %4307 = vmatpush1.msra.mxu0 0.0
  %4308 = vmatprep.subr.mxu0 0.0
  %4309 = vmatpush1.msra.mxu0 0.0
  %4310 = vmatprep.subr.mxu0 0.0
  %4311 = vmatpush1.msra.mxu0 0.0
  %4312 = vmatprep.subr.mxu0 0.0
  %4313 = vmatpush1.msra.mxu0 0.0
  %4314 = vmatprep.subr.mxu0 0.0
  %4315 = vmatpush1.msra.mxu0 0.0
  %4316 = vmatprep.subr.mxu0 0.0
  %4317 = vmatpush1.msra.mxu0 0.0
  %4318 = vmatprep.subr.mxu0 0.0
  %4319 = vmatpush1.msra.mxu0 0.0
  %4320 = vmatprep.subr.mxu0 0.0
  %4321 = vmatpush1.msra.mxu0 0.0
  %4322 = vmatprep.subr.mxu0 0.0
  %4323 = vmatpush1.msra.mxu0 0.0
  %4324 = vmatprep.subr.mxu0 0.0
  %4325 = vmatpush1.msra.mxu0 0.0
  %4326 = vmatprep.subr.mxu0 0.0
  %4327 = vmatpush1.msra.mxu0 0.0
  %4328 = vmatprep.subr.mxu0 0.0
  %4329 = vmatpush1.msra.mxu0 0.0
  %4330 = vmatprep.subr.mxu0 0.0
  %4331 = vmatpush1.msra.mxu0 0.0
  %4332 = vmatprep.subr.mxu0 0.0
  %4333 = vmatpush1.msra.mxu0 0.0
  %4334 = vmatprep.subr.mxu0 0.0
  %4335 = vmatpush1.msra.mxu0 0.0
  %4336 = vmatprep.subr.mxu0 0.0
  %4337 = vmatpush1.msra.mxu0 0.0
  %4338 = vmatprep.subr.mxu0 0.0
  %4339 = vmatpush1.msra.mxu0 0.0
  %4340 = vmatprep.subr.mxu0 0.0
  %4341 = vmatpush1.msra.mxu0 0.0
  %4342 = vmatprep.subr.mxu0 0.0
  %4343 = vmatpush1.msra.mxu0 0.0
  %4344 = vmatprep.subr.mxu0 0.0
  %4345 = vmatpush1.msra.mxu0 0.0
  %4346 = vmatprep.subr.mxu0 0.0
  %4347 = vmatpush1.msra.mxu0 0.0
  %4348 = vmatprep.subr.mxu0 0.0
  %4349 = vmatpush1.msra.mxu0 0.0
  %4350 = vmatprep.subr.mxu0 0.0
  %4351 = vmatpush1.msra.mxu0 0.0
  %4352 = vmatprep.mubr.f32.mxu0 0.0
  %4353 = vmatmul.mubr.f32.gmra.mrb[0].mxu0 %v4281
  %v4354 = vpop.f32.mrb[0].mxu0
  %v4355 = vadd.f32 0.0, %v4354
  %v4356 = vpop.f32.mrb[0].mxu0
  %4357 = vmatprep.mubr.f32.mxu0 0.0
  %4358 = vmatmul.mubr.f32.gmra.mrb[0].mxu0 %v4284
  %v4359 = vpop.f32.mrb[0].mxu0
  %v4360 = vadd.f32 0.0, %v4359
  %v4361 = vpop.f32.mrb[0].mxu0
  %4362 = vdwg.mxu0
  %4363 = vrot.lane.b32.xlu0 %v2925, 112
  %v4364 = vpop.permute.xlu0 %4363
  %4365 = vrot.lane.b32.xlu0 %v2926, 112
  %v4366 = vpop.permute.xlu0 %4365
  %4367 = vrot.lane.b32.xlu0 %v3025, 112
  %v4368 = vpop.permute.xlu0 %4367
  %4369 = vrot.lane.b32.xlu0 %v3030, 112
  %v4370 = vpop.permute.xlu0 %4369
  %v4371 = vsel %vm503, %v4364, 0
  %v4373 = vsel %vm503, %v4366, 0
  %v4375 = vsel %vm503, %v4368, 0
  %v4377 = vsel %vm503, %v4370, 0
  %4379 = vmatprep.subr.mxu0 0.0
  %4380 = vmatpush1.xpose.msra.mxu0 %v4375
  %4381 = vmatprep.subr.mxu0 0.0
  %4382 = vmatpush1.xpose.msra.mxu0 %v4377
  %4383 = vmatprep.subr.mxu0 0.0
  %4384 = vmatpush1.xpose.msra.mxu0 0.0
  %4385 = vmatprep.subr.mxu0 0.0
  %4386 = vmatpush1.xpose.msra.mxu0 0.0
  %4387 = vmatprep.subr.mxu0 0.0
  %4388 = vmatpush1.xpose.msra.mxu0 0.0
  %4389 = vmatprep.subr.mxu0 0.0
  %4390 = vmatpush1.xpose.msra.mxu0 0.0
  %4391 = vmatprep.subr.mxu0 0.0
  %4392 = vmatpush1.xpose.msra.mxu0 0.0
  %4393 = vmatprep.subr.mxu0 0.0
  %4394 = vmatpush1.xpose.msra.mxu0 0.0
  %4395 = vmatprep.subr.mxu0 0.0
  %4396 = vmatpush1.xpose.msra.mxu0 0.0
  %4397 = vmatprep.subr.mxu0 0.0
  %4398 = vmatpush1.xpose.msra.mxu0 0.0
  %4399 = vmatprep.subr.mxu0 0.0
  %4400 = vmatpush1.xpose.msra.mxu0 0.0
  %4401 = vmatprep.subr.mxu0 0.0
  %4402 = vmatpush1.xpose.msra.mxu0 0.0
  %4403 = vmatprep.subr.mxu0 0.0
  %4404 = vmatpush1.xpose.msra.mxu0 0.0
  %4405 = vmatprep.subr.mxu0 0.0
  %4406 = vmatpush1.xpose.msra.mxu0 0.0
  %4407 = vmatprep.subr.mxu0 0.0
  %4408 = vmatpush1.xpose.msra.mxu0 0.0
  %4409 = vmatprep.subr.mxu0 0.0
  %4410 = vmatpush1.xpose.msra.mxu0 0.0
  %4411 = vmatprep.subr.mxu0 0.0
  %4412 = vmatpush1.xpose.msra.mxu0 0.0
  %4413 = vmatprep.subr.mxu0 0.0
  %4414 = vmatpush1.xpose.msra.mxu0 0.0
  %4415 = vmatprep.subr.mxu0 0.0
  %4416 = vmatpush1.xpose.msra.mxu0 0.0
  %4417 = vmatprep.subr.mxu0 0.0
  %4418 = vmatpush1.xpose.msra.mxu0 0.0
  %4419 = vmatprep.subr.mxu0 0.0
  %4420 = vmatpush1.xpose.msra.mxu0 0.0
  %4421 = vmatprep.subr.mxu0 0.0
  %4422 = vmatpush1.xpose.msra.mxu0 0.0
  %4423 = vmatprep.subr.mxu0 0.0
  %4424 = vmatpush1.xpose.msra.mxu0 0.0
  %4425 = vmatprep.subr.mxu0 0.0
  %4426 = vmatpush1.xpose.msra.mxu0 0.0
  %4427 = vmatprep.subr.mxu0 0.0
  %4428 = vmatpush1.xpose.msra.mxu0 0.0
  %4429 = vmatprep.subr.mxu0 0.0
  %4430 = vmatpush1.xpose.msra.mxu0 0.0
  %4431 = vmatprep.subr.mxu0 0.0
  %4432 = vmatpush1.xpose.msra.mxu0 0.0
  %4433 = vmatprep.subr.mxu0 0.0
  %4434 = vmatpush1.xpose.msra.mxu0 0.0
  %4435 = vmatprep.subr.mxu0 0.0
  %4436 = vmatpush1.xpose.msra.mxu0 0.0
  %4437 = vmatprep.subr.mxu0 0.0
  %4438 = vmatpush1.xpose.msra.mxu0 0.0
  %4439 = vmatprep.subr.mxu0 0.0
  %4440 = vmatpush1.xpose.msra.mxu0 0.0
  %4441 = vmatprep.subr.mxu0 0.0
  %4442 = vmatpush1.xpose.msra.mxu0 0.0
  %4443 = vmatprep.mubr.f32.mxu0 0.0
  %4444 = vmatmul.mubr.f32.gmra.mrb[0].mxu0 %v4371
  %v4445 = vpop.f32.mrb[0].mxu0
  %v4446 = vadd.f32 0.0, %v4445
  %v4447 = vpop.f32.mrb[0].mxu0
  %4448 = vmatprep.mubr.f32.mxu0 0.0
  %4449 = vmatmul.mubr.f32.gmra.mrb[0].mxu0 %v4373
  %v4450 = vpop.f32.mrb[0].mxu0
  %v4451 = vadd.f32 0.0, %v4450
  %v4452 = vpop.f32.mrb[0].mxu0
  %4453 = vdwg.mxu0
  %v4454 = vsel %vm591, %v4446, -inf
  %4455 = vmax.xlane.f32.xlu0 %v4454
  %v4456 = vpop.xlane.xlu0 %4455
  %v4457 = vsel %vm595, %v4451, -inf
  %4458 = vmax.xlane.f32.xlu0 %v4457
  %v4459 = vpop.xlane.xlu0 %4458
  %v4460 = vsub.f32 %v4446, %v4456
  %v4461 = vsub.f32 %v4451, %v4459
  %v4462 = vmul.f32 %v4460, 1.442695
  %v4463 = vpow.pop %v4462
  %v4464 = vmul.f32 %v4461, 1.442695
  %v4465 = vpow.pop %v4464
  %v4466 = vsel %vm591, %v4463, 0.0
  %4467 = vadd.xlane.f32.xlu0 %v4466
  %v4468 = vpop.xlane.xlu0 %4467
  %v4469 = vsel %vm595, %v4465, 0.0
  %4470 = vadd.xlane.f32.xlu0 %v4469
  %v4471 = vpop.xlane.xlu0 %4470
  %v4472 = vrcp.pop %v4468
  %v4473 = vmul.f32 %v4463, %v4472
  %v4474 = vrcp.pop %v4471
  %v4475 = vmul.f32 %v4465, %v4474
  %4476 = vrot.lane.b32.xlu0 %v3131, 112
  %v4477 = vpop.permute.xlu0 %4476
  %4478 = vrot.lane.b32.xlu0 %v3136, 112
  %v4479 = vpop.permute.xlu0 %4478
  %v4482 = vsel %vm591, %v4473, 0
  %v4485 = vsel %vm591, %v4475, 0
  %v4487 = vsel %vm621, %v4479, 0
  %4489 = vmatprep.subr.mxu0 0.0
  %4490 = vmatpush1.msra.mxu0 %v4477
  %4491 = vmatprep.subr.mxu0 0.0
  %4492 = vmatpush1.msra.mxu0 %v4487
  %4493 = vmatprep.subr.mxu0 0.0
  %4494 = vmatpush1.msra.mxu0 0.0
  %4495 = vmatprep.subr.mxu0 0.0
  %4496 = vmatpush1.msra.mxu0 0.0
  %4497 = vmatprep.subr.mxu0 0.0
  %4498 = vmatpush1.msra.mxu0 0.0
  %4499 = vmatprep.subr.mxu0 0.0
  %4500 = vmatpush1.msra.mxu0 0.0
  %4501 = vmatprep.subr.mxu0 0.0
  %4502 = vmatpush1.msra.mxu0 0.0
  %4503 = vmatprep.subr.mxu0 0.0
  %4504 = vmatpush1.msra.mxu0 0.0
  %4505 = vmatprep.subr.mxu0 0.0
  %4506 = vmatpush1.msra.mxu0 0.0
  %4507 = vmatprep.subr.mxu0 0.0
  %4508 = vmatpush1.msra.mxu0 0.0
  %4509 = vmatprep.subr.mxu0 0.0
  %4510 = vmatpush1.msra.mxu0 0.0
  %4511 = vmatprep.subr.mxu0 0.0
  %4512 = vmatpush1.msra.mxu0 0.0
  %4513 = vmatprep.subr.mxu0 0.0
  %4514 = vmatpush1.msra.mxu0 0.0
  %4515 = vmatprep.subr.mxu0 0.0
  %4516 = vmatpush1.msra.mxu0 0.0
  %4517 = vmatprep.subr.mxu0 0.0
  %4518 = vmatpush1.msra.mxu0 0.0
  %4519 = vmatprep.subr.mxu0 0.0
  %4520 = vmatpush1.msra.mxu0 0.0
  %4521 = vmatprep.subr.mxu0 0.0
  %4522 = vmatpush1.msra.mxu0 0.0
  %4523 = vmatprep.subr.mxu0 0.0
  %4524 = vmatpush1.msra.mxu0 0.0
  %4525 = vmatprep.subr.mxu0 0.0
  %4526 = vmatpush1.msra.mxu0 0.0
  %4527 = vmatprep.subr.mxu0 0.0
  %4528 = vmatpush1.msra.mxu0 0.0
  %4529 = vmatprep.subr.mxu0 0.0
  %4530 = vmatpush1.msra.mxu0 0.0
  %4531 = vmatprep.subr.mxu0 0.0
  %4532 = vmatpush1.msra.mxu0 0.0
  %4533 = vmatprep.subr.mxu0 0.0
  %4534 = vmatpush1.msra.mxu0 0.0
  %4535 = vmatprep.subr.mxu0 0.0
  %4536 = vmatpush1.msra.mxu0 0.0
  %4537 = vmatprep.subr.mxu0 0.0
  %4538 = vmatpush1.msra.mxu0 0.0
  %4539 = vmatprep.subr.mxu0 0.0
  %4540 = vmatpush1.msra.mxu0 0.0
  %4541 = vmatprep.subr.mxu0 0.0
  %4542 = vmatpush1.msra.mxu0 0.0
  %4543 = vmatprep.subr.mxu0 0.0
  %4544 = vmatpush1.msra.mxu0 0.0
  %4545 = vmatprep.subr.mxu0 0.0
  %4546 = vmatpush1.msra.mxu0 0.0
  %4547 = vmatprep.subr.mxu0 0.0
  %4548 = vmatpush1.msra.mxu0 0.0
  %4549 = vmatprep.subr.mxu0 0.0
  %4550 = vmatpush1.msra.mxu0 0.0
  %4551 = vmatprep.subr.mxu0 0.0
  %4552 = vmatpush1.msra.mxu0 0.0
  %4553 = vmatprep.mubr.f32.mxu0 0.0
  %4554 = vmatmul.mubr.f32.gmra.mrb[0].mxu0 %v4482
  %v4555 = vpop.f32.mrb[0].mxu0
  %v4556 = vadd.f32 0.0, %v4555
  %v4557 = vpop.f32.mrb[0].mxu0
  %4558 = vmatprep.mubr.f32.mxu0 0.0
  %4559 = vmatmul.mubr.f32.gmra.mrb[0].mxu0 %v4485
  %v4560 = vpop.f32.mrb[0].mxu0
  %v4561 = vadd.f32 0.0, %v4560
  %v4562 = vpop.f32.mrb[0].mxu0
  %4563 = vdwg.mxu0
  %4564 = vrot.lane.b32.xlu0 %v2925, 104
  %v4565 = vpop.permute.xlu0 %4564
  %4566 = vrot.lane.b32.xlu0 %v2926, 104
  %v4567 = vpop.permute.xlu0 %4566
  %4568 = vrot.lane.b32.xlu0 %v3025, 104
  %v4569 = vpop.permute.xlu0 %4568
  %4570 = vrot.lane.b32.xlu0 %v3030, 104
  %v4571 = vpop.permute.xlu0 %4570
  %v4572 = vsel %vm503, %v4565, 0
  %v4574 = vsel %vm503, %v4567, 0
  %v4576 = vsel %vm503, %v4569, 0
  %v4578 = vsel %vm503, %v4571, 0
  %4580 = vmatprep.subr.mxu0 0.0
  %4581 = vmatpush1.xpose.msra.mxu0 %v4576
  %4582 = vmatprep.subr.mxu0 0.0
  %4583 = vmatpush1.xpose.msra.mxu0 %v4578
  %4584 = vmatprep.subr.mxu0 0.0
  %4585 = vmatpush1.xpose.msra.mxu0 0.0
  %4586 = vmatprep.subr.mxu0 0.0
  %4587 = vmatpush1.xpose.msra.mxu0 0.0
  %4588 = vmatprep.subr.mxu0 0.0
  %4589 = vmatpush1.xpose.msra.mxu0 0.0
  %4590 = vmatprep.subr.mxu0 0.0
  %4591 = vmatpush1.xpose.msra.mxu0 0.0
  %4592 = vmatprep.subr.mxu0 0.0
  %4593 = vmatpush1.xpose.msra.mxu0 0.0
  %4594 = vmatprep.subr.mxu0 0.0
  %4595 = vmatpush1.xpose.msra.mxu0 0.0
  %4596 = vmatprep.subr.mxu0 0.0
  %4597 = vmatpush1.xpose.msra.mxu0 0.0
  %4598 = vmatprep.subr.mxu0 0.0
  %4599 = vmatpush1.xpose.msra.mxu0 0.0
  %4600 = vmatprep.subr.mxu0 0.0
  %4601 = vmatpush1.xpose.msra.mxu0 0.0
  %4602 = vmatprep.subr.mxu0 0.0
  %4603 = vmatpush1.xpose.msra.mxu0 0.0
  %4604 = vmatprep.subr.mxu0 0.0
  %4605 = vmatpush1.xpose.msra.mxu0 0.0
  %4606 = vmatprep.subr.mxu0 0.0
  %4607 = vmatpush1.xpose.msra.mxu0 0.0
  %4608 = vmatprep.subr.mxu0 0.0
  %4609 = vmatpush1.xpose.msra.mxu0 0.0
  %4610 = vmatprep.subr.mxu0 0.0
  %4611 = vmatpush1.xpose.msra.mxu0 0.0
  %4612 = vmatprep.subr.mxu0 0.0
  %4613 = vmatpush1.xpose.msra.mxu0 0.0
  %4614 = vmatprep.subr.mxu0 0.0
  %4615 = vmatpush1.xpose.msra.mxu0 0.0
  %4616 = vmatprep.subr.mxu0 0.0
  %4617 = vmatpush1.xpose.msra.mxu0 0.0
  %4618 = vmatprep.subr.mxu0 0.0
  %4619 = vmatpush1.xpose.msra.mxu0 0.0
  %4620 = vmatprep.subr.mxu0 0.0
  %4621 = vmatpush1.xpose.msra.mxu0 0.0
  %4622 = vmatprep.subr.mxu0 0.0
  %4623 = vmatpush1.xpose.msra.mxu0 0.0
  %4624 = vmatprep.subr.mxu0 0.0
  %4625 = vmatpush1.xpose.msra.mxu0 0.0
  %4626 = vmatprep.subr.mxu0 0.0
  %4627 = vmatpush1.xpose.msra.mxu0 0.0
  %4628 = vmatprep.subr.mxu0 0.0
  %4629 = vmatpush1.xpose.msra.mxu0 0.0
  %4630 = vmatprep.subr.mxu0 0.0
  %4631 = vmatpush1.xpose.msra.mxu0 0.0
  %4632 = vmatprep.subr.mxu0 0.0
  %4633 = vmatpush1.xpose.msra.mxu0 0.0
  %4634 = vmatprep.subr.mxu0 0.0
  %4635 = vmatpush1.xpose.msra.mxu0 0.0
  %4636 = vmatprep.subr.mxu0 0.0
  %4637 = vmatpush1.xpose.msra.mxu0 0.0
  %4638 = vmatprep.subr.mxu0 0.0
  %4639 = vmatpush1.xpose.msra.mxu0 0.0
  %4640 = vmatprep.subr.mxu0 0.0
  %4641 = vmatpush1.xpose.msra.mxu0 0.0
  %4642 = vmatprep.subr.mxu0 0.0
  %4643 = vmatpush1.xpose.msra.mxu0 0.0
  %4644 = vmatprep.mubr.f32.mxu0 0.0
  %4645 = vmatmul.mubr.f32.gmra.mrb[0].mxu0 %v4572
  %v4646 = vpop.f32.mrb[0].mxu0
  %v4647 = vadd.f32 0.0, %v4646
  %v4648 = vpop.f32.mrb[0].mxu0
  %4649 = vmatprep.mubr.f32.mxu0 0.0
  %4650 = vmatmul.mubr.f32.gmra.mrb[0].mxu0 %v4574
  %v4651 = vpop.f32.mrb[0].mxu0
  %v4652 = vadd.f32 0.0, %v4651
  %v4653 = vpop.f32.mrb[0].mxu0
  %4654 = vdwg.mxu0
  %v4655 = vsel %vm591, %v4647, -inf
  %4656 = vmax.xlane.f32.xlu0 %v4655
  %v4657 = vpop.xlane.xlu0 %4656
  %v4658 = vsel %vm595, %v4652, -inf
  %4659 = vmax.xlane.f32.xlu0 %v4658
  %v4660 = vpop.xlane.xlu0 %4659
  %v4661 = vsub.f32 %v4647, %v4657
  %v4662 = vsub.f32 %v4652, %v4660
  %v4663 = vmul.f32 %v4661, 1.442695
  %v4664 = vpow.pop %v4663
  %v4665 = vmul.f32 %v4662, 1.442695
  %v4666 = vpow.pop %v4665
  %v4667 = vsel %vm591, %v4664, 0.0
  %4668 = vadd.xlane.f32.xlu0 %v4667
  %v4669 = vpop.xlane.xlu0 %4668
  %v4670 = vsel %vm595, %v4666, 0.0
  %4671 = vadd.xlane.f32.xlu0 %v4670
  %v4672 = vpop.xlane.xlu0 %4671
  %v4673 = vrcp.pop %v4669
  %v4674 = vmul.f32 %v4664, %v4673
  %v4675 = vrcp.pop %v4672
  %v4676 = vmul.f32 %v4666, %v4675
  %4677 = vrot.lane.b32.xlu0 %v3131, 104
  %v4678 = vpop.permute.xlu0 %4677
  %4679 = vrot.lane.b32.xlu0 %v3136, 104
  %v4680 = vpop.permute.xlu0 %4679
  %v4683 = vsel %vm591, %v4674, 0
  %v4686 = vsel %vm591, %v4676, 0
  %v4688 = vsel %vm621, %v4680, 0
  %4690 = vmatprep.subr.mxu0 0.0
  %4691 = vmatpush1.msra.mxu0 %v4678
  %4692 = vmatprep.subr.mxu0 0.0
  %4693 = vmatpush1.msra.mxu0 %v4688
  %4694 = vmatprep.subr.mxu0 0.0
  %4695 = vmatpush1.msra.mxu0 0.0
  %4696 = vmatprep.subr.mxu0 0.0
  %4697 = vmatpush1.msra.mxu0 0.0
  %4698 = vmatprep.subr.mxu0 0.0
  %4699 = vmatpush1.msra.mxu0 0.0
  %4700 = vmatprep.subr.mxu0 0.0
  %4701 = vmatpush1.msra.mxu0 0.0
  %4702 = vmatprep.subr.mxu0 0.0
  %4703 = vmatpush1.msra.mxu0 0.0
  %4704 = vmatprep.subr.mxu0 0.0
  %4705 = vmatpush1.msra.mxu0 0.0
  %4706 = vmatprep.subr.mxu0 0.0
  %4707 = vmatpush1.msra.mxu0 0.0
  %4708 = vmatprep.subr.mxu0 0.0
  %4709 = vmatpush1.msra.mxu0 0.0
  %4710 = vmatprep.subr.mxu0 0.0
  %4711 = vmatpush1.msra.mxu0 0.0
  %4712 = vmatprep.subr.mxu0 0.0
  %4713 = vmatpush1.msra.mxu0 0.0
  %4714 = vmatprep.subr.mxu0 0.0
  %4715 = vmatpush1.msra.mxu0 0.0
  %4716 = vmatprep.subr.mxu0 0.0
  %4717 = vmatpush1.msra.mxu0 0.0
  %4718 = vmatprep.subr.mxu0 0.0
  %4719 = vmatpush1.msra.mxu0 0.0
  %4720 = vmatprep.subr.mxu0 0.0
  %4721 = vmatpush1.msra.mxu0 0.0
  %4722 = vmatprep.subr.mxu0 0.0
  %4723 = vmatpush1.msra.mxu0 0.0
  %4724 = vmatprep.subr.mxu0 0.0
  %4725 = vmatpush1.msra.mxu0 0.0
  %4726 = vmatprep.subr.mxu0 0.0
  %4727 = vmatpush1.msra.mxu0 0.0
  %4728 = vmatprep.subr.mxu0 0.0
  %4729 = vmatpush1.msra.mxu0 0.0
  %4730 = vmatprep.subr.mxu0 0.0
  %4731 = vmatpush1.msra.mxu0 0.0
  %4732 = vmatprep.subr.mxu0 0.0
  %4733 = vmatpush1.msra.mxu0 0.0
  %4734 = vmatprep.subr.mxu0 0.0
  %4735 = vmatpush1.msra.mxu0 0.0
  %4736 = vmatprep.subr.mxu0 0.0
  %4737 = vmatpush1.msra.mxu0 0.0
  %4738 = vmatprep.subr.mxu0 0.0
  %4739 = vmatpush1.msra.mxu0 0.0
  %4740 = vmatprep.subr.mxu0 0.0
  %4741 = vmatpush1.msra.mxu0 0.0
  %4742 = vmatprep.subr.mxu0 0.0
  %4743 = vmatpush1.msra.mxu0 0.0
  %4744 = vmatprep.subr.mxu0 0.0
  %4745 = vmatpush1.msra.mxu0 0.0
  %4746 = vmatprep.subr.mxu0 0.0
  %4747 = vmatpush1.msra.mxu0 0.0
  %4748 = vmatprep.subr.mxu0 0.0
  %4749 = vmatpush1.msra.mxu0 0.0
  %4750 = vmatprep.subr.mxu0 0.0
  %4751 = vmatpush1.msra.mxu0 0.0
  %4752 = vmatprep.subr.mxu0 0.0
  %4753 = vmatpush1.msra.mxu0 0.0
  %4754 = vmatprep.mubr.f32.mxu0 0.0
  %4755 = vmatmul.mubr.f32.gmra.mrb[0].mxu0 %v4683
  %v4756 = vpop.f32.mrb[0].mxu0
  %v4757 = vadd.f32 0.0, %v4756
  %v4758 = vpop.f32.mrb[0].mxu0
  %4759 = vmatprep.mubr.f32.mxu0 0.0
  %4760 = vmatmul.mubr.f32.gmra.mrb[0].mxu0 %v4686
  %v4761 = vpop.f32.mrb[0].mxu0
  %v4762 = vadd.f32 0.0, %v4761
  %v4763 = vpop.f32.mrb[0].mxu0
  %4764 = vdwg.mxu0
  %4767 = vrot.lane.b32.xlu0 %v4355, 8
  %v4768 = vpop.permute.xlu0 %4767
  %4769 = vrot.lane.b32.xlu0 %v4360, 8
  %v4770 = vpop.permute.xlu0 %4769
  %4775 = vrot.lane.b32.xlu0 %v4556, 16
  %v4776 = vpop.permute.xlu0 %4775
  %4777 = vrot.lane.b32.xlu0 %v4561, 16
  %v4778 = vpop.permute.xlu0 %4777
  %4783 = vrot.lane.b32.xlu0 %v4757, 24
  %v4784 = vpop.permute.xlu0 %4783
  %4785 = vrot.lane.b32.xlu0 %v4762, 24
  %v4786 = vpop.permute.xlu0 %4785
  %v4789 = vsel %vm503, %v4153, %v4768
  %v4790 = vsel %vm503, %v4158, %v4770
  %v4791 = vsel %vm72, %v4789, %v4776
  %v4792 = vsel %vm72, %v4790, %v4778
  %v4793 = vsel %vm1332, %v4791, %v4784
  %v4794 = vsel %vm1332, %v4792, %v4786
  %4795 = vst.msk [vmem:[#allocation3 + $0x10] sm:$0xff] %vm42, %v4793
  %4796 = vst.msk [vmem:[#allocation3 + $0x18] sm:$0xf] %vm1336, %v4794
  %v4797 = vld [vmem:[#allocation3] sm:$0xff]
  %v4798 = vld [vmem:[#allocation3 + $0x8] sm:$0xff]
  %v4799 = vld [vmem:[#allocation3 + $0x10] sm:$0xff]
  %v4800 = vld [vmem:[#allocation3 + $0x18] sm:$0xff]
  %s4801 = scalar_lea.vmem %s6, 32
  %v4802 = vld [vmem:[%s4801] sm:$0xff]
  %v4803 = vld [vmem:[%s4801 + $0x8] sm:$0xff]
  %v4804 = vld [vmem:[%s4801 + $0x10] sm:$0xff]
  %v4805 = vld [vmem:[%s4801 + $0x18] sm:$0xff]
  %v4806 = vlaneseq
  %v4807 = vshrl.u32 %v4806, 7
  %v4808 = vsub.s32 0, %v4807
  %v4809 = vrot.slane %v2696, %v4808
  %v4811 = vsel %vm42, %v4797, 0
  %v4814 = vsel %vm42, %v4798, 0
  %v4817 = vsel %vm42, %v4799, 0
  %v4820 = vsel %vm42, %v4800, 0
  %v4823 = vsel %vm42, %v4802, 0
  %v4826 = vsel %vm42, %v4803, 0
  %v4829 = vsel %vm42, %v4804, 0
  %v4832 = vsel %vm42, %v4805, 0
  %4834 = vmatprep.subr.mxu0 0.0
  %4835 = vmatpush1.xpose.msra.mxu0 %v4823
  %4836 = vmatprep.subr.mxu0 0.0
  %4837 = vmatpush1.xpose.msra.mxu0 %v4826
  %4838 = vmatprep.subr.mxu0 0.0
  %4839 = vmatpush1.xpose.msra.mxu0 %v4829
  %4840 = vmatprep.subr.mxu0 0.0
  %4841 = vmatpush1.xpose.msra.mxu0 %v4832
  %4842 = vmatprep.subr.mxu0 0.0
  %4843 = vmatpush1.xpose.msra.mxu0 0.0
  %4844 = vmatprep.subr.mxu0 0.0
  %4845 = vmatpush1.xpose.msra.mxu0 0.0
  %4846 = vmatprep.subr.mxu0 0.0
  %4847 = vmatpush1.xpose.msra.mxu0 0.0
  %4848 = vmatprep.subr.mxu0 0.0
  %4849 = vmatpush1.xpose.msra.mxu0 0.0
  %4850 = vmatprep.subr.mxu0 0.0
  %4851 = vmatpush1.xpose.msra.mxu0 0.0
  %4852 = vmatprep.subr.mxu0 0.0
  %4853 = vmatpush1.xpose.msra.mxu0 0.0
  %4854 = vmatprep.subr.mxu0 0.0
  %4855 = vmatpush1.xpose.msra.mxu0 0.0
  %4856 = vmatprep.subr.mxu0 0.0
  %4857 = vmatpush1.xpose.msra.mxu0 0.0
  %4858 = vmatprep.subr.mxu0 0.0
  %4859 = vmatpush1.xpose.msra.mxu0 0.0
  %4860 = vmatprep.subr.mxu0 0.0
  %4861 = vmatpush1.xpose.msra.mxu0 0.0
  %4862 = vmatprep.subr.mxu0 0.0
  %4863 = vmatpush1.xpose.msra.mxu0 0.0
  %4864 = vmatprep.subr.mxu0 0.0
  %4865 = vmatpush1.xpose.msra.mxu0 0.0
  %4866 = vmatprep.subr.mxu0 0.0
  %4867 = vmatpush1.xpose.msra.mxu0 0.0
  %4868 = vmatprep.subr.mxu0 0.0
  %4869 = vmatpush1.xpose.msra.mxu0 0.0
  %4870 = vmatprep.subr.mxu0 0.0
  %4871 = vmatpush1.xpose.msra.mxu0 0.0
  %4872 = vmatprep.subr.mxu0 0.0
  %4873 = vmatpush1.xpose.msra.mxu0 0.0
  %4874 = vmatprep.subr.mxu0 0.0
  %4875 = vmatpush1.xpose.msra.mxu0 0.0
  %4876 = vmatprep.subr.mxu0 0.0
  %4877 = vmatpush1.xpose.msra.mxu0 0.0
  %4878 = vmatprep.subr.mxu0 0.0
  %4879 = vmatpush1.xpose.msra.mxu0 0.0
  %4880 = vmatprep.subr.mxu0 0.0
  %4881 = vmatpush1.xpose.msra.mxu0 0.0
  %4882 = vmatprep.subr.mxu0 0.0
  %4883 = vmatpush1.xpose.msra.mxu0 0.0
  %4884 = vmatprep.subr.mxu0 0.0
  %4885 = vmatpush1.xpose.msra.mxu0 0.0
  %4886 = vmatprep.subr.mxu0 0.0
  %4887 = vmatpush1.xpose.msra.mxu0 0.0
  %4888 = vmatprep.subr.mxu0 0.0
  %4889 = vmatpush1.xpose.msra.mxu0 0.0
  %4890 = vmatprep.subr.mxu0 0.0
  %4891 = vmatpush1.xpose.msra.mxu0 0.0
  %4892 = vmatprep.subr.mxu0 0.0
  %4893 = vmatpush1.xpose.msra.mxu0 0.0
  %4894 = vmatprep.subr.mxu0 0.0
  %4895 = vmatpush1.xpose.msra.mxu0 0.0
  %4896 = vmatprep.subr.mxu0 0.0
  %4897 = vmatpush1.xpose.msra.mxu0 0.0
  %4898 = vmatprep.mubr.f32.mxu0 0.0
  %4899 = vmatmul.mubr.f32.gmra.mrb[0].mxu0 %v4811
  %v4900 = vpop.f32.mrb[0].mxu0
  %v4901 = vadd.f32 %v4809, %v4900
  %v4902 = vpop.f32.mrb[0].mxu0
  %4903 = vmatprep.mubr.f32.mxu0 0.0
  %4904 = vmatmul.mubr.f32.gmra.mrb[0].mxu0 %v4814
  %v4905 = vpop.f32.mrb[0].mxu0
  %v4906 = vadd.f32 %v4809, %v4905
  %v4907 = vpop.f32.mrb[0].mxu0
  %4908 = vmatprep.mubr.f32.mxu0 0.0
  %4909 = vmatmul.mubr.f32.gmra.mrb[0].mxu0 %v4817
  %v4910 = vpop.f32.mrb[0].mxu0
  %v4911 = vadd.f32 %v4809, %v4910
  %v4912 = vpop.f32.mrb[0].mxu0
  %4913 = vmatprep.mubr.f32.mxu0 0.0
  %4914 = vmatmul.mubr.f32.gmra.mrb[0].mxu0 %v4820
  %v4915 = vpop.f32.mrb[0].mxu0
  %v4916 = vadd.f32 %v4809, %v4915
  %v4917 = vpop.f32.mrb[0].mxu0
  %4918 = vdwg.mxu0
  %v4919 = vadd.f32 %v2801, %v4901
  %v4920 = vadd.f32 %v2802, %v4906
  %v4921 = vadd.f32 %v2803, %v4911
  %v4922 = vadd.f32 %v2804, %v4916
  %v4923 = vsel %vm42, %v4919, 0.0
  %4924 = vadd.xlane.f32.xlu0 %v4923
  %v4925 = vpop.xlane.xlu0 %4924
  %v4926 = vsel %vm42, %v4920, 0.0
  %4927 = vadd.xlane.f32.xlu0 %v4926
  %v4928 = vpop.xlane.xlu0 %4927
  %v4929 = vsel %vm42, %v4921, 0.0
  %4930 = vadd.xlane.f32.xlu0 %v4929
  %v4931 = vpop.xlane.xlu0 %4930
  %v4932 = vsel %vm42, %v4922, 0.0
  %4933 = vadd.xlane.f32.xlu0 %v4932
  %v4934 = vpop.xlane.xlu0 %4933
  %v4935 = vmul.f32 %v4925, %v2304
  %v4936 = vmul.f32 %v4928, %v2304
  %v4937 = vmul.f32 %v4931, %v2304
  %v4938 = vmul.f32 %v4934, %v2304
  %v4939 = vsub.f32 %v4919, %v4935
  %v4940 = vsub.f32 %v4920, %v4936
  %v4941 = vsub.f32 %v4921, %v4937
  %v4942 = vsub.f32 %v4922, %v4938
  %v4943 = vmul.f32 %v4939, %v4939
  %v4944 = vmul.f32 %v4940, %v4940
  %v4945 = vmul.f32 %v4941, %v4941
  %v4946 = vmul.f32 %v4942, %v4942
  %v4947 = vsel %vm42, %v4943, 0.0
  %4948 = vadd.xlane.f32.xlu0 %v4947
  %v4949 = vpop.xlane.xlu0 %4948
  %v4950 = vsel %vm42, %v4944, 0.0
  %4951 = vadd.xlane.f32.xlu0 %v4950
  %v4952 = vpop.xlane.xlu0 %4951
  %v4953 = vsel %vm42, %v4945, 0.0
  %4954 = vadd.xlane.f32.xlu0 %v4953
  %v4955 = vpop.xlane.xlu0 %4954
  %v4956 = vsel %vm42, %v4946, 0.0
  %4957 = vadd.xlane.f32.xlu0 %v4956
  %v4958 = vpop.xlane.xlu0 %4957
  %v4959 = vmul.f32 %v4949, %v2304
  %v4960 = vmul.f32 %v4952, %v2304
  %v4961 = vmul.f32 %v4955, %v2304
  %v4962 = vmul.f32 %v4958, %v2304
  %v4963 = vadd.f32 %v4959, 1e-05
  %v4964 = vadd.f32 %v4960, 1e-05
  %v4965 = vadd.f32 %v4961, 1e-05
  %v4966 = vadd.f32 %v4962, 1e-05
  %v4967 = vrsqrt.pop %v4963
  %v4968 = vrsqrt.pop %v4964
  %v4969 = vrsqrt.pop %v4965
  %v4970 = vrsqrt.pop %v4966
  %v4971 = vmul.f32 %v4939, %v4967
  %v4972 = vmul.f32 %v4940, %v4968
  %v4973 = vmul.f32 %v4941, %v4969
  %v4974 = vmul.f32 %v4942, %v4970
  %v4975 = vlaneseq
  %v4976 = vshrl.u32 %v4975, 7
  %v4977 = vsub.s32 0, %v4976
  %v4978 = vrot.slane %v2697, %v4977
  %v4979 = vmul.f32 %v4971, %v4978
  %v4980 = vmul.f32 %v4972, %v4978
  %v4981 = vmul.f32 %v4973, %v4978
  %v4982 = vmul.f32 %v4974, %v4978
  %v4983 = vlaneseq
  %v4984 = vshrl.u32 %v4983, 7
  %v4985 = vsub.s32 0, %v4984
  %v4986 = vrot.slane %v2698, %v4985
  %v4987 = vadd.f32 %v4979, %v4986
  %v4988 = vadd.f32 %v4980, %v4986
  %v4989 = vadd.f32 %v4981, %v4986
  %v4990 = vadd.f32 %v4982, %v4986
  %s4991 = scalar_lea.vmem %s7, 64
  %v4992 = vld [vmem:[%s4991] sm:$0xff]
  %v4993 = vld [vmem:[%s4991 + $0x8] sm:$0xff]
  %v4994 = vld [vmem:[%s4991 + $0x10] sm:$0xff]
  %v4995 = vld [vmem:[%s4991 + $0x18] sm:$0xff]
  %v4996 = vld [vmem:[%s4991 + $0x20] sm:$0xff]
  %v4997 = vld [vmem:[%s4991 + $0x28] sm:$0xff]
  %v4998 = vld [vmem:[%s4991 + $0x30] sm:$0xff]
  %v4999 = vld [vmem:[%s4991 + $0x38] sm:$0xff]
  %v5000 = vlaneseq
  %v5001 = vshrl.u32 %v5000, 7
  %v5002 = vsub.s32 0, %v5001
  %v5003 = vrot.slane %v2702, %v5002
  %v5005 = vsel %vm42, %v4987, 0
  %v5008 = vsel %vm42, %v4988, 0
  %v5011 = vsel %vm42, %v4989, 0
  %v5014 = vsel %vm42, %v4990, 0
  %v5017 = vsel %vm42, %v4992, 0
  %v5020 = vsel %vm42, %v4993, 0
  %v5023 = vsel %vm42, %v4994, 0
  %v5026 = vsel %vm42, %v4995, 0
  %v5029 = vsel %vm42, %v4996, 0
  %v5032 = vsel %vm42, %v4997, 0
  %v5035 = vsel %vm42, %v4998, 0
  %v5038 = vsel %vm42, %v4999, 0
  %5040 = vmatprep.subr.mxu0 0.0
  %5041 = vmatpush1.xpose.msra.mxu0 %v5017
  %5042 = vmatprep.subr.mxu0 0.0
  %5043 = vmatpush1.xpose.msra.mxu0 %v5020
  %5044 = vmatprep.subr.mxu0 0.0
  %5045 = vmatpush1.xpose.msra.mxu0 %v5023
  %5046 = vmatprep.subr.mxu0 0.0
  %5047 = vmatpush1.xpose.msra.mxu0 %v5026
  %5048 = vmatprep.subr.mxu0 0.0
  %5049 = vmatpush1.xpose.msra.mxu0 %v5029
  %5050 = vmatprep.subr.mxu0 0.0
  %5051 = vmatpush1.xpose.msra.mxu0 %v5032
  %5052 = vmatprep.subr.mxu0 0.0
  %5053 = vmatpush1.xpose.msra.mxu0 %v5035
  %5054 = vmatprep.subr.mxu0 0.0
  %5055 = vmatpush1.xpose.msra.mxu0 %v5038
  %5056 = vmatprep.subr.mxu0 0.0
  %5057 = vmatpush1.xpose.msra.mxu0 0.0
  %5058 = vmatprep.subr.mxu0 0.0
  %5059 = vmatpush1.xpose.msra.mxu0 0.0
  %5060 = vmatprep.subr.mxu0 0.0
  %5061 = vmatpush1.xpose.msra.mxu0 0.0
  %5062 = vmatprep.subr.mxu0 0.0
  %5063 = vmatpush1.xpose.msra.mxu0 0.0
  %5064 = vmatprep.subr.mxu0 0.0
  %5065 = vmatpush1.xpose.msra.mxu0 0.0
  %5066 = vmatprep.subr.mxu0 0.0
  %5067 = vmatpush1.xpose.msra.mxu0 0.0
  %5068 = vmatprep.subr.mxu0 0.0
  %5069 = vmatpush1.xpose.msra.mxu0 0.0
  %5070 = vmatprep.subr.mxu0 0.0
  %5071 = vmatpush1.xpose.msra.mxu0 0.0
  %5072 = vmatprep.subr.mxu0 0.0
  %5073 = vmatpush1.xpose.msra.mxu0 0.0
  %5074 = vmatprep.subr.mxu0 0.0
  %5075 = vmatpush1.xpose.msra.mxu0 0.0
  %5076 = vmatprep.subr.mxu0 0.0
  %5077 = vmatpush1.xpose.msra.mxu0 0.0
  %5078 = vmatprep.subr.mxu0 0.0
  %5079 = vmatpush1.xpose.msra.mxu0 0.0
  %5080 = vmatprep.subr.mxu0 0.0
  %5081 = vmatpush1.xpose.msra.mxu0 0.0
  %5082 = vmatprep.subr.mxu0 0.0
  %5083 = vmatpush1.xpose.msra.mxu0 0.0
  %5084 = vmatprep.subr.mxu0 0.0
  %5085 = vmatpush1.xpose.msra.mxu0 0.0
  %5086 = vmatprep.subr.mxu0 0.0
  %5087 = vmatpush1.xpose.msra.mxu0 0.0
  %5088 = vmatprep.subr.mxu0 0.0
  %5089 = vmatpush1.xpose.msra.mxu0 0.0
  %5090 = vmatprep.subr.mxu0 0.0
  %5091 = vmatpush1.xpose.msra.mxu0 0.0
  %5092 = vmatprep.subr.mxu0 0.0
  %5093 = vmatpush1.xpose.msra.mxu0 0.0
  %5094 = vmatprep.subr.mxu0 0.0
  %5095 = vmatpush1.xpose.msra.mxu0 0.0
  %5096 = vmatprep.subr.mxu0 0.0
  %5097 = vmatpush1.xpose.msra.mxu0 0.0
  %5098 = vmatprep.subr.mxu0 0.0
  %5099 = vmatpush1.xpose.msra.mxu0 0.0
  %5100 = vmatprep.subr.mxu0 0.0
  %5101 = vmatpush1.xpose.msra.mxu0 0.0
  %5102 = vmatprep.subr.mxu0 0.0
  %5103 = vmatpush1.xpose.msra.mxu0 0.0
  %5104 = vmatprep.mubr.f32.mxu0 0.0
  %5105 = vmatmul.mubr.f32.gmra.mrb[0].mxu0 %v5005
  %v5106 = vpop.f32.mrb[0].mxu0
  %v5107 = vadd.f32 %v5003, %v5106
  %v5108 = vpop.f32.mrb[0].mxu0
  %5109 = vmatprep.mubr.f32.mxu0 0.0
  %5110 = vmatmul.mubr.f32.gmra.mrb[0].mxu0 %v5008
  %v5111 = vpop.f32.mrb[0].mxu0
  %v5112 = vadd.f32 %v5003, %v5111
  %v5113 = vpop.f32.mrb[0].mxu0
  %5114 = vmatprep.mubr.f32.mxu0 0.0
  %5115 = vmatmul.mubr.f32.gmra.mrb[0].mxu0 %v5011
  %v5116 = vpop.f32.mrb[0].mxu0
  %v5117 = vadd.f32 %v5003, %v5116
  %v5118 = vpop.f32.mrb[0].mxu0
  %5119 = vmatprep.mubr.f32.mxu0 0.0
  %5120 = vmatmul.mubr.f32.gmra.mrb[0].mxu0 %v5014
  %v5121 = vpop.f32.mrb[0].mxu0
  %v5122 = vadd.f32 %v5003, %v5121
  %v5123 = vpop.f32.mrb[0].mxu0
  %5124 = vdwg.mxu0
  %v5125 = vmax.f32 %v5107, 0.0
  %v5126 = vmax.f32 %v5112, 0.0
  %v5127 = vmax.f32 %v5117, 0.0
  %v5128 = vmax.f32 %v5122, 0.0
  %s5129 = scalar_lea.vmem %s8, 32
  %v5130 = vld [vmem:[%s5129] sm:$0xff]
  %v5131 = vld [vmem:[%s5129 + $0x8] sm:$0xff]
  %v5132 = vld [vmem:[%s5129 + $0x10] sm:$0xff]
  %v5133 = vld [vmem:[%s5129 + $0x18] sm:$0xff]
  %v5134 = vlaneseq
  %v5135 = vshrl.u32 %v5134, 7
  %v5136 = vsub.s32 0, %v5135
  %v5137 = vrot.slane %v2699, %v5136
  %v5139 = vsel %vm2506, %v5125, 0
  %v5142 = vsel %vm2506, %v5126, 0
  %v5145 = vsel %vm2506, %v5127, 0
  %v5148 = vsel %vm2506, %v5128, 0
  %v5151 = vsel %vm2506, %v5130, 0
  %v5154 = vsel %vm2506, %v5131, 0
  %v5157 = vsel %vm2506, %v5132, 0
  %v5160 = vsel %vm2506, %v5133, 0
  %5162 = vmatprep.subr.mxu0 0.0
  %5163 = vmatpush1.xpose.msra.mxu0 %v5151
  %5164 = vmatprep.subr.mxu0 0.0
  %5165 = vmatpush1.xpose.msra.mxu0 %v5154
  %5166 = vmatprep.subr.mxu0 0.0
  %5167 = vmatpush1.xpose.msra.mxu0 %v5157
  %5168 = vmatprep.subr.mxu0 0.0
  %5169 = vmatpush1.xpose.msra.mxu0 %v5160
  %5170 = vmatprep.subr.mxu0 0.0
  %5171 = vmatpush1.xpose.msra.mxu0 0.0
  %5172 = vmatprep.subr.mxu0 0.0
  %5173 = vmatpush1.xpose.msra.mxu0 0.0
  %5174 = vmatprep.subr.mxu0 0.0
  %5175 = vmatpush1.xpose.msra.mxu0 0.0
  %5176 = vmatprep.subr.mxu0 0.0
  %5177 = vmatpush1.xpose.msra.mxu0 0.0
  %5178 = vmatprep.subr.mxu0 0.0
  %5179 = vmatpush1.xpose.msra.mxu0 0.0
  %5180 = vmatprep.subr.mxu0 0.0
  %5181 = vmatpush1.xpose.msra.mxu0 0.0
  %5182 = vmatprep.subr.mxu0 0.0
  %5183 = vmatpush1.xpose.msra.mxu0 0.0
  %5184 = vmatprep.subr.mxu0 0.0
  %5185 = vmatpush1.xpose.msra.mxu0 0.0
  %5186 = vmatprep.subr.mxu0 0.0
  %5187 = vmatpush1.xpose.msra.mxu0 0.0
  %5188 = vmatprep.subr.mxu0 0.0
  %5189 = vmatpush1.xpose.msra.mxu0 0.0
  %5190 = vmatprep.subr.mxu0 0.0
  %5191 = vmatpush1.xpose.msra.mxu0 0.0
  %5192 = vmatprep.subr.mxu0 0.0
  %5193 = vmatpush1.xpose.msra.mxu0 0.0
  %5194 = vmatprep.subr.mxu0 0.0
  %5195 = vmatpush1.xpose.msra.mxu0 0.0
  %5196 = vmatprep.subr.mxu0 0.0
  %5197 = vmatpush1.xpose.msra.mxu0 0.0
  %5198 = vmatprep.subr.mxu0 0.0
  %5199 = vmatpush1.xpose.msra.mxu0 0.0
  %5200 = vmatprep.subr.mxu0 0.0
  %5201 = vmatpush1.xpose.msra.mxu0 0.0
  %5202 = vmatprep.subr.mxu0 0.0
  %5203 = vmatpush1.xpose.msra.mxu0 0.0
  %5204 = vmatprep.subr.mxu0 0.0
  %5205 = vmatpush1.xpose.msra.mxu0 0.0
  %5206 = vmatprep.subr.mxu0 0.0
  %5207 = vmatpush1.xpose.msra.mxu0 0.0
  %5208 = vmatprep.subr.mxu0 0.0
  %5209 = vmatpush1.xpose.msra.mxu0 0.0
  %5210 = vmatprep.subr.mxu0 0.0
  %5211 = vmatpush1.xpose.msra.mxu0 0.0
  %5212 = vmatprep.subr.mxu0 0.0
  %5213 = vmatpush1.xpose.msra.mxu0 0.0
  %5214 = vmatprep.subr.mxu0 0.0
  %5215 = vmatpush1.xpose.msra.mxu0 0.0
  %5216 = vmatprep.subr.mxu0 0.0
  %5217 = vmatpush1.xpose.msra.mxu0 0.0
  %5218 = vmatprep.subr.mxu0 0.0
  %5219 = vmatpush1.xpose.msra.mxu0 0.0
  %5220 = vmatprep.subr.mxu0 0.0
  %5221 = vmatpush1.xpose.msra.mxu0 0.0
  %5222 = vmatprep.subr.mxu0 0.0
  %5223 = vmatpush1.xpose.msra.mxu0 0.0
  %5224 = vmatprep.subr.mxu0 0.0
  %5225 = vmatpush1.xpose.msra.mxu0 0.0
  %5226 = vmatprep.mubr.f32.mxu0 0.0
  %5227 = vmatmul.mubr.f32.gmra.mrb[0].mxu0 %v5139
  %v5228 = vpop.f32.mrb[0].mxu0
  %v5229 = vadd.f32 %v5137, %v5228
  %v5230 = vpop.f32.mrb[0].mxu0
  %5231 = vmatprep.mubr.f32.mxu0 0.0
  %5232 = vmatmul.mubr.f32.gmra.mrb[0].mxu0 %v5142
  %v5233 = vpop.f32.mrb[0].mxu0
  %v5234 = vpop.f32.mrb[0].mxu0
  %5235 = vmatprep.mubr.f32.mxu0 0.0
  %5236 = vmatmul.mubr.f32.gmra.mrb[0].mxu0 %v5145
  %v5237 = vpop.f32.mrb[0].mxu0
  %v5238 = vadd.f32 %v5137, %v5237
  %v5239 = vpop.f32.mrb[0].mxu0
  %5240 = vmatprep.mubr.f32.mxu0 0.0
  %5241 = vmatmul.mubr.f32.gmra.mrb[0].mxu0 %v5148
  %v5242 = vpop.f32.mrb[0].mxu0
  %v5243 = vpop.f32.mrb[0].mxu0
  %5244 = vdwg.mxu0
  %v5245 = vadd.f32 %v4987, %v5229
  %v5246 = vadd.f32 %v4989, %v5238
  %v5247 = vsel %vm42, %v5245, 0.0
  %5248 = vadd.xlane.f32.xlu0 %v5247
  %v5249 = vpop.xlane.xlu0 %5248
  %v5250 = vsel %vm42, %v5246, 0.0
  %5251 = vadd.xlane.f32.xlu0 %v5250
  %v5252 = vpop.xlane.xlu0 %5251
  %v5253 = vmul.f32 %v5249, %v2304
  %v5254 = vmul.f32 %v5252, %v2304
  %v5255 = vsub.f32 %v5245, %v5253
  %v5256 = vsub.f32 %v5246, %v5254
  %v5257 = vmul.f32 %v5255, %v5255
  %v5258 = vmul.f32 %v5256, %v5256
  %v5259 = vsel %vm42, %v5257, 0.0
  %5260 = vadd.xlane.f32.xlu0 %v5259
  %v5261 = vpop.xlane.xlu0 %5260
  %v5262 = vsel %vm42, %v5258, 0.0
  %5263 = vadd.xlane.f32.xlu0 %v5262
  %v5264 = vpop.xlane.xlu0 %5263
  %v5265 = vmul.f32 %v5261, %v2304
  %v5266 = vmul.f32 %v5264, %v2304
  %v5267 = vadd.f32 %v5265, 1e-05
  %v5268 = vadd.f32 %v5266, 1e-05
  %v5269 = vrsqrt.pop %v5267
  %v5270 = vrsqrt.pop %v5268
  %v5271 = vmul.f32 %v5255, %v5269
  %v5272 = vmul.f32 %v5256, %v5270
  %v5273 = vlaneseq
  %v5274 = vshrl.u32 %v5273, 7
  %v5275 = vsub.s32 0, %v5274
  %v5276 = vrot.slane %v2700, %v5275
  %v5277 = vmul.f32 %v5271, %v5276
  %v5278 = vmul.f32 %v5272, %v5276
  %v5279 = vlaneseq
  %v5280 = vshrl.u32 %v5279, 7
  %v5281 = vsub.s32 0, %v5280
  %v5282 = vrot.slane %v2701, %v5281
  %v5283 = vadd.f32 %v5277, %v5282
  %v5284 = vadd.f32 %v5278, %v5282
  %5285 = vst.msk [vmem:[%s11] sm:$0xff] %vm42, %v5283
  %5286 = vst.msk [vmem:[%s11 + $0x8] sm:$0xff] %vm42, %v5284
  // Predicated region
  $region46: #{custom_transformer_encoder_v2.1} parent=0 // pred_check
    _
  $region47: #{custom_transformer_encoder_v2.1} parent=0 // pred_check_branch
    %5288 = sbr.rel (0) target = $region49
  $region48: #{custom_transformer_encoder_v2.1} parent=0 // pred_region
    _
  $region49: #{custom_transformer_encoder_v2.1} parent=0 // pred_fallthru
    _
  // Predicated region
  $region50: #{custom_transformer_encoder_v2.1} parent=0 // pred_check
    _
  $region51: #{custom_transformer_encoder_v2.1} parent=0 // pred_check_branch
    %5290 = sbr.rel (0) target = $region53
  $region52: #{custom_transformer_encoder_v2.1} parent=0 // pred_region
    _
  $region53: #{custom_transformer_encoder_v2.1} parent=0 // pred_fallthru
    _

</llo_original>
